<compile_context>
chip_gen: v7x
topology: tpu7x:2x2x1
jax: 0.10.0
libtpu: 0.0.40
codegen_flags: <defaults>
</compile_context>

<pallas_src>
import functools
import math

import jax
import jax.numpy as jnp
from jax.experimental import pallas as pl
from jax.experimental.pallas import tpu as pltpu

NUM_ITEM = 100
TOP_K = 10


def _round_up(x, m):
    return ((x + m - 1) // m) * m


def _recip(x):
    # EUP vrcp + one Newton refinement: avoids the exact-divide chain while
    # keeping ~f32 accuracy (well inside the 1e-5 reference tolerance).
    r = pl.reciprocal(x, approx=True)
    return r * (2.0 - x * r)


def _num_tensorcores():
    """Rough per-chip TensorCore count visible to one Pallas program."""
    try:
        kind = jax.devices()[0].device_kind.lower()
    except Exception:
        return 1
    if ("v4" in kind) or ("v5p" in kind) or ("v7" in kind):
        return 2
    return 1


def _choose_grid(ntot, tile_n, num_cores):
    """Pick (tile, n_steps).  Mis-detection only affects perf, never results."""
    tile_n = max(8, _round_up(tile_n, 8))
    if num_cores <= 1:
        # Single TensorCore: one full-size tile when the whole batch fits;
        # never force extra grid steps (each costs ~0.35us of pure overhead).
        tile = min(tile_n, _round_up(ntot, 8))
        n_steps = pl.cdiv(ntot, tile)
    else:
        tile = min(tile_n, max(8, _round_up(pl.cdiv(ntot, num_cores), 8)))
        n_steps = pl.cdiv(ntot, tile)
        # Balance the cores: step count a multiple of the core count.
        n_steps = _round_up(n_steps, num_cores)
    return tile, n_steps


def memory_kernel(mem_ref, mem_t_ref, ones_ref, bias_ref, q_ref, o_ref, *, k):
    """Per-tile sparse top-k memory read.

    mem_ref:   (item_pad, dim)  zero-padded mempool (readout operand)
    mem_t_ref: (dim, item_pad)  pre-transposed mempool (attention operand)
    ones_ref:  (item_pad, 1)    ones column -> row sums on the MXU
    bias_ref:  (1, item_pad)    0 for real items, -1e30 for padded columns
    q_ref:     (tile, dim)      query rows
    o_ref:     (tile, dim)      output rows
    """
    mem = mem_ref[...]
    mem_t = mem_t_ref[...]
    ones = ones_ref[...]
    q = q_ref[...]

    # Attention logits on the MXU; pre-transposed RHS -> plain (M,K)@(K,N).
    att = jnp.dot(q, mem_t, preferred_element_type=jnp.float32)  # (tile, item_pad) f32
    # Mask padded memory columns with a resident additive bias row (one VPU
    # add; replaces the per-step iota + compare + select).
    att = att + bias_ref[...]

    # One shared lane-max: softmax stabilizer AND first top-k threshold.
    m0 = jnp.max(att, axis=-1, keepdims=True)                    # (tile, 1)

    # k-th largest threshold: peel the current max k-1 times (serial chain).
    # TODO(synk): exactly-equal logits are peeled together, so >k items can be
    # selected on degenerate inputs (differs from torch.topk tie-breaking).
    def _peel(_, carry):
        work, thr = carry
        work = jnp.where(work >= thr, -jnp.inf, work)
        return work, jnp.max(work, axis=-1, keepdims=True)

    _, thr = jax.lax.fori_loop(0, k - 1, _peel, (att, m0), unroll=True)
    topk_mask = att >= thr                                       # (tile, item_pad)

    # ---- full softmax over memory items (padded cols -> exp(-1e30) == 0).
    e0 = jnp.exp(att - m0)
    # Row sum on the (idle) MXU instead of the saturated XLU.
    denom0 = jnp.dot(e0, ones, preferred_element_type=jnp.float32)  # (tile, 1)
    r0 = _recip(denom0)                                             # == max softmax value

    # ---- softmax over the top-k softmax *values* s = e0 * r0.  The largest
    # selected value is exactly r0 (e0 == 1 at the argmax), so the stabilized
    # exponent is s - r0 = (e0 - 1) * r0.  The final normalization is deferred
    # past the readout matmul (linear in the weights), so it runs on the
    # (tile, dim) result instead of the full (tile, item_pad) slab.
    e = jnp.where(topk_mask, jnp.exp((e0 - 1.0) * r0), 0.0)
    out_num = jnp.dot(e, mem, preferred_element_type=jnp.float32)   # (tile, dim)
    denom = jnp.dot(e, ones, preferred_element_type=jnp.float32)    # (tile, 1)
    o_ref[...] = (out_num * _recip(denom)).astype(o_ref.dtype)


def memory_forward(input1, input2, mempool, *, k=TOP_K, tile_n=256):
    B, C, H, W = input1.shape
    num_item, dim = mempool.shape
    assert dim == C
    assert k < num_item, "k must be < num_item for threshold-based top-k"

    # NCHW -> (N, C) queries for both streams, fused into one (2N, C) batch.
    q1 = jnp.transpose(input1, (0, 2, 3, 1)).reshape(-1, C)
    q2 = jnp.transpose(input2, (0, 2, 3, 1)).reshape(-1, C)
    q = jnp.concatenate([q1, q2], axis=0)
    N = q1.shape[0]
    Ntot = 2 * N

    # Core-count-aware row tiling.
    tile, n_steps = _choose_grid(Ntot, tile_n, _num_tensorcores())
    Np = n_steps * tile
    if Np > Ntot:
        q = jnp.pad(q, ((0, Np - Ntot), (0, 0)))   # padded rows are discarded below

    # Lane-dense mempool: pad items to a multiple of 128 with zero rows, and
    # keep a pre-transposed copy resident for the attention matmul.
    item_pad = _round_up(num_item, 128)
    mem_p = (mempool if item_pad == num_item
             else jnp.pad(mempool, ((0, item_pad - num_item), (0, 0))))
    mem_t = jnp.transpose(mem_p)                                   # (dim, item_pad)
    ones_col = jnp.ones((item_pad, 1), jnp.float32)
    bias_row = jnp.where(jnp.arange(item_pad)[None, :] < num_item,
                         0.0, -1e30).astype(jnp.float32)          # (1, item_pad)

    out = pl.pallas_call(
        functools.partial(memory_kernel, k=k),
        out_shape=jax.ShapeDtypeStruct((Np, C), input1.dtype),
        grid_spec=pltpu.PrefetchScalarGridSpec(
            num_scalar_prefetch=0,
            grid=(n_steps,),
            in_specs=[
                pl.BlockSpec((item_pad, dim), lambda i: (0, 0)),   # resident mempool
                pl.BlockSpec((dim, item_pad), lambda i: (0, 0)),   # resident mempool^T
                pl.BlockSpec((item_pad, 1), lambda i: (0, 0)),     # resident ones column
                pl.BlockSpec((1, item_pad), lambda i: (0, 0)),     # resident pad bias row
                pl.BlockSpec((tile, C), lambda i: (i, 0)),         # query rows
            ],
            out_specs=pl.BlockSpec((tile, C), lambda i: (i, 0)),
        ),
        compiler_params=pltpu.CompilerParams(dimension_semantics=("parallel",)),
    )(mem_p, mem_t, ones_col, bias_row, q)

    out1 = out[:N].reshape(B, H, W, C).transpose(0, 3, 1, 2)
    out2 = out[N:Ntot].reshape(B, H, W, C).transpose(0, 3, 1, 2)
    return out1, out2


def memory_forward_ref(input1, input2, mempool, *, k=TOP_K):
    """Pure-JAX reference mirroring the PyTorch module (for validation)."""
    B, C, H, W = input1.shape

    def one(x):
        q = jnp.transpose(x, (0, 2, 3, 1)).reshape(-1, C)
        att = jax.nn.softmax(q @ mempool.T, axis=1)
        val, idx = jax.lax.top_k(att, k)
        val = jax.nn.softmax(val, axis=1)
        sparse = jnp.zeros_like(att)
        sparse = sparse.at[jnp.arange(att.shape[0])[:, None], idx].set(val)
        out = sparse @ mempool
        return out.reshape(B, H, W, C).transpose(0, 3, 1, 2)

    return one(input1), one(input2)


if __name__ == "__main__":
    key = jax.random.PRNGKey(0)
    k_mem, k_x1, k_x2 = jax.random.split(key, 3)

    B, C, H, W = 2, 32, 8, 8          # dim = C = 32
    dim, num_item = C, NUM_ITEM

    # Deterministic parameter init matching nn.Parameter.uniform_(-stdv, stdv)
    stdv = 1.0 / math.sqrt(dim)
    mempool = jax.random.uniform(k_mem, (num_item, dim), jnp.float32,
                                 minval=-stdv, maxval=stdv)

    x1 = jax.random.normal(k_x1, (B, C, H, W), jnp.float32)
    x2 = jax.random.normal(k_x2, (B, C, H, W), jnp.float32)

    o1, o2 = memory_forward(x1, x2, mempool, k=TOP_K)
    jax.block_until_ready((o1, o2))

    r1, r2 = memory_forward_ref(x1, x2, mempool, k=TOP_K)
    assert o1.shape == (B, C, H, W) and o2.shape == (B, C, H, W)
    assert jnp.allclose(o1, r1, atol=1e-5, rtol=1e-5)
    assert jnp.allclose(o2, r2, atol=1e-5, rtol=1e-5)

    print("KERNEL_OK")
</pallas_src>

<mosaic_0001>
module attributes {stable_mosaic.version = 11 : i64} {
  func.func @memory_kernel(%arg0: i32, %arg1: memref<128x32xf32, #tpu.memory_space<vmem>>, %arg2: memref<32x128xf32, #tpu.memory_space<vmem>>, %arg3: memref<128x1xf32, #tpu.memory_space<vmem>>, %arg4: memref<1x128xf32, #tpu.memory_space<vmem>>, %arg5: memref<256x32xf32, #tpu.memory_space<vmem>>, %arg6: memref<256x32xf32, #tpu.memory_space<vmem>>) attributes {dimension_semantics = [#tpu.dimension_semantics<parallel>], iteration_bounds = array<i64: 1>, scalar_prefetch = 0 : i64, scratch_operands = 0 : i64, tpu.core_type = #tpu.core_type<tc>, window_params = [{pipeline_mode = #tpu.pipeline_mode<synchronous>, transform_indices = @transform_0, window_bounds = array<i64: 128, 32>}, {pipeline_mode = #tpu.pipeline_mode<synchronous>, transform_indices = @transform_1, window_bounds = array<i64: 32, 128>}, {pipeline_mode = #tpu.pipeline_mode<synchronous>, transform_indices = @transform_2, window_bounds = array<i64: 128, 1>}, {pipeline_mode = #tpu.pipeline_mode<synchronous>, transform_indices = @transform_3, window_bounds = array<i64: 1, 128>}, {transform_indices = @transform_4, window_bounds = array<i64: 256, 32>}, {transform_indices = @transform_5, window_bounds = array<i64: 256, 32>}]} {
    %c0 = arith.constant 0 : index
    %c0_0 = arith.constant 0 : index
    %0 = vector.load %arg1[%c0, %c0_0] : memref<128x32xf32, #tpu.memory_space<vmem>>, vector<128x32xf32>
    %c0_1 = arith.constant 0 : index
    %c0_2 = arith.constant 0 : index
    %1 = vector.load %arg2[%c0_1, %c0_2] : memref<32x128xf32, #tpu.memory_space<vmem>>, vector<32x128xf32>
    %c0_3 = arith.constant 0 : index
    %c0_4 = arith.constant 0 : index
    %2 = vector.load %arg3[%c0_3, %c0_4] : memref<128x1xf32, #tpu.memory_space<vmem>>, vector<128x1xf32>
    %c0_5 = arith.constant 0 : index
    %c0_6 = arith.constant 0 : index
    %3 = vector.load %arg5[%c0_5, %c0_6] : memref<256x32xf32, #tpu.memory_space<vmem>>, vector<256x32xf32>
    %cst = arith.constant dense<0.000000e+00> : vector<256x128xf32>
    %4 = tpu.matmul %3, %1, %cst {dimension_numbers = #tpu.dot_dimension_numbers<[1], [0], [0], [1], [0, 0, 1, 1], [], []>} : vector<256x32xf32>, vector<32x128xf32>, vector<256x128xf32> -> vector<256x128xf32>
    %c0_7 = arith.constant 0 : index
    %c0_8 = arith.constant 0 : index
    %5 = vector.load %arg4[%c0_7, %c0_8] : memref<1x128xf32, #tpu.memory_space<vmem>>, vector<1x128xf32>
    %6 = vector.broadcast %5 : vector<1x128xf32> to vector<256x128xf32>
    %7 = arith.addf %4, %6 : vector<256x128xf32>
    %cst_9 = arith.constant dense<0xFF800000> : vector<256xf32>
    %8 = vector.multi_reduction <maximumf>, %7, %cst_9 [1] : vector<256x128xf32> to vector<256xf32>
    %9 = vector.shape_cast %8 : vector<256xf32> to vector<256x1xf32>
    %c0_i32 = arith.constant 0 : i32
    %10 = vector.broadcast %9 : vector<256x1xf32> to vector<256x128xf32>
    %11 = arith.cmpf oge, %7, %10 : vector<256x128xf32>
    %cst_10 = arith.constant 0xFF800000 : f32
    %12 = vector.broadcast %cst_10 : f32 to vector<256x128xf32>
    %13 = arith.select %11, %12, %7 : vector<256x128xi1>, vector<256x128xf32>
    %cst_11 = arith.constant dense<0xFF800000> : vector<256xf32>
    %14 = vector.multi_reduction <maximumf>, %13, %cst_11 [1] : vector<256x128xf32> to vector<256xf32>
    %15 = vector.shape_cast %14 : vector<256xf32> to vector<256x1xf32>
    %c1_i32 = arith.constant 1 : i32
    %16 = vector.broadcast %15 : vector<256x1xf32> to vector<256x128xf32>
    %17 = arith.cmpf oge, %13, %16 : vector<256x128xf32>
    %cst_12 = arith.constant 0xFF800000 : f32
    %18 = vector.broadcast %cst_12 : f32 to vector<256x128xf32>
    %19 = arith.select %17, %18, %13 : vector<256x128xi1>, vector<256x128xf32>
    %cst_13 = arith.constant dense<0xFF800000> : vector<256xf32>
    %20 = vector.multi_reduction <maximumf>, %19, %cst_13 [1] : vector<256x128xf32> to vector<256xf32>
    %21 = vector.shape_cast %20 : vector<256xf32> to vector<256x1xf32>
    %c2_i32 = arith.constant 2 : i32
    %22 = vector.broadcast %21 : vector<256x1xf32> to vector<256x128xf32>
    %23 = arith.cmpf oge, %19, %22 : vector<256x128xf32>
    %cst_14 = arith.constant 0xFF800000 : f32
    %24 = vector.broadcast %cst_14 : f32 to vector<256x128xf32>
    %25 = arith.select %23, %24, %19 : vector<256x128xi1>, vector<256x128xf32>
    %cst_15 = arith.constant dense<0xFF800000> : vector<256xf32>
    %26 = vector.multi_reduction <maximumf>, %25, %cst_15 [1] : vector<256x128xf32> to vector<256xf32>
    %27 = vector.shape_cast %26 : vector<256xf32> to vector<256x1xf32>
    %c3_i32 = arith.constant 3 : i32
    %28 = vector.broadcast %27 : vector<256x1xf32> to vector<256x128xf32>
    %29 = arith.cmpf oge, %25, %28 : vector<256x128xf32>
    %cst_16 = arith.constant 0xFF800000 : f32
    %30 = vector.broadcast %cst_16 : f32 to vector<256x128xf32>
    %31 = arith.select %29, %30, %25 : vector<256x128xi1>, vector<256x128xf32>
    %cst_17 = arith.constant dense<0xFF800000> : vector<256xf32>
    %32 = vector.multi_reduction <maximumf>, %31, %cst_17 [1] : vector<256x128xf32> to vector<256xf32>
    %33 = vector.shape_cast %32 : vector<256xf32> to vector<256x1xf32>
    %c4_i32 = arith.constant 4 : i32
    %34 = vector.broadcast %33 : vector<256x1xf32> to vector<256x128xf32>
    %35 = arith.cmpf oge, %31, %34 : vector<256x128xf32>
    %cst_18 = arith.constant 0xFF800000 : f32
    %36 = vector.broadcast %cst_18 : f32 to vector<256x128xf32>
    %37 = arith.select %35, %36, %31 : vector<256x128xi1>, vector<256x128xf32>
    %cst_19 = arith.constant dense<0xFF800000> : vector<256xf32>
    %38 = vector.multi_reduction <maximumf>, %37, %cst_19 [1] : vector<256x128xf32> to vector<256xf32>
    %39 = vector.shape_cast %38 : vector<256xf32> to vector<256x1xf32>
    %c5_i32 = arith.constant 5 : i32
    %40 = vector.broadcast %39 : vector<256x1xf32> to vector<256x128xf32>
    %41 = arith.cmpf oge, %37, %40 : vector<256x128xf32>
    %cst_20 = arith.constant 0xFF800000 : f32
    %42 = vector.broadcast %cst_20 : f32 to vector<256x128xf32>
    %43 = arith.select %41, %42, %37 : vector<256x128xi1>, vector<256x128xf32>
    %cst_21 = arith.constant dense<0xFF800000> : vector<256xf32>
    %44 = vector.multi_reduction <maximumf>, %43, %cst_21 [1] : vector<256x128xf32> to vector<256xf32>
    %45 = vector.shape_cast %44 : vector<256xf32> to vector<256x1xf32>
    %c6_i32 = arith.constant 6 : i32
    %46 = vector.broadcast %45 : vector<256x1xf32> to vector<256x128xf32>
    %47 = arith.cmpf oge, %43, %46 : vector<256x128xf32>
    %cst_22 = arith.constant 0xFF800000 : f32
    %48 = vector.broadcast %cst_22 : f32 to vector<256x128xf32>
    %49 = arith.select %47, %48, %43 : vector<256x128xi1>, vector<256x128xf32>
    %cst_23 = arith.constant dense<0xFF800000> : vector<256xf32>
    %50 = vector.multi_reduction <maximumf>, %49, %cst_23 [1] : vector<256x128xf32> to vector<256xf32>
    %51 = vector.shape_cast %50 : vector<256xf32> to vector<256x1xf32>
    %c7_i32 = arith.constant 7 : i32
    %52 = vector.broadcast %51 : vector<256x1xf32> to vector<256x128xf32>
    %53 = arith.cmpf oge, %49, %52 : vector<256x128xf32>
    %cst_24 = arith.constant 0xFF800000 : f32
    %54 = vector.broadcast %cst_24 : f32 to vector<256x128xf32>
    %55 = arith.select %53, %54, %49 : vector<256x128xi1>, vector<256x128xf32>
    %cst_25 = arith.constant dense<0xFF800000> : vector<256xf32>
    %56 = vector.multi_reduction <maximumf>, %55, %cst_25 [1] : vector<256x128xf32> to vector<256xf32>
    %57 = vector.shape_cast %56 : vector<256xf32> to vector<256x1xf32>
    %c8_i32 = arith.constant 8 : i32
    %58 = vector.broadcast %57 : vector<256x1xf32> to vector<256x128xf32>
    %59 = arith.cmpf oge, %55, %58 : vector<256x128xf32>
    %cst_26 = arith.constant 0xFF800000 : f32
    %60 = vector.broadcast %cst_26 : f32 to vector<256x128xf32>
    %61 = arith.select %59, %60, %55 : vector<256x128xi1>, vector<256x128xf32>
    %cst_27 = arith.constant dense<0xFF800000> : vector<256xf32>
    %62 = vector.multi_reduction <maximumf>, %61, %cst_27 [1] : vector<256x128xf32> to vector<256xf32>
    %63 = vector.shape_cast %62 : vector<256xf32> to vector<256x1xf32>
    %64 = vector.broadcast %63 : vector<256x1xf32> to vector<256x128xf32>
    %65 = arith.cmpf oge, %7, %64 : vector<256x128xf32>
    %66 = vector.broadcast %9 : vector<256x1xf32> to vector<256x128xf32>
    %67 = arith.subf %7, %66 : vector<256x128xf32>
    %68 = math.exp %67 : vector<256x128xf32>
    %cst_28 = arith.constant dense<0.000000e+00> : vector<256x1xf32>
    %69 = tpu.matmul %68, %2, %cst_28 {dimension_numbers = #tpu.dot_dimension_numbers<[1], [0], [0], [1], [0, 0, 1, 1], [], []>} : vector<256x128xf32>, vector<128x1xf32>, vector<256x1xf32> -> vector<256x1xf32>
    %70 = tpu.reciprocal %69 {approx = true} : vector<256x1xf32> -> vector<256x1xf32>
    %71 = arith.mulf %69, %70 : vector<256x1xf32>
    %cst_29 = arith.constant 2.000000e+00 : f32
    %72 = vector.broadcast %cst_29 : f32 to vector<256x1xf32>
    %73 = arith.subf %72, %71 : vector<256x1xf32>
    %74 = arith.mulf %70, %73 : vector<256x1xf32>
    %cst_30 = arith.constant 1.000000e+00 : f32
    %75 = vector.broadcast %cst_30 : f32 to vector<256x128xf32>
    %76 = arith.subf %68, %75 : vector<256x128xf32>
    %77 = vector.broadcast %74 : vector<256x1xf32> to vector<256x128xf32>
    %78 = arith.mulf %76, %77 : vector<256x128xf32>
    %79 = math.exp %78 : vector<256x128xf32>
    %cst_31 = arith.constant 0.000000e+00 : f32
    %80 = vector.broadcast %cst_31 : f32 to vector<256x128xf32>
    %81 = arith.select %65, %79, %80 : vector<256x128xi1>, vector<256x128xf32>
    %cst_32 = arith.constant dense<0.000000e+00> : vector<256x32xf32>
    %82 = tpu.matmul %81, %0, %cst_32 {dimension_numbers = #tpu.dot_dimension_numbers<[1], [0], [0], [1], [0, 0, 1, 1], [], []>} : vector<256x128xf32>, vector<128x32xf32>, vector<256x32xf32> -> vector<256x32xf32>
    %cst_33 = arith.constant dense<0.000000e+00> : vector<256x1xf32>
    %83 = tpu.matmul %81, %2, %cst_33 {dimension_numbers = #tpu.dot_dimension_numbers<[1], [0], [0], [1], [0, 0, 1, 1], [], []>} : vector<256x128xf32>, vector<128x1xf32>, vector<256x1xf32> -> vector<256x1xf32>
    %84 = tpu.reciprocal %83 {approx = true} : vector<256x1xf32> -> vector<256x1xf32>
    %85 = arith.mulf %83, %84 : vector<256x1xf32>
    %cst_34 = arith.constant 2.000000e+00 : f32
    %86 = vector.broadcast %cst_34 : f32 to vector<256x1xf32>
    %87 = arith.subf %86, %85 : vector<256x1xf32>
    %88 = arith.mulf %84, %87 : vector<256x1xf32>
    %89 = vector.broadcast %88 : vector<256x1xf32> to vector<256x32xf32>
    %90 = arith.mulf %82, %89 : vector<256x32xf32>
    %c0_35 = arith.constant 0 : index
    %c0_36 = arith.constant 0 : index
    %91 = vector.load %arg6[%c0_35, %c0_36] : memref<256x32xf32, #tpu.memory_space<vmem>>, vector<256x32xf32>
    tpu.vector_store %arg6[%c0_35, %c0_36], %90 {strides = array<i32>} : memref<256x32xf32, #tpu.memory_space<vmem>>, vector<256x32xf32>,
    return
  }
  func.func @transform_0(%arg0: i32) -> (i32, i32) {
    %c0_i32 = arith.constant 0 : i32
    %c0_i32_0 = arith.constant 0 : i32
    %c0_i32_1 = arith.constant 0 : i32
    return %c0_i32, %c0_i32_0 : i32, i32
  }
  func.func @transform_1(%arg0: i32) -> (i32, i32) {
    %c0_i32 = arith.constant 0 : i32
    %c0_i32_0 = arith.constant 0 : i32
    %c0_i32_1 = arith.constant 0 : i32
    return %c0_i32, %c0_i32_0 : i32, i32
  }
  func.func @transform_2(%arg0: i32) -> (i32, i32) {
    %c0_i32 = arith.constant 0 : i32
    %c0_i32_0 = arith.constant 0 : i32
    %c0_i32_1 = arith.constant 0 : i32
    return %c0_i32, %c0_i32_0 : i32, i32
  }
  func.func @transform_3(%arg0: i32) -> (i32, i32) {
    %c0_i32 = arith.constant 0 : i32
    %c0_i32_0 = arith.constant 0 : i32
    %c0_i32_1 = arith.constant 0 : i32
    return %c0_i32, %c0_i32_0 : i32, i32
  }
  func.func @transform_4(%arg0: i32) -> (i32, i32) {
    %c0_i32 = arith.constant 0 : i32
    %c0_i32_0 = arith.constant 0 : i32
    return %arg0, %c0_i32 : i32, i32
  }
  func.func @transform_5(%arg0: i32) -> (i32, i32) {
    %c0_i32 = arith.constant 0 : i32
    %c0_i32_0 = arith.constant 0 : i32
    return %arg0, %c0_i32 : i32, i32
  }
}

</mosaic_0001>

<llo_original>
// kernel: tpu_custom_call.1
$region0: #{tpu_custom_call.1}
  #allocation0 [shape = 'u32[]', space=smem, size = 0x4, offset = 0x4, fixed_abs, tag = 'smem constant byte address 0x4 - core index']
  #allocation1 [shape = 'u32[144,128]{1,0:T(1,128)}', space=vmem, size = 0x12000, scoped, tag = 'internal scratch']
  %s0 = inlined_call_operand.vmem [shape: f32[128,32], index: 0, kind: input, shape index: {}]
  %s1 = inlined_call_operand.vmem [shape: f32[32,128], index: 1, kind: input, shape index: {}]
  %s2 = inlined_call_operand.vmem [shape: f32[128,1], index: 2, kind: input, shape index: {}]
  %s3 = inlined_call_operand.vmem [shape: f32[1,128], index: 3, kind: input, shape index: {}]
  %s4 = inlined_call_operand.vmem [shape: f32[256,32], index: 4, kind: input, shape index: {}]
  %s5 = inlined_call_operand.vmem [shape: f32[256,32], index: 5, kind: output, shape index: {}]
  %s6 = sld [smem:[#allocation0]]
  $region30: #{tpu_custom_call.1} parent=0
    _
  %s8 = ssub.s32 1, %s6
  %s9 = scalar_select 0, %s8, %s6
  // Predicated region
  $region2: #{tpu_custom_call.1} parent=0 // pred_check
    _
  $region3: #{tpu_custom_call.1} parent=0 // pred_check_branch
    %11 = sbr.rel (0) target = $region5
  $region4: #{tpu_custom_call.1} parent=0 // pred_region
    _
  $region5: #{tpu_custom_call.1} parent=0 // pred_fallthru
    _
  // Predicated region
  $region6: #{tpu_custom_call.1} parent=0 // pred_check
    _
  $region7: #{tpu_custom_call.1} parent=0 // pred_check_branch
    %13 = sbr.rel (0) target = $region9
  $region8: #{tpu_custom_call.1} parent=0 // pred_region
    _
  $region9: #{tpu_custom_call.1} parent=0 // pred_fallthru
    _
  // Predicated region
  $region10: #{tpu_custom_call.1} parent=0 // pred_check
    _
  $region11: #{tpu_custom_call.1} parent=0 // pred_check_branch
    %15 = sbr.rel (0) target = $region13
  $region12: #{tpu_custom_call.1} parent=0 // pred_region
    _
  $region13: #{tpu_custom_call.1} parent=0 // pred_fallthru
    _
  // Predicated region
  $region14: #{tpu_custom_call.1} parent=0 // pred_check
    _
  $region15: #{tpu_custom_call.1} parent=0 // pred_check_branch
    %17 = sbr.rel (0) target = $region17
  $region16: #{tpu_custom_call.1} parent=0 // pred_region
    _
  $region17: #{tpu_custom_call.1} parent=0 // pred_fallthru
    _
  // Predicated region
  $region18: #{tpu_custom_call.1} parent=0 // pred_check
    _
  $region19: #{tpu_custom_call.1} parent=0 // pred_check_branch
    %19 = sbr.rel (0) target = $region21
  $region20: #{tpu_custom_call.1} parent=0 // pred_region
    _
  $region21: #{tpu_custom_call.1} parent=0 // pred_fallthru
    _
  %v20 = vld [vmem:[%s0] sm:$0xff]
  %v21 = vld [vmem:[%s0 + $0x8] sm:$0xff]
  %v22 = vld [vmem:[%s0 + $0x10] sm:$0xff]
  %v23 = vld [vmem:[%s0 + $0x18] sm:$0xff]
  %v24 = vld [vmem:[%s0 + $0x20] sm:$0xff]
  %v25 = vld [vmem:[%s0 + $0x28] sm:$0xff]
  %v26 = vld [vmem:[%s0 + $0x30] sm:$0xff]
  %v27 = vld [vmem:[%s0 + $0x38] sm:$0xff]
  %v28 = vld [vmem:[%s0 + $0x40] sm:$0xff]
  %v29 = vld [vmem:[%s0 + $0x48] sm:$0xff]
  %v30 = vld [vmem:[%s0 + $0x50] sm:$0xff]
  %v31 = vld [vmem:[%s0 + $0x58] sm:$0xff]
  %v32 = vld [vmem:[%s0 + $0x60] sm:$0xff]
  %v33 = vld [vmem:[%s0 + $0x68] sm:$0xff]
  %v34 = vld [vmem:[%s0 + $0x70] sm:$0xff]
  %v35 = vld [vmem:[%s0 + $0x78] sm:$0xff]
  %v36 = vld [vmem:[%s1] sm:$0xff]
  %v37 = vld [vmem:[%s1 + $0x8] sm:$0xff]
  %v38 = vld [vmem:[%s1 + $0x10] sm:$0xff]
  %v39 = vld [vmem:[%s1 + $0x18] sm:$0xff]
  %v40 = vld [vmem:[%s2] sm:$0xff]
  %v41 = vld [vmem:[%s2 + $0x8] sm:$0xff]
  %v42 = vld [vmem:[%s2 + $0x10] sm:$0xff]
  %v43 = vld [vmem:[%s2 + $0x18] sm:$0xff]
  %v44 = vld [vmem:[%s2 + $0x20] sm:$0xff]
  %v45 = vld [vmem:[%s2 + $0x28] sm:$0xff]
  %v46 = vld [vmem:[%s2 + $0x30] sm:$0xff]
  %v47 = vld [vmem:[%s2 + $0x38] sm:$0xff]
  %v48 = vld [vmem:[%s2 + $0x40] sm:$0xff]
  %v49 = vld [vmem:[%s2 + $0x48] sm:$0xff]
  %v50 = vld [vmem:[%s2 + $0x50] sm:$0xff]
  %v51 = vld [vmem:[%s2 + $0x58] sm:$0xff]
  %v52 = vld [vmem:[%s2 + $0x60] sm:$0xff]
  %v53 = vld [vmem:[%s2 + $0x68] sm:$0xff]
  %v54 = vld [vmem:[%s2 + $0x70] sm:$0xff]
  %v55 = vld [vmem:[%s2 + $0x78] sm:$0xff]
  %v56 = vld [vmem:[%s4] sm:$0xff]
  %v57 = vld [vmem:[%s4 + $0x8] sm:$0xff]
  %v58 = vld [vmem:[%s4 + $0x10] sm:$0xff]
  %v59 = vld [vmem:[%s4 + $0x18] sm:$0xff]
  %v60 = vld [vmem:[%s4 + $0x20] sm:$0xff]
  %v61 = vld [vmem:[%s4 + $0x28] sm:$0xff]
  %v62 = vld [vmem:[%s4 + $0x30] sm:$0xff]
  %v63 = vld [vmem:[%s4 + $0x38] sm:$0xff]
  %v64 = vld [vmem:[%s4 + $0x40] sm:$0xff]
  %v65 = vld [vmem:[%s4 + $0x48] sm:$0xff]
  %v66 = vld [vmem:[%s4 + $0x50] sm:$0xff]
  %v67 = vld [vmem:[%s4 + $0x58] sm:$0xff]
  %v68 = vld [vmem:[%s4 + $0x60] sm:$0xff]
  %v69 = vld [vmem:[%s4 + $0x68] sm:$0xff]
  %v70 = vld [vmem:[%s4 + $0x70] sm:$0xff]
  %v71 = vld [vmem:[%s4 + $0x78] sm:$0xff]
  %v72 = vld [vmem:[%s4 + $0x80] sm:$0xff]
  %v73 = vld [vmem:[%s4 + $0x88] sm:$0xff]
  %v74 = vld [vmem:[%s4 + $0x90] sm:$0xff]
  %v75 = vld [vmem:[%s4 + $0x98] sm:$0xff]
  %v76 = vld [vmem:[%s4 + $0xa0] sm:$0xff]
  %v77 = vld [vmem:[%s4 + $0xa8] sm:$0xff]
  %v78 = vld [vmem:[%s4 + $0xb0] sm:$0xff]
  %v79 = vld [vmem:[%s4 + $0xb8] sm:$0xff]
  %v80 = vld [vmem:[%s4 + $0xc0] sm:$0xff]
  %v81 = vld [vmem:[%s4 + $0xc8] sm:$0xff]
  %v82 = vld [vmem:[%s4 + $0xd0] sm:$0xff]
  %v83 = vld [vmem:[%s4 + $0xd8] sm:$0xff]
  %v84 = vld [vmem:[%s4 + $0xe0] sm:$0xff]
  %v85 = vld [vmem:[%s4 + $0xe8] sm:$0xff]
  %v86 = vld [vmem:[%s4 + $0xf0] sm:$0xff]
  %v87 = vld [vmem:[%s4 + $0xf8] sm:$0xff]
  %v88 = vld [vmem:[%s3] sm:$0x1]
  %v90 = vlaneseq
  %v91 = vshrl.u32 %v90, 7
  %v92 = vsub.s32 0, %v91
  %v93 = vrot.slane %v88, %v92
  %vm95 = vcmask 261120
  %v97 = vsel %vm95, %v56, 0
  %v100 = vsel %vm95, %v57, 0
  %v103 = vsel %vm95, %v58, 0
  %v106 = vsel %vm95, %v59, 0
  %v109 = vsel %vm95, %v60, 0
  %v112 = vsel %vm95, %v61, 0
  %v115 = vsel %vm95, %v62, 0
  %v118 = vsel %vm95, %v63, 0
  %v121 = vsel %vm95, %v64, 0
  %v124 = vsel %vm95, %v65, 0
  %v127 = vsel %vm95, %v66, 0
  %v130 = vsel %vm95, %v67, 0
  %v133 = vsel %vm95, %v68, 0
  %v136 = vsel %vm95, %v69, 0
  %v139 = vsel %vm95, %v70, 0
  %v142 = vsel %vm95, %v71, 0
  %v145 = vsel %vm95, %v72, 0
  %v148 = vsel %vm95, %v73, 0
  %v151 = vsel %vm95, %v74, 0
  %v154 = vsel %vm95, %v75, 0
  %v157 = vsel %vm95, %v76, 0
  %v160 = vsel %vm95, %v77, 0
  %v163 = vsel %vm95, %v78, 0
  %v166 = vsel %vm95, %v79, 0
  %v169 = vsel %vm95, %v80, 0
  %v172 = vsel %vm95, %v81, 0
  %v175 = vsel %vm95, %v82, 0
  %v178 = vsel %vm95, %v83, 0
  %v181 = vsel %vm95, %v84, 0
  %v184 = vsel %vm95, %v85, 0
  %v187 = vsel %vm95, %v86, 0
  %v190 = vsel %vm95, %v87, 0
  %192 = vmatprep.subr.mxu0 0.0
  %193 = vmatpush1.msra.mxu0 %v36
  %194 = vmatprep.subr.mxu0 0.0
  %195 = vmatpush1.msra.mxu0 %v37
  %196 = vmatprep.subr.mxu0 0.0
  %197 = vmatpush1.msra.mxu0 %v38
  %198 = vmatprep.subr.mxu0 0.0
  %199 = vmatpush1.msra.mxu0 %v39
  %200 = vmatprep.subr.mxu0 0.0
  %201 = vmatpush1.msra.mxu0 0.0
  %202 = vmatprep.subr.mxu0 0.0
  %203 = vmatpush1.msra.mxu0 0.0
  %204 = vmatprep.subr.mxu0 0.0
  %205 = vmatpush1.msra.mxu0 0.0
  %206 = vmatprep.subr.mxu0 0.0
  %207 = vmatpush1.msra.mxu0 0.0
  %208 = vmatprep.subr.mxu0 0.0
  %209 = vmatpush1.msra.mxu0 0.0
  %210 = vmatprep.subr.mxu0 0.0
  %211 = vmatpush1.msra.mxu0 0.0
  %212 = vmatprep.subr.mxu0 0.0
  %213 = vmatpush1.msra.mxu0 0.0
  %214 = vmatprep.subr.mxu0 0.0
  %215 = vmatpush1.msra.mxu0 0.0
  %216 = vmatprep.subr.mxu0 0.0
  %217 = vmatpush1.msra.mxu0 0.0
  %218 = vmatprep.subr.mxu0 0.0
  %219 = vmatpush1.msra.mxu0 0.0
  %220 = vmatprep.subr.mxu0 0.0
  %221 = vmatpush1.msra.mxu0 0.0
  %222 = vmatprep.subr.mxu0 0.0
  %223 = vmatpush1.msra.mxu0 0.0
  %224 = vmatprep.subr.mxu0 0.0
  %225 = vmatpush1.msra.mxu0 0.0
  %226 = vmatprep.subr.mxu0 0.0
  %227 = vmatpush1.msra.mxu0 0.0
  %228 = vmatprep.subr.mxu0 0.0
  %229 = vmatpush1.msra.mxu0 0.0
  %230 = vmatprep.subr.mxu0 0.0
  %231 = vmatpush1.msra.mxu0 0.0
  %232 = vmatprep.subr.mxu0 0.0
  %233 = vmatpush1.msra.mxu0 0.0
  %234 = vmatprep.subr.mxu0 0.0
  %235 = vmatpush1.msra.mxu0 0.0
  %236 = vmatprep.subr.mxu0 0.0
  %237 = vmatpush1.msra.mxu0 0.0
  %238 = vmatprep.subr.mxu0 0.0
  %239 = vmatpush1.msra.mxu0 0.0
  %240 = vmatprep.subr.mxu0 0.0
  %241 = vmatpush1.msra.mxu0 0.0
  %242 = vmatprep.subr.mxu0 0.0
  %243 = vmatpush1.msra.mxu0 0.0
  %244 = vmatprep.subr.mxu0 0.0
  %245 = vmatpush1.msra.mxu0 0.0
  %246 = vmatprep.subr.mxu0 0.0
  %247 = vmatpush1.msra.mxu0 0.0
  %248 = vmatprep.subr.mxu0 0.0
  %249 = vmatpush1.msra.mxu0 0.0
  %250 = vmatprep.subr.mxu0 0.0
  %251 = vmatpush1.msra.mxu0 0.0
  %252 = vmatprep.subr.mxu0 0.0
  %253 = vmatpush1.msra.mxu0 0.0
  %254 = vmatprep.subr.mxu0 0.0
  %255 = vmatpush1.msra.mxu0 0.0
  %256 = vmatprep.mubr.f32.mxu0 0.0
  %257 = vmatmul.mubr.f32.gmra.mrb[0].mxu0 %v97
  %v258 = vpop.f32.mrb[0].mxu0
  %v259 = vadd.f32 %v93, %v258
  %v260 = vpop.f32.mrb[0].mxu0
  %261 = vmatprep.mubr.f32.mxu0 0.0
  %262 = vmatmul.mubr.f32.gmra.mrb[0].mxu0 %v100
  %v263 = vpop.f32.mrb[0].mxu0
  %v264 = vadd.f32 %v93, %v263
  %v265 = vpop.f32.mrb[0].mxu0
  %266 = vmatprep.mubr.f32.mxu0 0.0
  %267 = vmatmul.mubr.f32.gmra.mrb[0].mxu0 %v103
  %v268 = vpop.f32.mrb[0].mxu0
  %v269 = vadd.f32 %v93, %v268
  %v270 = vpop.f32.mrb[0].mxu0
  %271 = vmatprep.mubr.f32.mxu0 0.0
  %272 = vmatmul.mubr.f32.gmra.mrb[0].mxu0 %v106
  %v273 = vpop.f32.mrb[0].mxu0
  %v274 = vadd.f32 %v93, %v273
  %v275 = vpop.f32.mrb[0].mxu0
  %276 = vmatprep.mubr.f32.mxu0 0.0
  %277 = vmatmul.mubr.f32.gmra.mrb[0].mxu0 %v109
  %v278 = vpop.f32.mrb[0].mxu0
  %v279 = vadd.f32 %v93, %v278
  %v280 = vpop.f32.mrb[0].mxu0
  %281 = vmatprep.mubr.f32.mxu0 0.0
  %282 = vmatmul.mubr.f32.gmra.mrb[0].mxu0 %v112
  %v283 = vpop.f32.mrb[0].mxu0
  %v284 = vadd.f32 %v93, %v283
  %v285 = vpop.f32.mrb[0].mxu0
  %286 = vmatprep.mubr.f32.mxu0 0.0
  %287 = vmatmul.mubr.f32.gmra.mrb[0].mxu0 %v115
  %v288 = vpop.f32.mrb[0].mxu0
  %v289 = vadd.f32 %v93, %v288
  %v290 = vpop.f32.mrb[0].mxu0
  %291 = vmatprep.mubr.f32.mxu0 0.0
  %292 = vmatmul.mubr.f32.gmra.mrb[0].mxu0 %v118
  %v293 = vpop.f32.mrb[0].mxu0
  %v294 = vadd.f32 %v93, %v293
  %v295 = vpop.f32.mrb[0].mxu0
  %296 = vmatprep.mubr.f32.mxu0 0.0
  %297 = vmatmul.mubr.f32.gmra.mrb[0].mxu0 %v121
  %v298 = vpop.f32.mrb[0].mxu0
  %v299 = vadd.f32 %v93, %v298
  %v300 = vpop.f32.mrb[0].mxu0
  %301 = vmatprep.mubr.f32.mxu0 0.0
  %302 = vmatmul.mubr.f32.gmra.mrb[0].mxu0 %v124
  %v303 = vpop.f32.mrb[0].mxu0
  %v304 = vadd.f32 %v93, %v303
  %v305 = vpop.f32.mrb[0].mxu0
  %306 = vmatprep.mubr.f32.mxu0 0.0
  %307 = vmatmul.mubr.f32.gmra.mrb[0].mxu0 %v127
  %v308 = vpop.f32.mrb[0].mxu0
  %v309 = vadd.f32 %v93, %v308
  %v310 = vpop.f32.mrb[0].mxu0
  %311 = vmatprep.mubr.f32.mxu0 0.0
  %312 = vmatmul.mubr.f32.gmra.mrb[0].mxu0 %v130
  %v313 = vpop.f32.mrb[0].mxu0
  %v314 = vadd.f32 %v93, %v313
  %v315 = vpop.f32.mrb[0].mxu0
  %316 = vmatprep.mubr.f32.mxu0 0.0
  %317 = vmatmul.mubr.f32.gmra.mrb[0].mxu0 %v133
  %v318 = vpop.f32.mrb[0].mxu0
  %v319 = vadd.f32 %v93, %v318
  %v320 = vpop.f32.mrb[0].mxu0
  %321 = vmatprep.mubr.f32.mxu0 0.0
  %322 = vmatmul.mubr.f32.gmra.mrb[0].mxu0 %v136
  %v323 = vpop.f32.mrb[0].mxu0
  %v324 = vadd.f32 %v93, %v323
  %v325 = vpop.f32.mrb[0].mxu0
  %326 = vmatprep.mubr.f32.mxu0 0.0
  %327 = vmatmul.mubr.f32.gmra.mrb[0].mxu0 %v139
  %v328 = vpop.f32.mrb[0].mxu0
  %v329 = vadd.f32 %v93, %v328
  %v330 = vpop.f32.mrb[0].mxu0
  %331 = vmatprep.mubr.f32.mxu0 0.0
  %332 = vmatmul.mubr.f32.gmra.mrb[0].mxu0 %v142
  %v333 = vpop.f32.mrb[0].mxu0
  %v334 = vadd.f32 %v93, %v333
  %v335 = vpop.f32.mrb[0].mxu0
  %336 = vmatprep.mubr.f32.mxu0 0.0
  %337 = vmatmul.mubr.f32.gmra.mrb[0].mxu0 %v145
  %v338 = vpop.f32.mrb[0].mxu0
  %v339 = vadd.f32 %v93, %v338
  %v340 = vpop.f32.mrb[0].mxu0
  %341 = vmatprep.mubr.f32.mxu0 0.0
  %342 = vmatmul.mubr.f32.gmra.mrb[0].mxu0 %v148
  %v343 = vpop.f32.mrb[0].mxu0
  %v344 = vadd.f32 %v93, %v343
  %v345 = vpop.f32.mrb[0].mxu0
  %346 = vmatprep.mubr.f32.mxu0 0.0
  %347 = vmatmul.mubr.f32.gmra.mrb[0].mxu0 %v151
  %v348 = vpop.f32.mrb[0].mxu0
  %v349 = vadd.f32 %v93, %v348
  %v350 = vpop.f32.mrb[0].mxu0
  %351 = vmatprep.mubr.f32.mxu0 0.0
  %352 = vmatmul.mubr.f32.gmra.mrb[0].mxu0 %v154
  %v353 = vpop.f32.mrb[0].mxu0
  %v354 = vadd.f32 %v93, %v353
  %v355 = vpop.f32.mrb[0].mxu0
  %356 = vmatprep.mubr.f32.mxu0 0.0
  %357 = vmatmul.mubr.f32.gmra.mrb[0].mxu0 %v157
  %v358 = vpop.f32.mrb[0].mxu0
  %v359 = vadd.f32 %v93, %v358
  %v360 = vpop.f32.mrb[0].mxu0
  %361 = vmatprep.mubr.f32.mxu0 0.0
  %362 = vmatmul.mubr.f32.gmra.mrb[0].mxu0 %v160
  %v363 = vpop.f32.mrb[0].mxu0
  %v364 = vadd.f32 %v93, %v363
  %v365 = vpop.f32.mrb[0].mxu0
  %366 = vmatprep.mubr.f32.mxu0 0.0
  %367 = vmatmul.mubr.f32.gmra.mrb[0].mxu0 %v163
  %v368 = vpop.f32.mrb[0].mxu0
  %v369 = vadd.f32 %v93, %v368
  %v370 = vpop.f32.mrb[0].mxu0
  %371 = vmatprep.mubr.f32.mxu0 0.0
  %372 = vmatmul.mubr.f32.gmra.mrb[0].mxu0 %v166
  %v373 = vpop.f32.mrb[0].mxu0
  %v374 = vadd.f32 %v93, %v373
  %v375 = vpop.f32.mrb[0].mxu0
  %376 = vmatprep.mubr.f32.mxu0 0.0
  %377 = vmatmul.mubr.f32.gmra.mrb[0].mxu0 %v169
  %v378 = vpop.f32.mrb[0].mxu0
  %v379 = vadd.f32 %v93, %v378
  %v380 = vpop.f32.mrb[0].mxu0
  %381 = vmatprep.mubr.f32.mxu0 0.0
  %382 = vmatmul.mubr.f32.gmra.mrb[0].mxu0 %v172
  %v383 = vpop.f32.mrb[0].mxu0
  %v384 = vadd.f32 %v93, %v383
  %v385 = vpop.f32.mrb[0].mxu0
  %386 = vmatprep.mubr.f32.mxu0 0.0
  %387 = vmatmul.mubr.f32.gmra.mrb[0].mxu0 %v175
  %v388 = vpop.f32.mrb[0].mxu0
  %v389 = vadd.f32 %v93, %v388
  %v390 = vpop.f32.mrb[0].mxu0
  %391 = vmatprep.mubr.f32.mxu0 0.0
  %392 = vmatmul.mubr.f32.gmra.mrb[0].mxu0 %v178
  %v393 = vpop.f32.mrb[0].mxu0
  %v394 = vadd.f32 %v93, %v393
  %v395 = vpop.f32.mrb[0].mxu0
  %396 = vmatprep.mubr.f32.mxu0 0.0
  %397 = vmatmul.mubr.f32.gmra.mrb[0].mxu0 %v181
  %v398 = vpop.f32.mrb[0].mxu0
  %v399 = vadd.f32 %v93, %v398
  %v400 = vpop.f32.mrb[0].mxu0
  %401 = vmatprep.mubr.f32.mxu0 0.0
  %402 = vmatmul.mubr.f32.gmra.mrb[0].mxu0 %v184
  %v403 = vpop.f32.mrb[0].mxu0
  %v404 = vadd.f32 %v93, %v403
  %v405 = vpop.f32.mrb[0].mxu0
  %406 = vmatprep.mubr.f32.mxu0 0.0
  %407 = vmatmul.mubr.f32.gmra.mrb[0].mxu0 %v187
  %v408 = vpop.f32.mrb[0].mxu0
  %v409 = vadd.f32 %v93, %v408
  %v410 = vpop.f32.mrb[0].mxu0
  %411 = vmatprep.mubr.f32.mxu0 0.0
  %412 = vmatmul.mubr.f32.gmra.mrb[0].mxu0 %v190
  %v413 = vpop.f32.mrb[0].mxu0
  %v414 = vadd.f32 %v93, %v413
  %v415 = vpop.f32.mrb[0].mxu0
  %416 = vdwg.mxu0
  %417 = vmax.xlane.f32.xlu0 %v259
  %v418 = vpop.xlane.xlu0 %417
  %419 = vmax.xlane.f32.xlu0 %v264
  %v420 = vpop.xlane.xlu0 %419
  %421 = vmax.xlane.f32.xlu0 %v269
  %v422 = vpop.xlane.xlu0 %421
  %423 = vmax.xlane.f32.xlu0 %v274
  %v424 = vpop.xlane.xlu0 %423
  %425 = vmax.xlane.f32.xlu0 %v279
  %v426 = vpop.xlane.xlu0 %425
  %427 = vmax.xlane.f32.xlu0 %v284
  %v428 = vpop.xlane.xlu0 %427
  %429 = vmax.xlane.f32.xlu0 %v289
  %v430 = vpop.xlane.xlu0 %429
  %431 = vmax.xlane.f32.xlu0 %v294
  %v432 = vpop.xlane.xlu0 %431
  %433 = vmax.xlane.f32.xlu0 %v299
  %v434 = vpop.xlane.xlu0 %433
  %435 = vmax.xlane.f32.xlu0 %v304
  %v436 = vpop.xlane.xlu0 %435
  %437 = vmax.xlane.f32.xlu0 %v309
  %v438 = vpop.xlane.xlu0 %437
  %439 = vmax.xlane.f32.xlu0 %v314
  %v440 = vpop.xlane.xlu0 %439
  %441 = vmax.xlane.f32.xlu0 %v319
  %v442 = vpop.xlane.xlu0 %441
  %443 = vmax.xlane.f32.xlu0 %v324
  %v444 = vpop.xlane.xlu0 %443
  %445 = vmax.xlane.f32.xlu0 %v329
  %v446 = vpop.xlane.xlu0 %445
  %447 = vmax.xlane.f32.xlu0 %v334
  %v448 = vpop.xlane.xlu0 %447
  %449 = vmax.xlane.f32.xlu0 %v339
  %v450 = vpop.xlane.xlu0 %449
  %451 = vmax.xlane.f32.xlu0 %v344
  %v452 = vpop.xlane.xlu0 %451
  %453 = vmax.xlane.f32.xlu0 %v349
  %v454 = vpop.xlane.xlu0 %453
  %455 = vmax.xlane.f32.xlu0 %v354
  %v456 = vpop.xlane.xlu0 %455
  %457 = vmax.xlane.f32.xlu0 %v359
  %v458 = vpop.xlane.xlu0 %457
  %459 = vmax.xlane.f32.xlu0 %v364
  %v460 = vpop.xlane.xlu0 %459
  %461 = vmax.xlane.f32.xlu0 %v369
  %v462 = vpop.xlane.xlu0 %461
  %463 = vmax.xlane.f32.xlu0 %v374
  %v464 = vpop.xlane.xlu0 %463
  %465 = vmax.xlane.f32.xlu0 %v379
  %v466 = vpop.xlane.xlu0 %465
  %467 = vmax.xlane.f32.xlu0 %v384
  %v468 = vpop.xlane.xlu0 %467
  %469 = vmax.xlane.f32.xlu0 %v389
  %v470 = vpop.xlane.xlu0 %469
  %471 = vmax.xlane.f32.xlu0 %v394
  %v472 = vpop.xlane.xlu0 %471
  %473 = vmax.xlane.f32.xlu0 %v399
  %v474 = vpop.xlane.xlu0 %473
  %475 = vmax.xlane.f32.xlu0 %v404
  %v476 = vpop.xlane.xlu0 %475
  %477 = vmax.xlane.f32.xlu0 %v409
  %v478 = vpop.xlane.xlu0 %477
  %479 = vmax.xlane.f32.xlu0 %v414
  %v480 = vpop.xlane.xlu0 %479
  %vm481 = vcmp.ge.f32.partialorder %v259, %v418
  %vm482 = vcmp.ge.f32.partialorder %v264, %v420
  %vm483 = vcmp.ge.f32.partialorder %v269, %v422
  %vm484 = vcmp.ge.f32.partialorder %v274, %v424
  %vm485 = vcmp.ge.f32.partialorder %v279, %v426
  %vm486 = vcmp.ge.f32.partialorder %v284, %v428
  %vm487 = vcmp.ge.f32.partialorder %v289, %v430
  %vm488 = vcmp.ge.f32.partialorder %v294, %v432
  %vm489 = vcmp.ge.f32.partialorder %v299, %v434
  %vm490 = vcmp.ge.f32.partialorder %v304, %v436
  %vm491 = vcmp.ge.f32.partialorder %v309, %v438
  %vm492 = vcmp.ge.f32.partialorder %v314, %v440
  %vm493 = vcmp.ge.f32.partialorder %v319, %v442
  %vm494 = vcmp.ge.f32.partialorder %v324, %v444
  %vm495 = vcmp.ge.f32.partialorder %v329, %v446
  %vm496 = vcmp.ge.f32.partialorder %v334, %v448
  %vm497 = vcmp.ge.f32.partialorder %v339, %v450
  %vm498 = vcmp.ge.f32.partialorder %v344, %v452
  %vm499 = vcmp.ge.f32.partialorder %v349, %v454
  %vm500 = vcmp.ge.f32.partialorder %v354, %v456
  %vm501 = vcmp.ge.f32.partialorder %v359, %v458
  %vm502 = vcmp.ge.f32.partialorder %v364, %v460
  %vm503 = vcmp.ge.f32.partialorder %v369, %v462
  %vm504 = vcmp.ge.f32.partialorder %v374, %v464
  %vm505 = vcmp.ge.f32.partialorder %v379, %v466
  %vm506 = vcmp.ge.f32.partialorder %v384, %v468
  %vm507 = vcmp.ge.f32.partialorder %v389, %v470
  %vm508 = vcmp.ge.f32.partialorder %v394, %v472
  %vm509 = vcmp.ge.f32.partialorder %v399, %v474
  %vm510 = vcmp.ge.f32.partialorder %v404, %v476
  %vm511 = vcmp.ge.f32.partialorder %v409, %v478
  %vm512 = vcmp.ge.f32.partialorder %v414, %v480
  %v513 = vsel %vm481, -inf, %v259
  %v514 = vsel %vm482, -inf, %v264
  %v515 = vsel %vm483, -inf, %v269
  %v516 = vsel %vm484, -inf, %v274
  %v517 = vsel %vm485, -inf, %v279
  %v518 = vsel %vm486, -inf, %v284
  %v519 = vsel %vm487, -inf, %v289
  %v520 = vsel %vm488, -inf, %v294
  %v521 = vsel %vm489, -inf, %v299
  %v522 = vsel %vm490, -inf, %v304
  %v523 = vsel %vm491, -inf, %v309
  %v524 = vsel %vm492, -inf, %v314
  %v525 = vsel %vm493, -inf, %v319
  %v526 = vsel %vm494, -inf, %v324
  %v527 = vsel %vm495, -inf, %v329
  %v528 = vsel %vm496, -inf, %v334
  %v529 = vsel %vm497, -inf, %v339
  %v530 = vsel %vm498, -inf, %v344
  %v531 = vsel %vm499, -inf, %v349
  %v532 = vsel %vm500, -inf, %v354
  %v533 = vsel %vm501, -inf, %v359
  %v534 = vsel %vm502, -inf, %v364
  %v535 = vsel %vm503, -inf, %v369
  %v536 = vsel %vm504, -inf, %v374
  %v537 = vsel %vm505, -inf, %v379
  %v538 = vsel %vm506, -inf, %v384
  %v539 = vsel %vm507, -inf, %v389
  %v540 = vsel %vm508, -inf, %v394
  %v541 = vsel %vm509, -inf, %v399
  %v542 = vsel %vm510, -inf, %v404
  %v543 = vsel %vm511, -inf, %v409
  %v544 = vsel %vm512, -inf, %v414
  %545 = vmax.xlane.f32.xlu0 %v513
  %v546 = vpop.xlane.xlu0 %545
  %547 = vmax.xlane.f32.xlu0 %v514
  %v548 = vpop.xlane.xlu0 %547
  %549 = vmax.xlane.f32.xlu0 %v515
  %v550 = vpop.xlane.xlu0 %549
  %551 = vmax.xlane.f32.xlu0 %v516
  %v552 = vpop.xlane.xlu0 %551
  %553 = vmax.xlane.f32.xlu0 %v517
  %v554 = vpop.xlane.xlu0 %553
  %555 = vmax.xlane.f32.xlu0 %v518
  %v556 = vpop.xlane.xlu0 %555
  %557 = vmax.xlane.f32.xlu0 %v519
  %v558 = vpop.xlane.xlu0 %557
  %559 = vmax.xlane.f32.xlu0 %v520
  %v560 = vpop.xlane.xlu0 %559
  %561 = vmax.xlane.f32.xlu0 %v521
  %v562 = vpop.xlane.xlu0 %561
  %563 = vmax.xlane.f32.xlu0 %v522
  %v564 = vpop.xlane.xlu0 %563
  %565 = vmax.xlane.f32.xlu0 %v523
  %v566 = vpop.xlane.xlu0 %565
  %567 = vmax.xlane.f32.xlu0 %v524
  %v568 = vpop.xlane.xlu0 %567
  %569 = vmax.xlane.f32.xlu0 %v525
  %v570 = vpop.xlane.xlu0 %569
  %571 = vmax.xlane.f32.xlu0 %v526
  %v572 = vpop.xlane.xlu0 %571
  %573 = vmax.xlane.f32.xlu0 %v527
  %v574 = vpop.xlane.xlu0 %573
  %575 = vmax.xlane.f32.xlu0 %v528
  %v576 = vpop.xlane.xlu0 %575
  %577 = vmax.xlane.f32.xlu0 %v529
  %v578 = vpop.xlane.xlu0 %577
  %579 = vmax.xlane.f32.xlu0 %v530
  %v580 = vpop.xlane.xlu0 %579
  %581 = vmax.xlane.f32.xlu0 %v531
  %v582 = vpop.xlane.xlu0 %581
  %583 = vmax.xlane.f32.xlu0 %v532
  %v584 = vpop.xlane.xlu0 %583
  %585 = vmax.xlane.f32.xlu0 %v533
  %v586 = vpop.xlane.xlu0 %585
  %587 = vmax.xlane.f32.xlu0 %v534
  %v588 = vpop.xlane.xlu0 %587
  %589 = vmax.xlane.f32.xlu0 %v535
  %v590 = vpop.xlane.xlu0 %589
  %591 = vmax.xlane.f32.xlu0 %v536
  %v592 = vpop.xlane.xlu0 %591
  %593 = vmax.xlane.f32.xlu0 %v537
  %v594 = vpop.xlane.xlu0 %593
  %595 = vmax.xlane.f32.xlu0 %v538
  %v596 = vpop.xlane.xlu0 %595
  %597 = vmax.xlane.f32.xlu0 %v539
  %v598 = vpop.xlane.xlu0 %597
  %599 = vmax.xlane.f32.xlu0 %v540
  %v600 = vpop.xlane.xlu0 %599
  %601 = vmax.xlane.f32.xlu0 %v541
  %v602 = vpop.xlane.xlu0 %601
  %603 = vmax.xlane.f32.xlu0 %v542
  %v604 = vpop.xlane.xlu0 %603
  %605 = vmax.xlane.f32.xlu0 %v543
  %v606 = vpop.xlane.xlu0 %605
  %607 = vmax.xlane.f32.xlu0 %v544
  %v608 = vpop.xlane.xlu0 %607
  %vm609 = vcmp.ge.f32.partialorder %v513, %v546
  %vm610 = vcmp.ge.f32.partialorder %v514, %v548
  %vm611 = vcmp.ge.f32.partialorder %v515, %v550
  %vm612 = vcmp.ge.f32.partialorder %v516, %v552
  %vm613 = vcmp.ge.f32.partialorder %v517, %v554
  %vm614 = vcmp.ge.f32.partialorder %v518, %v556
  %vm615 = vcmp.ge.f32.partialorder %v519, %v558
  %vm616 = vcmp.ge.f32.partialorder %v520, %v560
  %vm617 = vcmp.ge.f32.partialorder %v521, %v562
  %vm618 = vcmp.ge.f32.partialorder %v522, %v564
  %vm619 = vcmp.ge.f32.partialorder %v523, %v566
  %vm620 = vcmp.ge.f32.partialorder %v524, %v568
  %vm621 = vcmp.ge.f32.partialorder %v525, %v570
  %vm622 = vcmp.ge.f32.partialorder %v526, %v572
  %vm623 = vcmp.ge.f32.partialorder %v527, %v574
  %vm624 = vcmp.ge.f32.partialorder %v528, %v576
  %vm625 = vcmp.ge.f32.partialorder %v529, %v578
  %vm626 = vcmp.ge.f32.partialorder %v530, %v580
  %vm627 = vcmp.ge.f32.partialorder %v531, %v582
  %vm628 = vcmp.ge.f32.partialorder %v532, %v584
  %vm629 = vcmp.ge.f32.partialorder %v533, %v586
  %vm630 = vcmp.ge.f32.partialorder %v534, %v588
  %vm631 = vcmp.ge.f32.partialorder %v535, %v590
  %vm632 = vcmp.ge.f32.partialorder %v536, %v592
  %vm633 = vcmp.ge.f32.partialorder %v537, %v594
  %vm634 = vcmp.ge.f32.partialorder %v538, %v596
  %vm635 = vcmp.ge.f32.partialorder %v539, %v598
  %vm636 = vcmp.ge.f32.partialorder %v540, %v600
  %vm637 = vcmp.ge.f32.partialorder %v541, %v602
  %vm638 = vcmp.ge.f32.partialorder %v542, %v604
  %vm639 = vcmp.ge.f32.partialorder %v543, %v606
  %vm640 = vcmp.ge.f32.partialorder %v544, %v608
  %v641 = vsel %vm609, -inf, %v513
  %v642 = vsel %vm610, -inf, %v514
  %v643 = vsel %vm611, -inf, %v515
  %v644 = vsel %vm612, -inf, %v516
  %v645 = vsel %vm613, -inf, %v517
  %v646 = vsel %vm614, -inf, %v518
  %v647 = vsel %vm615, -inf, %v519
  %v648 = vsel %vm616, -inf, %v520
  %v649 = vsel %vm617, -inf, %v521
  %v650 = vsel %vm618, -inf, %v522
  %v651 = vsel %vm619, -inf, %v523
  %v652 = vsel %vm620, -inf, %v524
  %v653 = vsel %vm621, -inf, %v525
  %v654 = vsel %vm622, -inf, %v526
  %v655 = vsel %vm623, -inf, %v527
  %v656 = vsel %vm624, -inf, %v528
  %v657 = vsel %vm625, -inf, %v529
  %v658 = vsel %vm626, -inf, %v530
  %v659 = vsel %vm627, -inf, %v531
  %v660 = vsel %vm628, -inf, %v532
  %v661 = vsel %vm629, -inf, %v533
  %v662 = vsel %vm630, -inf, %v534
  %v663 = vsel %vm631, -inf, %v535
  %v664 = vsel %vm632, -inf, %v536
  %v665 = vsel %vm633, -inf, %v537
  %v666 = vsel %vm634, -inf, %v538
  %v667 = vsel %vm635, -inf, %v539
  %v668 = vsel %vm636, -inf, %v540
  %v669 = vsel %vm637, -inf, %v541
  %v670 = vsel %vm638, -inf, %v542
  %v671 = vsel %vm639, -inf, %v543
  %v672 = vsel %vm640, -inf, %v544
  %673 = vmax.xlane.f32.xlu0 %v641
  %v674 = vpop.xlane.xlu0 %673
  %675 = vmax.xlane.f32.xlu0 %v642
  %v676 = vpop.xlane.xlu0 %675
  %677 = vmax.xlane.f32.xlu0 %v643
  %v678 = vpop.xlane.xlu0 %677
  %679 = vmax.xlane.f32.xlu0 %v644
  %v680 = vpop.xlane.xlu0 %679
  %681 = vmax.xlane.f32.xlu0 %v645
  %v682 = vpop.xlane.xlu0 %681
  %683 = vmax.xlane.f32.xlu0 %v646
  %v684 = vpop.xlane.xlu0 %683
  %685 = vmax.xlane.f32.xlu0 %v647
  %v686 = vpop.xlane.xlu0 %685
  %687 = vmax.xlane.f32.xlu0 %v648
  %v688 = vpop.xlane.xlu0 %687
  %689 = vmax.xlane.f32.xlu0 %v649
  %v690 = vpop.xlane.xlu0 %689
  %691 = vmax.xlane.f32.xlu0 %v650
  %v692 = vpop.xlane.xlu0 %691
  %693 = vmax.xlane.f32.xlu0 %v651
  %v694 = vpop.xlane.xlu0 %693
  %695 = vmax.xlane.f32.xlu0 %v652
  %v696 = vpop.xlane.xlu0 %695
  %697 = vmax.xlane.f32.xlu0 %v653
  %v698 = vpop.xlane.xlu0 %697
  %699 = vmax.xlane.f32.xlu0 %v654
  %v700 = vpop.xlane.xlu0 %699
  %701 = vmax.xlane.f32.xlu0 %v655
  %v702 = vpop.xlane.xlu0 %701
  %703 = vmax.xlane.f32.xlu0 %v656
  %v704 = vpop.xlane.xlu0 %703
  %705 = vmax.xlane.f32.xlu0 %v657
  %v706 = vpop.xlane.xlu0 %705
  %707 = vmax.xlane.f32.xlu0 %v658
  %v708 = vpop.xlane.xlu0 %707
  %709 = vmax.xlane.f32.xlu0 %v659
  %v710 = vpop.xlane.xlu0 %709
  %711 = vmax.xlane.f32.xlu0 %v660
  %v712 = vpop.xlane.xlu0 %711
  %713 = vmax.xlane.f32.xlu0 %v661
  %v714 = vpop.xlane.xlu0 %713
  %715 = vmax.xlane.f32.xlu0 %v662
  %v716 = vpop.xlane.xlu0 %715
  %717 = vmax.xlane.f32.xlu0 %v663
  %v718 = vpop.xlane.xlu0 %717
  %719 = vmax.xlane.f32.xlu0 %v664
  %v720 = vpop.xlane.xlu0 %719
  %721 = vmax.xlane.f32.xlu0 %v665
  %v722 = vpop.xlane.xlu0 %721
  %723 = vmax.xlane.f32.xlu0 %v666
  %v724 = vpop.xlane.xlu0 %723
  %725 = vmax.xlane.f32.xlu0 %v667
  %v726 = vpop.xlane.xlu0 %725
  %727 = vmax.xlane.f32.xlu0 %v668
  %v728 = vpop.xlane.xlu0 %727
  %729 = vmax.xlane.f32.xlu0 %v669
  %v730 = vpop.xlane.xlu0 %729
  %731 = vmax.xlane.f32.xlu0 %v670
  %v732 = vpop.xlane.xlu0 %731
  %733 = vmax.xlane.f32.xlu0 %v671
  %v734 = vpop.xlane.xlu0 %733
  %735 = vmax.xlane.f32.xlu0 %v672
  %v736 = vpop.xlane.xlu0 %735
  %vm737 = vcmp.ge.f32.partialorder %v641, %v674
  %vm738 = vcmp.ge.f32.partialorder %v642, %v676
  %vm739 = vcmp.ge.f32.partialorder %v643, %v678
  %vm740 = vcmp.ge.f32.partialorder %v644, %v680
  %vm741 = vcmp.ge.f32.partialorder %v645, %v682
  %vm742 = vcmp.ge.f32.partialorder %v646, %v684
  %vm743 = vcmp.ge.f32.partialorder %v647, %v686
  %vm744 = vcmp.ge.f32.partialorder %v648, %v688
  %vm745 = vcmp.ge.f32.partialorder %v649, %v690
  %vm746 = vcmp.ge.f32.partialorder %v650, %v692
  %vm747 = vcmp.ge.f32.partialorder %v651, %v694
  %vm748 = vcmp.ge.f32.partialorder %v652, %v696
  %vm749 = vcmp.ge.f32.partialorder %v653, %v698
  %vm750 = vcmp.ge.f32.partialorder %v654, %v700
  %vm751 = vcmp.ge.f32.partialorder %v655, %v702
  %vm752 = vcmp.ge.f32.partialorder %v656, %v704
  %vm753 = vcmp.ge.f32.partialorder %v657, %v706
  %vm754 = vcmp.ge.f32.partialorder %v658, %v708
  %vm755 = vcmp.ge.f32.partialorder %v659, %v710
  %vm756 = vcmp.ge.f32.partialorder %v660, %v712
  %vm757 = vcmp.ge.f32.partialorder %v661, %v714
  %vm758 = vcmp.ge.f32.partialorder %v662, %v716
  %vm759 = vcmp.ge.f32.partialorder %v663, %v718
  %vm760 = vcmp.ge.f32.partialorder %v664, %v720
  %vm761 = vcmp.ge.f32.partialorder %v665, %v722
  %vm762 = vcmp.ge.f32.partialorder %v666, %v724
  %vm763 = vcmp.ge.f32.partialorder %v667, %v726
  %vm764 = vcmp.ge.f32.partialorder %v668, %v728
  %vm765 = vcmp.ge.f32.partialorder %v669, %v730
  %vm766 = vcmp.ge.f32.partialorder %v670, %v732
  %vm767 = vcmp.ge.f32.partialorder %v671, %v734
  %vm768 = vcmp.ge.f32.partialorder %v672, %v736
  %v769 = vsel %vm737, -inf, %v641
  %v770 = vsel %vm738, -inf, %v642
  %v771 = vsel %vm739, -inf, %v643
  %v772 = vsel %vm740, -inf, %v644
  %v773 = vsel %vm741, -inf, %v645
  %v774 = vsel %vm742, -inf, %v646
  %v775 = vsel %vm743, -inf, %v647
  %v776 = vsel %vm744, -inf, %v648
  %v777 = vsel %vm745, -inf, %v649
  %v778 = vsel %vm746, -inf, %v650
  %v779 = vsel %vm747, -inf, %v651
  %v780 = vsel %vm748, -inf, %v652
  %v781 = vsel %vm749, -inf, %v653
  %v782 = vsel %vm750, -inf, %v654
  %v783 = vsel %vm751, -inf, %v655
  %v784 = vsel %vm752, -inf, %v656
  %v785 = vsel %vm753, -inf, %v657
  %v786 = vsel %vm754, -inf, %v658
  %v787 = vsel %vm755, -inf, %v659
  %v788 = vsel %vm756, -inf, %v660
  %v789 = vsel %vm757, -inf, %v661
  %v790 = vsel %vm758, -inf, %v662
  %v791 = vsel %vm759, -inf, %v663
  %v792 = vsel %vm760, -inf, %v664
  %v793 = vsel %vm761, -inf, %v665
  %v794 = vsel %vm762, -inf, %v666
  %v795 = vsel %vm763, -inf, %v667
  %v796 = vsel %vm764, -inf, %v668
  %v797 = vsel %vm765, -inf, %v669
  %v798 = vsel %vm766, -inf, %v670
  %v799 = vsel %vm767, -inf, %v671
  %v800 = vsel %vm768, -inf, %v672
  %801 = vmax.xlane.f32.xlu0 %v769
  %v802 = vpop.xlane.xlu0 %801
  %803 = vmax.xlane.f32.xlu0 %v770
  %v804 = vpop.xlane.xlu0 %803
  %805 = vmax.xlane.f32.xlu0 %v771
  %v806 = vpop.xlane.xlu0 %805
  %807 = vmax.xlane.f32.xlu0 %v772
  %v808 = vpop.xlane.xlu0 %807
  %809 = vmax.xlane.f32.xlu0 %v773
  %v810 = vpop.xlane.xlu0 %809
  %811 = vmax.xlane.f32.xlu0 %v774
  %v812 = vpop.xlane.xlu0 %811
  %813 = vmax.xlane.f32.xlu0 %v775
  %v814 = vpop.xlane.xlu0 %813
  %815 = vmax.xlane.f32.xlu0 %v776
  %v816 = vpop.xlane.xlu0 %815
  %817 = vmax.xlane.f32.xlu0 %v777
  %v818 = vpop.xlane.xlu0 %817
  %819 = vmax.xlane.f32.xlu0 %v778
  %v820 = vpop.xlane.xlu0 %819
  %821 = vmax.xlane.f32.xlu0 %v779
  %v822 = vpop.xlane.xlu0 %821
  %823 = vmax.xlane.f32.xlu0 %v780
  %v824 = vpop.xlane.xlu0 %823
  %825 = vmax.xlane.f32.xlu0 %v781
  %v826 = vpop.xlane.xlu0 %825
  %827 = vmax.xlane.f32.xlu0 %v782
  %v828 = vpop.xlane.xlu0 %827
  %829 = vmax.xlane.f32.xlu0 %v783
  %v830 = vpop.xlane.xlu0 %829
  %831 = vmax.xlane.f32.xlu0 %v784
  %v832 = vpop.xlane.xlu0 %831
  %833 = vmax.xlane.f32.xlu0 %v785
  %v834 = vpop.xlane.xlu0 %833
  %835 = vmax.xlane.f32.xlu0 %v786
  %v836 = vpop.xlane.xlu0 %835
  %837 = vmax.xlane.f32.xlu0 %v787
  %v838 = vpop.xlane.xlu0 %837
  %839 = vmax.xlane.f32.xlu0 %v788
  %v840 = vpop.xlane.xlu0 %839
  %841 = vmax.xlane.f32.xlu0 %v789
  %v842 = vpop.xlane.xlu0 %841
  %843 = vmax.xlane.f32.xlu0 %v790
  %v844 = vpop.xlane.xlu0 %843
  %845 = vmax.xlane.f32.xlu0 %v791
  %v846 = vpop.xlane.xlu0 %845
  %847 = vmax.xlane.f32.xlu0 %v792
  %v848 = vpop.xlane.xlu0 %847
  %849 = vmax.xlane.f32.xlu0 %v793
  %v850 = vpop.xlane.xlu0 %849
  %851 = vmax.xlane.f32.xlu0 %v794
  %v852 = vpop.xlane.xlu0 %851
  %853 = vmax.xlane.f32.xlu0 %v795
  %v854 = vpop.xlane.xlu0 %853
  %855 = vmax.xlane.f32.xlu0 %v796
  %v856 = vpop.xlane.xlu0 %855
  %857 = vmax.xlane.f32.xlu0 %v797
  %v858 = vpop.xlane.xlu0 %857
  %859 = vmax.xlane.f32.xlu0 %v798
  %v860 = vpop.xlane.xlu0 %859
  %861 = vmax.xlane.f32.xlu0 %v799
  %v862 = vpop.xlane.xlu0 %861
  %863 = vmax.xlane.f32.xlu0 %v800
  %v864 = vpop.xlane.xlu0 %863
  %vm865 = vcmp.ge.f32.partialorder %v769, %v802
  %vm866 = vcmp.ge.f32.partialorder %v770, %v804
  %vm867 = vcmp.ge.f32.partialorder %v771, %v806
  %vm868 = vcmp.ge.f32.partialorder %v772, %v808
  %vm869 = vcmp.ge.f32.partialorder %v773, %v810
  %vm870 = vcmp.ge.f32.partialorder %v774, %v812
  %vm871 = vcmp.ge.f32.partialorder %v775, %v814
  %vm872 = vcmp.ge.f32.partialorder %v776, %v816
  %vm873 = vcmp.ge.f32.partialorder %v777, %v818
  %vm874 = vcmp.ge.f32.partialorder %v778, %v820
  %vm875 = vcmp.ge.f32.partialorder %v779, %v822
  %vm876 = vcmp.ge.f32.partialorder %v780, %v824
  %vm877 = vcmp.ge.f32.partialorder %v781, %v826
  %vm878 = vcmp.ge.f32.partialorder %v782, %v828
  %vm879 = vcmp.ge.f32.partialorder %v783, %v830
  %vm880 = vcmp.ge.f32.partialorder %v784, %v832
  %vm881 = vcmp.ge.f32.partialorder %v785, %v834
  %vm882 = vcmp.ge.f32.partialorder %v786, %v836
  %vm883 = vcmp.ge.f32.partialorder %v787, %v838
  %vm884 = vcmp.ge.f32.partialorder %v788, %v840
  %vm885 = vcmp.ge.f32.partialorder %v789, %v842
  %vm886 = vcmp.ge.f32.partialorder %v790, %v844
  %vm887 = vcmp.ge.f32.partialorder %v791, %v846
  %vm888 = vcmp.ge.f32.partialorder %v792, %v848
  %vm889 = vcmp.ge.f32.partialorder %v793, %v850
  %vm890 = vcmp.ge.f32.partialorder %v794, %v852
  %vm891 = vcmp.ge.f32.partialorder %v795, %v854
  %vm892 = vcmp.ge.f32.partialorder %v796, %v856
  %vm893 = vcmp.ge.f32.partialorder %v797, %v858
  %vm894 = vcmp.ge.f32.partialorder %v798, %v860
  %vm895 = vcmp.ge.f32.partialorder %v799, %v862
  %vm896 = vcmp.ge.f32.partialorder %v800, %v864
  %v897 = vsel %vm865, -inf, %v769
  %v898 = vsel %vm866, -inf, %v770
  %v899 = vsel %vm867, -inf, %v771
  %v900 = vsel %vm868, -inf, %v772
  %v901 = vsel %vm869, -inf, %v773
  %v902 = vsel %vm870, -inf, %v774
  %v903 = vsel %vm871, -inf, %v775
  %v904 = vsel %vm872, -inf, %v776
  %v905 = vsel %vm873, -inf, %v777
  %v906 = vsel %vm874, -inf, %v778
  %v907 = vsel %vm875, -inf, %v779
  %v908 = vsel %vm876, -inf, %v780
  %v909 = vsel %vm877, -inf, %v781
  %v910 = vsel %vm878, -inf, %v782
  %v911 = vsel %vm879, -inf, %v783
  %v912 = vsel %vm880, -inf, %v784
  %v913 = vsel %vm881, -inf, %v785
  %v914 = vsel %vm882, -inf, %v786
  %v915 = vsel %vm883, -inf, %v787
  %v916 = vsel %vm884, -inf, %v788
  %v917 = vsel %vm885, -inf, %v789
  %v918 = vsel %vm886, -inf, %v790
  %v919 = vsel %vm887, -inf, %v791
  %v920 = vsel %vm888, -inf, %v792
  %v921 = vsel %vm889, -inf, %v793
  %v922 = vsel %vm890, -inf, %v794
  %v923 = vsel %vm891, -inf, %v795
  %v924 = vsel %vm892, -inf, %v796
  %v925 = vsel %vm893, -inf, %v797
  %v926 = vsel %vm894, -inf, %v798
  %v927 = vsel %vm895, -inf, %v799
  %v928 = vsel %vm896, -inf, %v800
  %929 = vmax.xlane.f32.xlu0 %v897
  %v930 = vpop.xlane.xlu0 %929
  %931 = vmax.xlane.f32.xlu0 %v898
  %v932 = vpop.xlane.xlu0 %931
  %933 = vmax.xlane.f32.xlu0 %v899
  %v934 = vpop.xlane.xlu0 %933
  %935 = vmax.xlane.f32.xlu0 %v900
  %v936 = vpop.xlane.xlu0 %935
  %937 = vmax.xlane.f32.xlu0 %v901
  %v938 = vpop.xlane.xlu0 %937
  %939 = vmax.xlane.f32.xlu0 %v902
  %v940 = vpop.xlane.xlu0 %939
  %941 = vmax.xlane.f32.xlu0 %v903
  %v942 = vpop.xlane.xlu0 %941
  %943 = vmax.xlane.f32.xlu0 %v904
  %v944 = vpop.xlane.xlu0 %943
  %945 = vmax.xlane.f32.xlu0 %v905
  %v946 = vpop.xlane.xlu0 %945
  %947 = vmax.xlane.f32.xlu0 %v906
  %v948 = vpop.xlane.xlu0 %947
  %949 = vmax.xlane.f32.xlu0 %v907
  %v950 = vpop.xlane.xlu0 %949
  %951 = vmax.xlane.f32.xlu0 %v908
  %v952 = vpop.xlane.xlu0 %951
  %953 = vmax.xlane.f32.xlu0 %v909
  %v954 = vpop.xlane.xlu0 %953
  %955 = vmax.xlane.f32.xlu0 %v910
  %v956 = vpop.xlane.xlu0 %955
  %957 = vmax.xlane.f32.xlu0 %v911
  %v958 = vpop.xlane.xlu0 %957
  %959 = vmax.xlane.f32.xlu0 %v912
  %v960 = vpop.xlane.xlu0 %959
  %961 = vmax.xlane.f32.xlu0 %v913
  %v962 = vpop.xlane.xlu0 %961
  %963 = vmax.xlane.f32.xlu0 %v914
  %v964 = vpop.xlane.xlu0 %963
  %965 = vmax.xlane.f32.xlu0 %v915
  %v966 = vpop.xlane.xlu0 %965
  %967 = vmax.xlane.f32.xlu0 %v916
  %v968 = vpop.xlane.xlu0 %967
  %969 = vmax.xlane.f32.xlu0 %v917
  %v970 = vpop.xlane.xlu0 %969
  %971 = vmax.xlane.f32.xlu0 %v918
  %v972 = vpop.xlane.xlu0 %971
  %973 = vmax.xlane.f32.xlu0 %v919
  %v974 = vpop.xlane.xlu0 %973
  %975 = vmax.xlane.f32.xlu0 %v920
  %v976 = vpop.xlane.xlu0 %975
  %977 = vmax.xlane.f32.xlu0 %v921
  %v978 = vpop.xlane.xlu0 %977
  %979 = vmax.xlane.f32.xlu0 %v922
  %v980 = vpop.xlane.xlu0 %979
  %981 = vmax.xlane.f32.xlu0 %v923
  %v982 = vpop.xlane.xlu0 %981
  %983 = vmax.xlane.f32.xlu0 %v924
  %v984 = vpop.xlane.xlu0 %983
  %985 = vmax.xlane.f32.xlu0 %v925
  %v986 = vpop.xlane.xlu0 %985
  %987 = vmax.xlane.f32.xlu0 %v926
  %v988 = vpop.xlane.xlu0 %987
  %989 = vmax.xlane.f32.xlu0 %v927
  %v990 = vpop.xlane.xlu0 %989
  %991 = vmax.xlane.f32.xlu0 %v928
  %v992 = vpop.xlane.xlu0 %991
  %vm993 = vcmp.ge.f32.partialorder %v897, %v930
  %vm994 = vcmp.ge.f32.partialorder %v898, %v932
  %vm995 = vcmp.ge.f32.partialorder %v899, %v934
  %vm996 = vcmp.ge.f32.partialorder %v900, %v936
  %vm997 = vcmp.ge.f32.partialorder %v901, %v938
  %vm998 = vcmp.ge.f32.partialorder %v902, %v940
  %vm999 = vcmp.ge.f32.partialorder %v903, %v942
  %vm1000 = vcmp.ge.f32.partialorder %v904, %v944
  %vm1001 = vcmp.ge.f32.partialorder %v905, %v946
  %vm1002 = vcmp.ge.f32.partialorder %v906, %v948
  %vm1003 = vcmp.ge.f32.partialorder %v907, %v950
  %vm1004 = vcmp.ge.f32.partialorder %v908, %v952
  %vm1005 = vcmp.ge.f32.partialorder %v909, %v954
  %vm1006 = vcmp.ge.f32.partialorder %v910, %v956
  %vm1007 = vcmp.ge.f32.partialorder %v911, %v958
  %vm1008 = vcmp.ge.f32.partialorder %v912, %v960
  %vm1009 = vcmp.ge.f32.partialorder %v913, %v962
  %vm1010 = vcmp.ge.f32.partialorder %v914, %v964
  %vm1011 = vcmp.ge.f32.partialorder %v915, %v966
  %vm1012 = vcmp.ge.f32.partialorder %v916, %v968
  %vm1013 = vcmp.ge.f32.partialorder %v917, %v970
  %vm1014 = vcmp.ge.f32.partialorder %v918, %v972
  %vm1015 = vcmp.ge.f32.partialorder %v919, %v974
  %vm1016 = vcmp.ge.f32.partialorder %v920, %v976
  %vm1017 = vcmp.ge.f32.partialorder %v921, %v978
  %vm1018 = vcmp.ge.f32.partialorder %v922, %v980
  %vm1019 = vcmp.ge.f32.partialorder %v923, %v982
  %vm1020 = vcmp.ge.f32.partialorder %v924, %v984
  %vm1021 = vcmp.ge.f32.partialorder %v925, %v986
  %vm1022 = vcmp.ge.f32.partialorder %v926, %v988
  %vm1023 = vcmp.ge.f32.partialorder %v927, %v990
  %vm1024 = vcmp.ge.f32.partialorder %v928, %v992
  %v1025 = vsel %vm993, -inf, %v897
  %v1026 = vsel %vm994, -inf, %v898
  %v1027 = vsel %vm995, -inf, %v899
  %v1028 = vsel %vm996, -inf, %v900
  %v1029 = vsel %vm997, -inf, %v901
  %v1030 = vsel %vm998, -inf, %v902
  %v1031 = vsel %vm999, -inf, %v903
  %v1032 = vsel %vm1000, -inf, %v904
  %v1033 = vsel %vm1001, -inf, %v905
  %v1034 = vsel %vm1002, -inf, %v906
  %v1035 = vsel %vm1003, -inf, %v907
  %v1036 = vsel %vm1004, -inf, %v908
  %v1037 = vsel %vm1005, -inf, %v909
  %v1038 = vsel %vm1006, -inf, %v910
  %v1039 = vsel %vm1007, -inf, %v911
  %v1040 = vsel %vm1008, -inf, %v912
  %v1041 = vsel %vm1009, -inf, %v913
  %v1042 = vsel %vm1010, -inf, %v914
  %v1043 = vsel %vm1011, -inf, %v915
  %v1044 = vsel %vm1012, -inf, %v916
  %v1045 = vsel %vm1013, -inf, %v917
  %v1046 = vsel %vm1014, -inf, %v918
  %v1047 = vsel %vm1015, -inf, %v919
  %v1048 = vsel %vm1016, -inf, %v920
  %v1049 = vsel %vm1017, -inf, %v921
  %v1050 = vsel %vm1018, -inf, %v922
  %v1051 = vsel %vm1019, -inf, %v923
  %v1052 = vsel %vm1020, -inf, %v924
  %v1053 = vsel %vm1021, -inf, %v925
  %v1054 = vsel %vm1022, -inf, %v926
  %v1055 = vsel %vm1023, -inf, %v927
  %v1056 = vsel %vm1024, -inf, %v928
  %1057 = vmax.xlane.f32.xlu0 %v1025
  %v1058 = vpop.xlane.xlu0 %1057
  %1059 = vmax.xlane.f32.xlu0 %v1026
  %v1060 = vpop.xlane.xlu0 %1059
  %1061 = vmax.xlane.f32.xlu0 %v1027
  %v1062 = vpop.xlane.xlu0 %1061
  %1063 = vmax.xlane.f32.xlu0 %v1028
  %v1064 = vpop.xlane.xlu0 %1063
  %1065 = vmax.xlane.f32.xlu0 %v1029
  %v1066 = vpop.xlane.xlu0 %1065
  %1067 = vmax.xlane.f32.xlu0 %v1030
  %v1068 = vpop.xlane.xlu0 %1067
  %1069 = vmax.xlane.f32.xlu0 %v1031
  %v1070 = vpop.xlane.xlu0 %1069
  %1071 = vmax.xlane.f32.xlu0 %v1032
  %v1072 = vpop.xlane.xlu0 %1071
  %1073 = vmax.xlane.f32.xlu0 %v1033
  %v1074 = vpop.xlane.xlu0 %1073
  %1075 = vmax.xlane.f32.xlu0 %v1034
  %v1076 = vpop.xlane.xlu0 %1075
  %1077 = vmax.xlane.f32.xlu0 %v1035
  %v1078 = vpop.xlane.xlu0 %1077
  %1079 = vmax.xlane.f32.xlu0 %v1036
  %v1080 = vpop.xlane.xlu0 %1079
  %1081 = vmax.xlane.f32.xlu0 %v1037
  %v1082 = vpop.xlane.xlu0 %1081
  %1083 = vmax.xlane.f32.xlu0 %v1038
  %v1084 = vpop.xlane.xlu0 %1083
  %1085 = vmax.xlane.f32.xlu0 %v1039
  %v1086 = vpop.xlane.xlu0 %1085
  %1087 = vmax.xlane.f32.xlu0 %v1040
  %v1088 = vpop.xlane.xlu0 %1087
  %1089 = vmax.xlane.f32.xlu0 %v1041
  %v1090 = vpop.xlane.xlu0 %1089
  %1091 = vmax.xlane.f32.xlu0 %v1042
  %v1092 = vpop.xlane.xlu0 %1091
  %1093 = vmax.xlane.f32.xlu0 %v1043
  %v1094 = vpop.xlane.xlu0 %1093
  %1095 = vmax.xlane.f32.xlu0 %v1044
  %v1096 = vpop.xlane.xlu0 %1095
  %1097 = vmax.xlane.f32.xlu0 %v1045
  %v1098 = vpop.xlane.xlu0 %1097
  %1099 = vmax.xlane.f32.xlu0 %v1046
  %v1100 = vpop.xlane.xlu0 %1099
  %1101 = vmax.xlane.f32.xlu0 %v1047
  %v1102 = vpop.xlane.xlu0 %1101
  %1103 = vmax.xlane.f32.xlu0 %v1048
  %v1104 = vpop.xlane.xlu0 %1103
  %1105 = vmax.xlane.f32.xlu0 %v1049
  %v1106 = vpop.xlane.xlu0 %1105
  %1107 = vmax.xlane.f32.xlu0 %v1050
  %v1108 = vpop.xlane.xlu0 %1107
  %1109 = vmax.xlane.f32.xlu0 %v1051
  %v1110 = vpop.xlane.xlu0 %1109
  %1111 = vmax.xlane.f32.xlu0 %v1052
  %v1112 = vpop.xlane.xlu0 %1111
  %1113 = vmax.xlane.f32.xlu0 %v1053
  %v1114 = vpop.xlane.xlu0 %1113
  %1115 = vmax.xlane.f32.xlu0 %v1054
  %v1116 = vpop.xlane.xlu0 %1115
  %1117 = vmax.xlane.f32.xlu0 %v1055
  %v1118 = vpop.xlane.xlu0 %1117
  %1119 = vmax.xlane.f32.xlu0 %v1056
  %v1120 = vpop.xlane.xlu0 %1119
  %vm1121 = vcmp.ge.f32.partialorder %v1025, %v1058
  %vm1122 = vcmp.ge.f32.partialorder %v1026, %v1060
  %vm1123 = vcmp.ge.f32.partialorder %v1027, %v1062
  %vm1124 = vcmp.ge.f32.partialorder %v1028, %v1064
  %vm1125 = vcmp.ge.f32.partialorder %v1029, %v1066
  %vm1126 = vcmp.ge.f32.partialorder %v1030, %v1068
  %vm1127 = vcmp.ge.f32.partialorder %v1031, %v1070
  %vm1128 = vcmp.ge.f32.partialorder %v1032, %v1072
  %vm1129 = vcmp.ge.f32.partialorder %v1033, %v1074
  %vm1130 = vcmp.ge.f32.partialorder %v1034, %v1076
  %vm1131 = vcmp.ge.f32.partialorder %v1035, %v1078
  %vm1132 = vcmp.ge.f32.partialorder %v1036, %v1080
  %vm1133 = vcmp.ge.f32.partialorder %v1037, %v1082
  %vm1134 = vcmp.ge.f32.partialorder %v1038, %v1084
  %vm1135 = vcmp.ge.f32.partialorder %v1039, %v1086
  %vm1136 = vcmp.ge.f32.partialorder %v1040, %v1088
  %vm1137 = vcmp.ge.f32.partialorder %v1041, %v1090
  %vm1138 = vcmp.ge.f32.partialorder %v1042, %v1092
  %vm1139 = vcmp.ge.f32.partialorder %v1043, %v1094
  %vm1140 = vcmp.ge.f32.partialorder %v1044, %v1096
  %vm1141 = vcmp.ge.f32.partialorder %v1045, %v1098
  %vm1142 = vcmp.ge.f32.partialorder %v1046, %v1100
  %vm1143 = vcmp.ge.f32.partialorder %v1047, %v1102
  %vm1144 = vcmp.ge.f32.partialorder %v1048, %v1104
  %vm1145 = vcmp.ge.f32.partialorder %v1049, %v1106
  %vm1146 = vcmp.ge.f32.partialorder %v1050, %v1108
  %vm1147 = vcmp.ge.f32.partialorder %v1051, %v1110
  %vm1148 = vcmp.ge.f32.partialorder %v1052, %v1112
  %vm1149 = vcmp.ge.f32.partialorder %v1053, %v1114
  %vm1150 = vcmp.ge.f32.partialorder %v1054, %v1116
  %vm1151 = vcmp.ge.f32.partialorder %v1055, %v1118
  %vm1152 = vcmp.ge.f32.partialorder %v1056, %v1120
  %v1153 = vsel %vm1121, -inf, %v1025
  %v1154 = vsel %vm1122, -inf, %v1026
  %v1155 = vsel %vm1123, -inf, %v1027
  %v1156 = vsel %vm1124, -inf, %v1028
  %v1157 = vsel %vm1125, -inf, %v1029
  %v1158 = vsel %vm1126, -inf, %v1030
  %v1159 = vsel %vm1127, -inf, %v1031
  %v1160 = vsel %vm1128, -inf, %v1032
  %v1161 = vsel %vm1129, -inf, %v1033
  %v1162 = vsel %vm1130, -inf, %v1034
  %v1163 = vsel %vm1131, -inf, %v1035
  %v1164 = vsel %vm1132, -inf, %v1036
  %v1165 = vsel %vm1133, -inf, %v1037
  %v1166 = vsel %vm1134, -inf, %v1038
  %v1167 = vsel %vm1135, -inf, %v1039
  %v1168 = vsel %vm1136, -inf, %v1040
  %v1169 = vsel %vm1137, -inf, %v1041
  %v1170 = vsel %vm1138, -inf, %v1042
  %v1171 = vsel %vm1139, -inf, %v1043
  %v1172 = vsel %vm1140, -inf, %v1044
  %v1173 = vsel %vm1141, -inf, %v1045
  %v1174 = vsel %vm1142, -inf, %v1046
  %v1175 = vsel %vm1143, -inf, %v1047
  %v1176 = vsel %vm1144, -inf, %v1048
  %v1177 = vsel %vm1145, -inf, %v1049
  %v1178 = vsel %vm1146, -inf, %v1050
  %v1179 = vsel %vm1147, -inf, %v1051
  %v1180 = vsel %vm1148, -inf, %v1052
  %v1181 = vsel %vm1149, -inf, %v1053
  %v1182 = vsel %vm1150, -inf, %v1054
  %v1183 = vsel %vm1151, -inf, %v1055
  %v1184 = vsel %vm1152, -inf, %v1056
  %1185 = vmax.xlane.f32.xlu0 %v1153
  %v1186 = vpop.xlane.xlu0 %1185
  %1187 = vmax.xlane.f32.xlu0 %v1154
  %v1188 = vpop.xlane.xlu0 %1187
  %1189 = vmax.xlane.f32.xlu0 %v1155
  %v1190 = vpop.xlane.xlu0 %1189
  %1191 = vmax.xlane.f32.xlu0 %v1156
  %v1192 = vpop.xlane.xlu0 %1191
  %1193 = vmax.xlane.f32.xlu0 %v1157
  %v1194 = vpop.xlane.xlu0 %1193
  %1195 = vmax.xlane.f32.xlu0 %v1158
  %v1196 = vpop.xlane.xlu0 %1195
  %1197 = vmax.xlane.f32.xlu0 %v1159
  %v1198 = vpop.xlane.xlu0 %1197
  %1199 = vmax.xlane.f32.xlu0 %v1160
  %v1200 = vpop.xlane.xlu0 %1199
  %1201 = vmax.xlane.f32.xlu0 %v1161
  %v1202 = vpop.xlane.xlu0 %1201
  %1203 = vmax.xlane.f32.xlu0 %v1162
  %v1204 = vpop.xlane.xlu0 %1203
  %1205 = vmax.xlane.f32.xlu0 %v1163
  %v1206 = vpop.xlane.xlu0 %1205
  %1207 = vmax.xlane.f32.xlu0 %v1164
  %v1208 = vpop.xlane.xlu0 %1207
  %1209 = vmax.xlane.f32.xlu0 %v1165
  %v1210 = vpop.xlane.xlu0 %1209
  %1211 = vmax.xlane.f32.xlu0 %v1166
  %v1212 = vpop.xlane.xlu0 %1211
  %1213 = vmax.xlane.f32.xlu0 %v1167
  %v1214 = vpop.xlane.xlu0 %1213
  %1215 = vmax.xlane.f32.xlu0 %v1168
  %v1216 = vpop.xlane.xlu0 %1215
  %1217 = vmax.xlane.f32.xlu0 %v1169
  %v1218 = vpop.xlane.xlu0 %1217
  %1219 = vmax.xlane.f32.xlu0 %v1170
  %v1220 = vpop.xlane.xlu0 %1219
  %1221 = vmax.xlane.f32.xlu0 %v1171
  %v1222 = vpop.xlane.xlu0 %1221
  %1223 = vmax.xlane.f32.xlu0 %v1172
  %v1224 = vpop.xlane.xlu0 %1223
  %1225 = vmax.xlane.f32.xlu0 %v1173
  %v1226 = vpop.xlane.xlu0 %1225
  %1227 = vmax.xlane.f32.xlu0 %v1174
  %v1228 = vpop.xlane.xlu0 %1227
  %1229 = vmax.xlane.f32.xlu0 %v1175
  %v1230 = vpop.xlane.xlu0 %1229
  %1231 = vmax.xlane.f32.xlu0 %v1176
  %v1232 = vpop.xlane.xlu0 %1231
  %1233 = vmax.xlane.f32.xlu0 %v1177
  %v1234 = vpop.xlane.xlu0 %1233
  %1235 = vmax.xlane.f32.xlu0 %v1178
  %v1236 = vpop.xlane.xlu0 %1235
  %1237 = vmax.xlane.f32.xlu0 %v1179
  %v1238 = vpop.xlane.xlu0 %1237
  %1239 = vmax.xlane.f32.xlu0 %v1180
  %v1240 = vpop.xlane.xlu0 %1239
  %1241 = vmax.xlane.f32.xlu0 %v1181
  %v1242 = vpop.xlane.xlu0 %1241
  %1243 = vmax.xlane.f32.xlu0 %v1182
  %v1244 = vpop.xlane.xlu0 %1243
  %1245 = vmax.xlane.f32.xlu0 %v1183
  %v1246 = vpop.xlane.xlu0 %1245
  %1247 = vmax.xlane.f32.xlu0 %v1184
  %v1248 = vpop.xlane.xlu0 %1247
  %vm1249 = vcmp.ge.f32.partialorder %v1153, %v1186
  %vm1250 = vcmp.ge.f32.partialorder %v1154, %v1188
  %vm1251 = vcmp.ge.f32.partialorder %v1155, %v1190
  %vm1252 = vcmp.ge.f32.partialorder %v1156, %v1192
  %vm1253 = vcmp.ge.f32.partialorder %v1157, %v1194
  %vm1254 = vcmp.ge.f32.partialorder %v1158, %v1196
  %vm1255 = vcmp.ge.f32.partialorder %v1159, %v1198
  %vm1256 = vcmp.ge.f32.partialorder %v1160, %v1200
  %vm1257 = vcmp.ge.f32.partialorder %v1161, %v1202
  %vm1258 = vcmp.ge.f32.partialorder %v1162, %v1204
  %vm1259 = vcmp.ge.f32.partialorder %v1163, %v1206
  %vm1260 = vcmp.ge.f32.partialorder %v1164, %v1208
  %vm1261 = vcmp.ge.f32.partialorder %v1165, %v1210
  %vm1262 = vcmp.ge.f32.partialorder %v1166, %v1212
  %vm1263 = vcmp.ge.f32.partialorder %v1167, %v1214
  %vm1264 = vcmp.ge.f32.partialorder %v1168, %v1216
  %vm1265 = vcmp.ge.f32.partialorder %v1169, %v1218
  %vm1266 = vcmp.ge.f32.partialorder %v1170, %v1220
  %vm1267 = vcmp.ge.f32.partialorder %v1171, %v1222
  %vm1268 = vcmp.ge.f32.partialorder %v1172, %v1224
  %vm1269 = vcmp.ge.f32.partialorder %v1173, %v1226
  %vm1270 = vcmp.ge.f32.partialorder %v1174, %v1228
  %vm1271 = vcmp.ge.f32.partialorder %v1175, %v1230
  %vm1272 = vcmp.ge.f32.partialorder %v1176, %v1232
  %vm1273 = vcmp.ge.f32.partialorder %v1177, %v1234
  %vm1274 = vcmp.ge.f32.partialorder %v1178, %v1236
  %vm1275 = vcmp.ge.f32.partialorder %v1179, %v1238
  %vm1276 = vcmp.ge.f32.partialorder %v1180, %v1240
  %vm1277 = vcmp.ge.f32.partialorder %v1181, %v1242
  %vm1278 = vcmp.ge.f32.partialorder %v1182, %v1244
  %vm1279 = vcmp.ge.f32.partialorder %v1183, %v1246
  %vm1280 = vcmp.ge.f32.partialorder %v1184, %v1248
  %v1281 = vsel %vm1249, -inf, %v1153
  %v1282 = vsel %vm1250, -inf, %v1154
  %v1283 = vsel %vm1251, -inf, %v1155
  %v1284 = vsel %vm1252, -inf, %v1156
  %v1285 = vsel %vm1253, -inf, %v1157
  %v1286 = vsel %vm1254, -inf, %v1158
  %v1287 = vsel %vm1255, -inf, %v1159
  %v1288 = vsel %vm1256, -inf, %v1160
  %v1289 = vsel %vm1257, -inf, %v1161
  %v1290 = vsel %vm1258, -inf, %v1162
  %v1291 = vsel %vm1259, -inf, %v1163
  %v1292 = vsel %vm1260, -inf, %v1164
  %v1293 = vsel %vm1261, -inf, %v1165
  %v1294 = vsel %vm1262, -inf, %v1166
  %v1295 = vsel %vm1263, -inf, %v1167
  %v1296 = vsel %vm1264, -inf, %v1168
  %v1297 = vsel %vm1265, -inf, %v1169
  %v1298 = vsel %vm1266, -inf, %v1170
  %v1299 = vsel %vm1267, -inf, %v1171
  %v1300 = vsel %vm1268, -inf, %v1172
  %v1301 = vsel %vm1269, -inf, %v1173
  %v1302 = vsel %vm1270, -inf, %v1174
  %v1303 = vsel %vm1271, -inf, %v1175
  %v1304 = vsel %vm1272, -inf, %v1176
  %v1305 = vsel %vm1273, -inf, %v1177
  %v1306 = vsel %vm1274, -inf, %v1178
  %v1307 = vsel %vm1275, -inf, %v1179
  %v1308 = vsel %vm1276, -inf, %v1180
  %v1309 = vsel %vm1277, -inf, %v1181
  %v1310 = vsel %vm1278, -inf, %v1182
  %v1311 = vsel %vm1279, -inf, %v1183
  %v1312 = vsel %vm1280, -inf, %v1184
  %1313 = vmax.xlane.f32.xlu0 %v1281
  %v1314 = vpop.xlane.xlu0 %1313
  %1315 = vmax.xlane.f32.xlu0 %v1282
  %v1316 = vpop.xlane.xlu0 %1315
  %1317 = vmax.xlane.f32.xlu0 %v1283
  %v1318 = vpop.xlane.xlu0 %1317
  %1319 = vmax.xlane.f32.xlu0 %v1284
  %v1320 = vpop.xlane.xlu0 %1319
  %1321 = vmax.xlane.f32.xlu0 %v1285
  %v1322 = vpop.xlane.xlu0 %1321
  %1323 = vmax.xlane.f32.xlu0 %v1286
  %v1324 = vpop.xlane.xlu0 %1323
  %1325 = vmax.xlane.f32.xlu0 %v1287
  %v1326 = vpop.xlane.xlu0 %1325
  %1327 = vmax.xlane.f32.xlu0 %v1288
  %v1328 = vpop.xlane.xlu0 %1327
  %1329 = vmax.xlane.f32.xlu0 %v1289
  %v1330 = vpop.xlane.xlu0 %1329
  %1331 = vmax.xlane.f32.xlu0 %v1290
  %v1332 = vpop.xlane.xlu0 %1331
  %1333 = vmax.xlane.f32.xlu0 %v1291
  %v1334 = vpop.xlane.xlu0 %1333
  %1335 = vmax.xlane.f32.xlu0 %v1292
  %v1336 = vpop.xlane.xlu0 %1335
  %1337 = vmax.xlane.f32.xlu0 %v1293
  %v1338 = vpop.xlane.xlu0 %1337
  %1339 = vmax.xlane.f32.xlu0 %v1294
  %v1340 = vpop.xlane.xlu0 %1339
  %1341 = vmax.xlane.f32.xlu0 %v1295
  %v1342 = vpop.xlane.xlu0 %1341
  %1343 = vmax.xlane.f32.xlu0 %v1296
  %v1344 = vpop.xlane.xlu0 %1343
  %1345 = vmax.xlane.f32.xlu0 %v1297
  %v1346 = vpop.xlane.xlu0 %1345
  %1347 = vmax.xlane.f32.xlu0 %v1298
  %v1348 = vpop.xlane.xlu0 %1347
  %1349 = vmax.xlane.f32.xlu0 %v1299
  %v1350 = vpop.xlane.xlu0 %1349
  %1351 = vmax.xlane.f32.xlu0 %v1300
  %v1352 = vpop.xlane.xlu0 %1351
  %1353 = vmax.xlane.f32.xlu0 %v1301
  %v1354 = vpop.xlane.xlu0 %1353
  %1355 = vmax.xlane.f32.xlu0 %v1302
  %v1356 = vpop.xlane.xlu0 %1355
  %1357 = vmax.xlane.f32.xlu0 %v1303
  %v1358 = vpop.xlane.xlu0 %1357
  %1359 = vmax.xlane.f32.xlu0 %v1304
  %v1360 = vpop.xlane.xlu0 %1359
  %1361 = vmax.xlane.f32.xlu0 %v1305
  %v1362 = vpop.xlane.xlu0 %1361
  %1363 = vmax.xlane.f32.xlu0 %v1306
  %v1364 = vpop.xlane.xlu0 %1363
  %1365 = vmax.xlane.f32.xlu0 %v1307
  %v1366 = vpop.xlane.xlu0 %1365
  %1367 = vmax.xlane.f32.xlu0 %v1308
  %v1368 = vpop.xlane.xlu0 %1367
  %1369 = vmax.xlane.f32.xlu0 %v1309
  %v1370 = vpop.xlane.xlu0 %1369
  %1371 = vmax.xlane.f32.xlu0 %v1310
  %v1372 = vpop.xlane.xlu0 %1371
  %1373 = vmax.xlane.f32.xlu0 %v1311
  %v1374 = vpop.xlane.xlu0 %1373
  %1375 = vmax.xlane.f32.xlu0 %v1312
  %v1376 = vpop.xlane.xlu0 %1375
  %vm1377 = vcmp.ge.f32.partialorder %v1281, %v1314
  %vm1378 = vcmp.ge.f32.partialorder %v1282, %v1316
  %vm1379 = vcmp.ge.f32.partialorder %v1283, %v1318
  %vm1380 = vcmp.ge.f32.partialorder %v1284, %v1320
  %vm1381 = vcmp.ge.f32.partialorder %v1285, %v1322
  %vm1382 = vcmp.ge.f32.partialorder %v1286, %v1324
  %vm1383 = vcmp.ge.f32.partialorder %v1287, %v1326
  %vm1384 = vcmp.ge.f32.partialorder %v1288, %v1328
  %vm1385 = vcmp.ge.f32.partialorder %v1289, %v1330
  %vm1386 = vcmp.ge.f32.partialorder %v1290, %v1332
  %vm1387 = vcmp.ge.f32.partialorder %v1291, %v1334
  %vm1388 = vcmp.ge.f32.partialorder %v1292, %v1336
  %vm1389 = vcmp.ge.f32.partialorder %v1293, %v1338
  %vm1390 = vcmp.ge.f32.partialorder %v1294, %v1340
  %vm1391 = vcmp.ge.f32.partialorder %v1295, %v1342
  %vm1392 = vcmp.ge.f32.partialorder %v1296, %v1344
  %vm1393 = vcmp.ge.f32.partialorder %v1297, %v1346
  %vm1394 = vcmp.ge.f32.partialorder %v1298, %v1348
  %vm1395 = vcmp.ge.f32.partialorder %v1299, %v1350
  %vm1396 = vcmp.ge.f32.partialorder %v1300, %v1352
  %vm1397 = vcmp.ge.f32.partialorder %v1301, %v1354
  %vm1398 = vcmp.ge.f32.partialorder %v1302, %v1356
  %vm1399 = vcmp.ge.f32.partialorder %v1303, %v1358
  %vm1400 = vcmp.ge.f32.partialorder %v1304, %v1360
  %vm1401 = vcmp.ge.f32.partialorder %v1305, %v1362
  %vm1402 = vcmp.ge.f32.partialorder %v1306, %v1364
  %vm1403 = vcmp.ge.f32.partialorder %v1307, %v1366
  %vm1404 = vcmp.ge.f32.partialorder %v1308, %v1368
  %vm1405 = vcmp.ge.f32.partialorder %v1309, %v1370
  %vm1406 = vcmp.ge.f32.partialorder %v1310, %v1372
  %vm1407 = vcmp.ge.f32.partialorder %v1311, %v1374
  %vm1408 = vcmp.ge.f32.partialorder %v1312, %v1376
  %v1409 = vsel %vm1377, -inf, %v1281
  %v1410 = vsel %vm1378, -inf, %v1282
  %v1411 = vsel %vm1379, -inf, %v1283
  %v1412 = vsel %vm1380, -inf, %v1284
  %v1413 = vsel %vm1381, -inf, %v1285
  %v1414 = vsel %vm1382, -inf, %v1286
  %v1415 = vsel %vm1383, -inf, %v1287
  %v1416 = vsel %vm1384, -inf, %v1288
  %v1417 = vsel %vm1385, -inf, %v1289
  %v1418 = vsel %vm1386, -inf, %v1290
  %v1419 = vsel %vm1387, -inf, %v1291
  %v1420 = vsel %vm1388, -inf, %v1292
  %v1421 = vsel %vm1389, -inf, %v1293
  %v1422 = vsel %vm1390, -inf, %v1294
  %v1423 = vsel %vm1391, -inf, %v1295
  %v1424 = vsel %vm1392, -inf, %v1296
  %v1425 = vsel %vm1393, -inf, %v1297
  %v1426 = vsel %vm1394, -inf, %v1298
  %v1427 = vsel %vm1395, -inf, %v1299
  %v1428 = vsel %vm1396, -inf, %v1300
  %v1429 = vsel %vm1397, -inf, %v1301
  %v1430 = vsel %vm1398, -inf, %v1302
  %v1431 = vsel %vm1399, -inf, %v1303
  %v1432 = vsel %vm1400, -inf, %v1304
  %v1433 = vsel %vm1401, -inf, %v1305
  %v1434 = vsel %vm1402, -inf, %v1306
  %v1435 = vsel %vm1403, -inf, %v1307
  %v1436 = vsel %vm1404, -inf, %v1308
  %v1437 = vsel %vm1405, -inf, %v1309
  %v1438 = vsel %vm1406, -inf, %v1310
  %v1439 = vsel %vm1407, -inf, %v1311
  %v1440 = vsel %vm1408, -inf, %v1312
  %1441 = vmax.xlane.f32.xlu0 %v1409
  %v1442 = vpop.xlane.xlu0 %1441
  %1443 = vmax.xlane.f32.xlu0 %v1410
  %v1444 = vpop.xlane.xlu0 %1443
  %1445 = vmax.xlane.f32.xlu0 %v1411
  %v1446 = vpop.xlane.xlu0 %1445
  %1447 = vmax.xlane.f32.xlu0 %v1412
  %v1448 = vpop.xlane.xlu0 %1447
  %1449 = vmax.xlane.f32.xlu0 %v1413
  %v1450 = vpop.xlane.xlu0 %1449
  %1451 = vmax.xlane.f32.xlu0 %v1414
  %v1452 = vpop.xlane.xlu0 %1451
  %1453 = vmax.xlane.f32.xlu0 %v1415
  %v1454 = vpop.xlane.xlu0 %1453
  %1455 = vmax.xlane.f32.xlu0 %v1416
  %v1456 = vpop.xlane.xlu0 %1455
  %1457 = vmax.xlane.f32.xlu0 %v1417
  %v1458 = vpop.xlane.xlu0 %1457
  %1459 = vmax.xlane.f32.xlu0 %v1418
  %v1460 = vpop.xlane.xlu0 %1459
  %1461 = vmax.xlane.f32.xlu0 %v1419
  %v1462 = vpop.xlane.xlu0 %1461
  %1463 = vmax.xlane.f32.xlu0 %v1420
  %v1464 = vpop.xlane.xlu0 %1463
  %1465 = vmax.xlane.f32.xlu0 %v1421
  %v1466 = vpop.xlane.xlu0 %1465
  %1467 = vmax.xlane.f32.xlu0 %v1422
  %v1468 = vpop.xlane.xlu0 %1467
  %1469 = vmax.xlane.f32.xlu0 %v1423
  %v1470 = vpop.xlane.xlu0 %1469
  %1471 = vmax.xlane.f32.xlu0 %v1424
  %v1472 = vpop.xlane.xlu0 %1471
  %1473 = vmax.xlane.f32.xlu0 %v1425
  %v1474 = vpop.xlane.xlu0 %1473
  %1475 = vmax.xlane.f32.xlu0 %v1426
  %v1476 = vpop.xlane.xlu0 %1475
  %1477 = vmax.xlane.f32.xlu0 %v1427
  %v1478 = vpop.xlane.xlu0 %1477
  %1479 = vmax.xlane.f32.xlu0 %v1428
  %v1480 = vpop.xlane.xlu0 %1479
  %1481 = vmax.xlane.f32.xlu0 %v1429
  %v1482 = vpop.xlane.xlu0 %1481
  %1483 = vmax.xlane.f32.xlu0 %v1430
  %v1484 = vpop.xlane.xlu0 %1483
  %1485 = vmax.xlane.f32.xlu0 %v1431
  %v1486 = vpop.xlane.xlu0 %1485
  %1487 = vmax.xlane.f32.xlu0 %v1432
  %v1488 = vpop.xlane.xlu0 %1487
  %1489 = vmax.xlane.f32.xlu0 %v1433
  %v1490 = vpop.xlane.xlu0 %1489
  %1491 = vmax.xlane.f32.xlu0 %v1434
  %v1492 = vpop.xlane.xlu0 %1491
  %1493 = vmax.xlane.f32.xlu0 %v1435
  %v1494 = vpop.xlane.xlu0 %1493
  %1495 = vmax.xlane.f32.xlu0 %v1436
  %v1496 = vpop.xlane.xlu0 %1495
  %1497 = vmax.xlane.f32.xlu0 %v1437
  %v1498 = vpop.xlane.xlu0 %1497
  %1499 = vmax.xlane.f32.xlu0 %v1438
  %v1500 = vpop.xlane.xlu0 %1499
  %1501 = vmax.xlane.f32.xlu0 %v1439
  %v1502 = vpop.xlane.xlu0 %1501
  %1503 = vmax.xlane.f32.xlu0 %v1440
  %v1504 = vpop.xlane.xlu0 %1503
  %vm1505 = vcmp.ge.f32.partialorder %v1409, %v1442
  %vm1506 = vcmp.ge.f32.partialorder %v1410, %v1444
  %vm1507 = vcmp.ge.f32.partialorder %v1411, %v1446
  %vm1508 = vcmp.ge.f32.partialorder %v1412, %v1448
  %vm1509 = vcmp.ge.f32.partialorder %v1413, %v1450
  %vm1510 = vcmp.ge.f32.partialorder %v1414, %v1452
  %vm1511 = vcmp.ge.f32.partialorder %v1415, %v1454
  %vm1512 = vcmp.ge.f32.partialorder %v1416, %v1456
  %vm1513 = vcmp.ge.f32.partialorder %v1417, %v1458
  %vm1514 = vcmp.ge.f32.partialorder %v1418, %v1460
  %vm1515 = vcmp.ge.f32.partialorder %v1419, %v1462
  %vm1516 = vcmp.ge.f32.partialorder %v1420, %v1464
  %vm1517 = vcmp.ge.f32.partialorder %v1421, %v1466
  %vm1518 = vcmp.ge.f32.partialorder %v1422, %v1468
  %vm1519 = vcmp.ge.f32.partialorder %v1423, %v1470
  %vm1520 = vcmp.ge.f32.partialorder %v1424, %v1472
  %vm1521 = vcmp.ge.f32.partialorder %v1425, %v1474
  %vm1522 = vcmp.ge.f32.partialorder %v1426, %v1476
  %vm1523 = vcmp.ge.f32.partialorder %v1427, %v1478
  %vm1524 = vcmp.ge.f32.partialorder %v1428, %v1480
  %vm1525 = vcmp.ge.f32.partialorder %v1429, %v1482
  %vm1526 = vcmp.ge.f32.partialorder %v1430, %v1484
  %vm1527 = vcmp.ge.f32.partialorder %v1431, %v1486
  %vm1528 = vcmp.ge.f32.partialorder %v1432, %v1488
  %vm1529 = vcmp.ge.f32.partialorder %v1433, %v1490
  %vm1530 = vcmp.ge.f32.partialorder %v1434, %v1492
  %vm1531 = vcmp.ge.f32.partialorder %v1435, %v1494
  %vm1532 = vcmp.ge.f32.partialorder %v1436, %v1496
  %vm1533 = vcmp.ge.f32.partialorder %v1437, %v1498
  %vm1534 = vcmp.ge.f32.partialorder %v1438, %v1500
  %vm1535 = vcmp.ge.f32.partialorder %v1439, %v1502
  %vm1536 = vcmp.ge.f32.partialorder %v1440, %v1504
  %v1537 = vsel %vm1505, -inf, %v1409
  %v1538 = vsel %vm1506, -inf, %v1410
  %v1539 = vsel %vm1507, -inf, %v1411
  %v1540 = vsel %vm1508, -inf, %v1412
  %v1541 = vsel %vm1509, -inf, %v1413
  %v1542 = vsel %vm1510, -inf, %v1414
  %v1543 = vsel %vm1511, -inf, %v1415
  %v1544 = vsel %vm1512, -inf, %v1416
  %v1545 = vsel %vm1513, -inf, %v1417
  %v1546 = vsel %vm1514, -inf, %v1418
  %v1547 = vsel %vm1515, -inf, %v1419
  %v1548 = vsel %vm1516, -inf, %v1420
  %v1549 = vsel %vm1517, -inf, %v1421
  %v1550 = vsel %vm1518, -inf, %v1422
  %v1551 = vsel %vm1519, -inf, %v1423
  %v1552 = vsel %vm1520, -inf, %v1424
  %v1553 = vsel %vm1521, -inf, %v1425
  %v1554 = vsel %vm1522, -inf, %v1426
  %v1555 = vsel %vm1523, -inf, %v1427
  %v1556 = vsel %vm1524, -inf, %v1428
  %v1557 = vsel %vm1525, -inf, %v1429
  %v1558 = vsel %vm1526, -inf, %v1430
  %v1559 = vsel %vm1527, -inf, %v1431
  %v1560 = vsel %vm1528, -inf, %v1432
  %v1561 = vsel %vm1529, -inf, %v1433
  %v1562 = vsel %vm1530, -inf, %v1434
  %v1563 = vsel %vm1531, -inf, %v1435
  %v1564 = vsel %vm1532, -inf, %v1436
  %v1565 = vsel %vm1533, -inf, %v1437
  %v1566 = vsel %vm1534, -inf, %v1438
  %v1567 = vsel %vm1535, -inf, %v1439
  %v1568 = vsel %vm1536, -inf, %v1440
  %1569 = vmax.xlane.f32.xlu0 %v1537
  %v1570 = vpop.xlane.xlu0 %1569
  %1571 = vmax.xlane.f32.xlu0 %v1538
  %v1572 = vpop.xlane.xlu0 %1571
  %1573 = vmax.xlane.f32.xlu0 %v1539
  %v1574 = vpop.xlane.xlu0 %1573
  %1575 = vmax.xlane.f32.xlu0 %v1540
  %v1576 = vpop.xlane.xlu0 %1575
  %1577 = vmax.xlane.f32.xlu0 %v1541
  %v1578 = vpop.xlane.xlu0 %1577
  %1579 = vmax.xlane.f32.xlu0 %v1542
  %v1580 = vpop.xlane.xlu0 %1579
  %1581 = vmax.xlane.f32.xlu0 %v1543
  %v1582 = vpop.xlane.xlu0 %1581
  %1583 = vmax.xlane.f32.xlu0 %v1544
  %v1584 = vpop.xlane.xlu0 %1583
  %1585 = vmax.xlane.f32.xlu0 %v1545
  %v1586 = vpop.xlane.xlu0 %1585
  %1587 = vmax.xlane.f32.xlu0 %v1546
  %v1588 = vpop.xlane.xlu0 %1587
  %1589 = vmax.xlane.f32.xlu0 %v1547
  %v1590 = vpop.xlane.xlu0 %1589
  %1591 = vmax.xlane.f32.xlu0 %v1548
  %v1592 = vpop.xlane.xlu0 %1591
  %1593 = vmax.xlane.f32.xlu0 %v1549
  %v1594 = vpop.xlane.xlu0 %1593
  %1595 = vmax.xlane.f32.xlu0 %v1550
  %v1596 = vpop.xlane.xlu0 %1595
  %1597 = vmax.xlane.f32.xlu0 %v1551
  %v1598 = vpop.xlane.xlu0 %1597
  %1599 = vmax.xlane.f32.xlu0 %v1552
  %v1600 = vpop.xlane.xlu0 %1599
  %1601 = vmax.xlane.f32.xlu0 %v1553
  %v1602 = vpop.xlane.xlu0 %1601
  %1603 = vmax.xlane.f32.xlu0 %v1554
  %v1604 = vpop.xlane.xlu0 %1603
  %1605 = vmax.xlane.f32.xlu0 %v1555
  %v1606 = vpop.xlane.xlu0 %1605
  %1607 = vmax.xlane.f32.xlu0 %v1556
  %v1608 = vpop.xlane.xlu0 %1607
  %1609 = vmax.xlane.f32.xlu0 %v1557
  %v1610 = vpop.xlane.xlu0 %1609
  %1611 = vmax.xlane.f32.xlu0 %v1558
  %v1612 = vpop.xlane.xlu0 %1611
  %1613 = vmax.xlane.f32.xlu0 %v1559
  %v1614 = vpop.xlane.xlu0 %1613
  %1615 = vmax.xlane.f32.xlu0 %v1560
  %v1616 = vpop.xlane.xlu0 %1615
  %1617 = vmax.xlane.f32.xlu0 %v1561
  %v1618 = vpop.xlane.xlu0 %1617
  %1619 = vmax.xlane.f32.xlu0 %v1562
  %v1620 = vpop.xlane.xlu0 %1619
  %1621 = vmax.xlane.f32.xlu0 %v1563
  %v1622 = vpop.xlane.xlu0 %1621
  %1623 = vmax.xlane.f32.xlu0 %v1564
  %v1624 = vpop.xlane.xlu0 %1623
  %1625 = vmax.xlane.f32.xlu0 %v1565
  %v1626 = vpop.xlane.xlu0 %1625
  %1627 = vmax.xlane.f32.xlu0 %v1566
  %v1628 = vpop.xlane.xlu0 %1627
  %1629 = vmax.xlane.f32.xlu0 %v1567
  %v1630 = vpop.xlane.xlu0 %1629
  %1631 = vmax.xlane.f32.xlu0 %v1568
  %v1632 = vpop.xlane.xlu0 %1631
  %vm1633 = vcmp.ge.f32.partialorder %v259, %v1570
  %vm1634 = vcmp.ge.f32.partialorder %v264, %v1572
  %vm1635 = vcmp.ge.f32.partialorder %v269, %v1574
  %vm1636 = vcmp.ge.f32.partialorder %v274, %v1576
  %vm1637 = vcmp.ge.f32.partialorder %v279, %v1578
  %vm1638 = vcmp.ge.f32.partialorder %v284, %v1580
  %vm1639 = vcmp.ge.f32.partialorder %v289, %v1582
  %vm1640 = vcmp.ge.f32.partialorder %v294, %v1584
  %vm1641 = vcmp.ge.f32.partialorder %v299, %v1586
  %vm1642 = vcmp.ge.f32.partialorder %v304, %v1588
  %vm1643 = vcmp.ge.f32.partialorder %v309, %v1590
  %vm1644 = vcmp.ge.f32.partialorder %v314, %v1592
  %vm1645 = vcmp.ge.f32.partialorder %v319, %v1594
  %vm1646 = vcmp.ge.f32.partialorder %v324, %v1596
  %vm1647 = vcmp.ge.f32.partialorder %v329, %v1598
  %vm1648 = vcmp.ge.f32.partialorder %v334, %v1600
  %vm1649 = vcmp.ge.f32.partialorder %v339, %v1602
  %vm1650 = vcmp.ge.f32.partialorder %v344, %v1604
  %vm1651 = vcmp.ge.f32.partialorder %v349, %v1606
  %vm1652 = vcmp.ge.f32.partialorder %v354, %v1608
  %vm1653 = vcmp.ge.f32.partialorder %v359, %v1610
  %vm1654 = vcmp.ge.f32.partialorder %v364, %v1612
  %vm1655 = vcmp.ge.f32.partialorder %v369, %v1614
  %vm1656 = vcmp.ge.f32.partialorder %v374, %v1616
  %vm1657 = vcmp.ge.f32.partialorder %v379, %v1618
  %vm1658 = vcmp.ge.f32.partialorder %v384, %v1620
  %vm1659 = vcmp.ge.f32.partialorder %v389, %v1622
  %vm1660 = vcmp.ge.f32.partialorder %v394, %v1624
  %vm1661 = vcmp.ge.f32.partialorder %v399, %v1626
  %vm1662 = vcmp.ge.f32.partialorder %v404, %v1628
  %vm1663 = vcmp.ge.f32.partialorder %v409, %v1630
  %vm1664 = vcmp.ge.f32.partialorder %v414, %v1632
  %v1665 = vsub.f32 %v259, %v418
  %v1666 = vsub.f32 %v264, %v420
  %v1667 = vsub.f32 %v269, %v422
  %v1668 = vsub.f32 %v274, %v424
  %v1669 = vsub.f32 %v279, %v426
  %v1670 = vsub.f32 %v284, %v428
  %v1671 = vsub.f32 %v289, %v430
  %v1672 = vsub.f32 %v294, %v432
  %v1673 = vsub.f32 %v299, %v434
  %v1674 = vsub.f32 %v304, %v436
  %v1675 = vsub.f32 %v309, %v438
  %v1676 = vsub.f32 %v314, %v440
  %v1677 = vsub.f32 %v319, %v442
  %v1678 = vsub.f32 %v324, %v444
  %v1679 = vsub.f32 %v329, %v446
  %v1680 = vsub.f32 %v334, %v448
  %v1681 = vsub.f32 %v339, %v450
  %v1682 = vsub.f32 %v344, %v452
  %v1683 = vsub.f32 %v349, %v454
  %v1684 = vsub.f32 %v354, %v456
  %v1685 = vsub.f32 %v359, %v458
  %v1686 = vsub.f32 %v364, %v460
  %v1687 = vsub.f32 %v369, %v462
  %v1688 = vsub.f32 %v374, %v464
  %v1689 = vsub.f32 %v379, %v466
  %v1690 = vsub.f32 %v384, %v468
  %v1691 = vsub.f32 %v389, %v470
  %v1692 = vsub.f32 %v394, %v472
  %v1693 = vsub.f32 %v399, %v474
  %v1694 = vsub.f32 %v404, %v476
  %v1695 = vsub.f32 %v409, %v478
  %v1696 = vsub.f32 %v414, %v480
  %v1697 = vmul.f32 %v1665, 1.442695
  %v1698 = vpow.pop %v1697
  %v1699 = vmul.f32 %v1666, 1.442695
  %v1700 = vpow.pop %v1699
  %v1701 = vmul.f32 %v1667, 1.442695
  %v1702 = vpow.pop %v1701
  %v1703 = vmul.f32 %v1668, 1.442695
  %v1704 = vpow.pop %v1703
  %v1705 = vmul.f32 %v1669, 1.442695
  %v1706 = vpow.pop %v1705
  %v1707 = vmul.f32 %v1670, 1.442695
  %v1708 = vpow.pop %v1707
  %v1709 = vmul.f32 %v1671, 1.442695
  %v1710 = vpow.pop %v1709
  %v1711 = vmul.f32 %v1672, 1.442695
  %v1712 = vpow.pop %v1711
  %v1713 = vmul.f32 %v1673, 1.442695
  %v1714 = vpow.pop %v1713
  %v1715 = vmul.f32 %v1674, 1.442695
  %v1716 = vpow.pop %v1715
  %v1717 = vmul.f32 %v1675, 1.442695
  %v1718 = vpow.pop %v1717
  %v1719 = vmul.f32 %v1676, 1.442695
  %v1720 = vpow.pop %v1719
  %v1721 = vmul.f32 %v1677, 1.442695
  %v1722 = vpow.pop %v1721
  %v1723 = vmul.f32 %v1678, 1.442695
  %v1724 = vpow.pop %v1723
  %v1725 = vmul.f32 %v1679, 1.442695
  %v1726 = vpow.pop %v1725
  %v1727 = vmul.f32 %v1680, 1.442695
  %v1728 = vpow.pop %v1727
  %v1729 = vmul.f32 %v1681, 1.442695
  %v1730 = vpow.pop %v1729
  %v1731 = vmul.f32 %v1682, 1.442695
  %v1732 = vpow.pop %v1731
  %v1733 = vmul.f32 %v1683, 1.442695
  %v1734 = vpow.pop %v1733
  %v1735 = vmul.f32 %v1684, 1.442695
  %v1736 = vpow.pop %v1735
  %v1737 = vmul.f32 %v1685, 1.442695
  %v1738 = vpow.pop %v1737
  %v1739 = vmul.f32 %v1686, 1.442695
  %v1740 = vpow.pop %v1739
  %v1741 = vmul.f32 %v1687, 1.442695
  %v1742 = vpow.pop %v1741
  %v1743 = vmul.f32 %v1688, 1.442695
  %v1744 = vpow.pop %v1743
  %v1745 = vmul.f32 %v1689, 1.442695
  %v1746 = vpow.pop %v1745
  %v1747 = vmul.f32 %v1690, 1.442695
  %v1748 = vpow.pop %v1747
  %v1749 = vmul.f32 %v1691, 1.442695
  %v1750 = vpow.pop %v1749
  %v1751 = vmul.f32 %v1692, 1.442695
  %v1752 = vpow.pop %v1751
  %v1753 = vmul.f32 %v1693, 1.442695
  %v1754 = vpow.pop %v1753
  %v1755 = vmul.f32 %v1694, 1.442695
  %v1756 = vpow.pop %v1755
  %v1757 = vmul.f32 %v1695, 1.442695
  %v1758 = vpow.pop %v1757
  %v1759 = vmul.f32 %v1696, 1.442695
  %v1760 = vpow.pop %v1759
  %1761 = vmatprep.subr.mxu0 0.0
  %1762 = vmatpush1.msra.mxu0 %v40
  %1763 = vmatprep.subr.mxu0 0.0
  %1764 = vmatpush1.msra.mxu0 %v41
  %1765 = vmatprep.subr.mxu0 0.0
  %1766 = vmatpush1.msra.mxu0 %v42
  %1767 = vmatprep.subr.mxu0 0.0
  %1768 = vmatpush1.msra.mxu0 %v43
  %1769 = vmatprep.subr.mxu0 0.0
  %1770 = vmatpush1.msra.mxu0 %v44
  %1771 = vmatprep.subr.mxu0 0.0
  %1772 = vmatpush1.msra.mxu0 %v45
  %1773 = vmatprep.subr.mxu0 0.0
  %1774 = vmatpush1.msra.mxu0 %v46
  %1775 = vmatprep.subr.mxu0 0.0
  %1776 = vmatpush1.msra.mxu0 %v47
  %1777 = vmatprep.subr.mxu0 0.0
  %1778 = vmatpush1.msra.mxu0 %v48
  %1779 = vmatprep.subr.mxu0 0.0
  %1780 = vmatpush1.msra.mxu0 %v49
  %1781 = vmatprep.subr.mxu0 0.0
  %1782 = vmatpush1.msra.mxu0 %v50
  %1783 = vmatprep.subr.mxu0 0.0
  %1784 = vmatpush1.msra.mxu0 %v51
  %1785 = vmatprep.subr.mxu0 0.0
  %1786 = vmatpush1.msra.mxu0 %v52
  %1787 = vmatprep.subr.mxu0 0.0
  %1788 = vmatpush1.msra.mxu0 %v53
  %1789 = vmatprep.subr.mxu0 0.0
  %1790 = vmatpush1.msra.mxu0 %v54
  %1791 = vmatprep.subr.mxu0 0.0
  %1792 = vmatpush1.msra.mxu0 %v55
  %1793 = vmatprep.subr.mxu0 0.0
  %1794 = vmatpush1.msra.mxu0 0.0
  %1795 = vmatprep.subr.mxu0 0.0
  %1796 = vmatpush1.msra.mxu0 0.0
  %1797 = vmatprep.subr.mxu0 0.0
  %1798 = vmatpush1.msra.mxu0 0.0
  %1799 = vmatprep.subr.mxu0 0.0
  %1800 = vmatpush1.msra.mxu0 0.0
  %1801 = vmatprep.subr.mxu0 0.0
  %1802 = vmatpush1.msra.mxu0 0.0
  %1803 = vmatprep.subr.mxu0 0.0
  %1804 = vmatpush1.msra.mxu0 0.0
  %1805 = vmatprep.subr.mxu0 0.0
  %1806 = vmatpush1.msra.mxu0 0.0
  %1807 = vmatprep.subr.mxu0 0.0
  %1808 = vmatpush1.msra.mxu0 0.0
  %1809 = vmatprep.subr.mxu0 0.0
  %1810 = vmatpush1.msra.mxu0 0.0
  %1811 = vmatprep.subr.mxu0 0.0
  %1812 = vmatpush1.msra.mxu0 0.0
  %1813 = vmatprep.subr.mxu0 0.0
  %1814 = vmatpush1.msra.mxu0 0.0
  %1815 = vmatprep.subr.mxu0 0.0
  %1816 = vmatpush1.msra.mxu0 0.0
  %1817 = vmatprep.subr.mxu0 0.0
  %1818 = vmatpush1.msra.mxu0 0.0
  %1819 = vmatprep.subr.mxu0 0.0
  %1820 = vmatpush1.msra.mxu0 0.0
  %1821 = vmatprep.subr.mxu0 0.0
  %1822 = vmatpush1.msra.mxu0 0.0
  %1823 = vmatprep.subr.mxu0 0.0
  %1824 = vmatpush1.msra.mxu0 0.0
  %1825 = vmatprep.mubr.f32.mxu0 0.0
  %1826 = vmatmul.mubr.f32.gmra.mrb[0].mxu0 %v1698
  %v1827 = vpop.f32.mrb[0].mxu0
  %v1828 = vadd.f32 0.0, %v1827
  %v1829 = vpop.f32.mrb[0].mxu0
  %1830 = vmatprep.mubr.f32.mxu0 0.0
  %1831 = vmatmul.mubr.f32.gmra.mrb[0].mxu0 %v1700
  %v1832 = vpop.f32.mrb[0].mxu0
  %v1833 = vadd.f32 0.0, %v1832
  %v1834 = vpop.f32.mrb[0].mxu0
  %1835 = vmatprep.mubr.f32.mxu0 0.0
  %1836 = vmatmul.mubr.f32.gmra.mrb[0].mxu0 %v1702
  %v1837 = vpop.f32.mrb[0].mxu0
  %v1838 = vadd.f32 0.0, %v1837
  %v1839 = vpop.f32.mrb[0].mxu0
  %1840 = vmatprep.mubr.f32.mxu0 0.0
  %1841 = vmatmul.mubr.f32.gmra.mrb[0].mxu0 %v1704
  %v1842 = vpop.f32.mrb[0].mxu0
  %v1843 = vadd.f32 0.0, %v1842
  %v1844 = vpop.f32.mrb[0].mxu0
  %1845 = vmatprep.mubr.f32.mxu0 0.0
  %1846 = vmatmul.mubr.f32.gmra.mrb[0].mxu0 %v1706
  %v1847 = vpop.f32.mrb[0].mxu0
  %v1848 = vadd.f32 0.0, %v1847
  %v1849 = vpop.f32.mrb[0].mxu0
  %1850 = vmatprep.mubr.f32.mxu0 0.0
  %1851 = vmatmul.mubr.f32.gmra.mrb[0].mxu0 %v1708
  %v1852 = vpop.f32.mrb[0].mxu0
  %v1853 = vadd.f32 0.0, %v1852
  %v1854 = vpop.f32.mrb[0].mxu0
  %1855 = vmatprep.mubr.f32.mxu0 0.0
  %1856 = vmatmul.mubr.f32.gmra.mrb[0].mxu0 %v1710
  %v1857 = vpop.f32.mrb[0].mxu0
  %v1858 = vadd.f32 0.0, %v1857
  %v1859 = vpop.f32.mrb[0].mxu0
  %1860 = vmatprep.mubr.f32.mxu0 0.0
  %1861 = vmatmul.mubr.f32.gmra.mrb[0].mxu0 %v1712
  %v1862 = vpop.f32.mrb[0].mxu0
  %v1863 = vadd.f32 0.0, %v1862
  %v1864 = vpop.f32.mrb[0].mxu0
  %1865 = vmatprep.mubr.f32.mxu0 0.0
  %1866 = vmatmul.mubr.f32.gmra.mrb[0].mxu0 %v1714
  %v1867 = vpop.f32.mrb[0].mxu0
  %v1868 = vadd.f32 0.0, %v1867
  %v1869 = vpop.f32.mrb[0].mxu0
  %1870 = vmatprep.mubr.f32.mxu0 0.0
  %1871 = vmatmul.mubr.f32.gmra.mrb[0].mxu0 %v1716
  %v1872 = vpop.f32.mrb[0].mxu0
  %v1873 = vadd.f32 0.0, %v1872
  %v1874 = vpop.f32.mrb[0].mxu0
  %1875 = vmatprep.mubr.f32.mxu0 0.0
  %1876 = vmatmul.mubr.f32.gmra.mrb[0].mxu0 %v1718
  %v1877 = vpop.f32.mrb[0].mxu0
  %v1878 = vadd.f32 0.0, %v1877
  %v1879 = vpop.f32.mrb[0].mxu0
  %1880 = vmatprep.mubr.f32.mxu0 0.0
  %1881 = vmatmul.mubr.f32.gmra.mrb[0].mxu0 %v1720
  %v1882 = vpop.f32.mrb[0].mxu0
  %v1883 = vadd.f32 0.0, %v1882
  %v1884 = vpop.f32.mrb[0].mxu0
  %1885 = vmatprep.mubr.f32.mxu0 0.0
  %1886 = vmatmul.mubr.f32.gmra.mrb[0].mxu0 %v1722
  %v1887 = vpop.f32.mrb[0].mxu0
  %v1888 = vadd.f32 0.0, %v1887
  %v1889 = vpop.f32.mrb[0].mxu0
  %1890 = vmatprep.mubr.f32.mxu0 0.0
  %1891 = vmatmul.mubr.f32.gmra.mrb[0].mxu0 %v1724
  %v1892 = vpop.f32.mrb[0].mxu0
  %v1893 = vadd.f32 0.0, %v1892
  %v1894 = vpop.f32.mrb[0].mxu0
  %1895 = vmatprep.mubr.f32.mxu0 0.0
  %1896 = vmatmul.mubr.f32.gmra.mrb[0].mxu0 %v1726
  %v1897 = vpop.f32.mrb[0].mxu0
  %v1898 = vadd.f32 0.0, %v1897
  %v1899 = vpop.f32.mrb[0].mxu0
  %1900 = vmatprep.mubr.f32.mxu0 0.0
  %1901 = vmatmul.mubr.f32.gmra.mrb[0].mxu0 %v1728
  %v1902 = vpop.f32.mrb[0].mxu0
  %v1903 = vadd.f32 0.0, %v1902
  %v1904 = vpop.f32.mrb[0].mxu0
  %1905 = vmatprep.mubr.f32.mxu0 0.0
  %1906 = vmatmul.mubr.f32.gmra.mrb[0].mxu0 %v1730
  %v1907 = vpop.f32.mrb[0].mxu0
  %v1908 = vadd.f32 0.0, %v1907
  %v1909 = vpop.f32.mrb[0].mxu0
  %1910 = vmatprep.mubr.f32.mxu0 0.0
  %1911 = vmatmul.mubr.f32.gmra.mrb[0].mxu0 %v1732
  %v1912 = vpop.f32.mrb[0].mxu0
  %v1913 = vadd.f32 0.0, %v1912
  %v1914 = vpop.f32.mrb[0].mxu0
  %1915 = vmatprep.mubr.f32.mxu0 0.0
  %1916 = vmatmul.mubr.f32.gmra.mrb[0].mxu0 %v1734
  %v1917 = vpop.f32.mrb[0].mxu0
  %v1918 = vadd.f32 0.0, %v1917
  %v1919 = vpop.f32.mrb[0].mxu0
  %1920 = vmatprep.mubr.f32.mxu0 0.0
  %1921 = vmatmul.mubr.f32.gmra.mrb[0].mxu0 %v1736
  %v1922 = vpop.f32.mrb[0].mxu0
  %v1923 = vadd.f32 0.0, %v1922
  %v1924 = vpop.f32.mrb[0].mxu0
  %1925 = vmatprep.mubr.f32.mxu0 0.0
  %1926 = vmatmul.mubr.f32.gmra.mrb[0].mxu0 %v1738
  %v1927 = vpop.f32.mrb[0].mxu0
  %v1928 = vadd.f32 0.0, %v1927
  %v1929 = vpop.f32.mrb[0].mxu0
  %1930 = vmatprep.mubr.f32.mxu0 0.0
  %1931 = vmatmul.mubr.f32.gmra.mrb[0].mxu0 %v1740
  %v1932 = vpop.f32.mrb[0].mxu0
  %v1933 = vadd.f32 0.0, %v1932
  %v1934 = vpop.f32.mrb[0].mxu0
  %1935 = vmatprep.mubr.f32.mxu0 0.0
  %1936 = vmatmul.mubr.f32.gmra.mrb[0].mxu0 %v1742
  %v1937 = vpop.f32.mrb[0].mxu0
  %v1938 = vadd.f32 0.0, %v1937
  %v1939 = vpop.f32.mrb[0].mxu0
  %1940 = vmatprep.mubr.f32.mxu0 0.0
  %1941 = vmatmul.mubr.f32.gmra.mrb[0].mxu0 %v1744
  %v1942 = vpop.f32.mrb[0].mxu0
  %v1943 = vadd.f32 0.0, %v1942
  %v1944 = vpop.f32.mrb[0].mxu0
  %1945 = vmatprep.mubr.f32.mxu0 0.0
  %1946 = vmatmul.mubr.f32.gmra.mrb[0].mxu0 %v1746
  %v1947 = vpop.f32.mrb[0].mxu0
  %v1948 = vadd.f32 0.0, %v1947
  %v1949 = vpop.f32.mrb[0].mxu0
  %1950 = vmatprep.mubr.f32.mxu0 0.0
  %1951 = vmatmul.mubr.f32.gmra.mrb[0].mxu0 %v1748
  %v1952 = vpop.f32.mrb[0].mxu0
  %v1953 = vadd.f32 0.0, %v1952
  %v1954 = vpop.f32.mrb[0].mxu0
  %1955 = vmatprep.mubr.f32.mxu0 0.0
  %1956 = vmatmul.mubr.f32.gmra.mrb[0].mxu0 %v1750
  %v1957 = vpop.f32.mrb[0].mxu0
  %v1958 = vadd.f32 0.0, %v1957
  %v1959 = vpop.f32.mrb[0].mxu0
  %1960 = vmatprep.mubr.f32.mxu0 0.0
  %1961 = vmatmul.mubr.f32.gmra.mrb[0].mxu0 %v1752
  %v1962 = vpop.f32.mrb[0].mxu0
  %v1963 = vadd.f32 0.0, %v1962
  %v1964 = vpop.f32.mrb[0].mxu0
  %1965 = vmatprep.mubr.f32.mxu0 0.0
  %1966 = vmatmul.mubr.f32.gmra.mrb[0].mxu0 %v1754
  %v1967 = vpop.f32.mrb[0].mxu0
  %v1968 = vadd.f32 0.0, %v1967
  %v1969 = vpop.f32.mrb[0].mxu0
  %1970 = vmatprep.mubr.f32.mxu0 0.0
  %1971 = vmatmul.mubr.f32.gmra.mrb[0].mxu0 %v1756
  %v1972 = vpop.f32.mrb[0].mxu0
  %v1973 = vadd.f32 0.0, %v1972
  %v1974 = vpop.f32.mrb[0].mxu0
  %1975 = vmatprep.mubr.f32.mxu0 0.0
  %1976 = vmatmul.mubr.f32.gmra.mrb[0].mxu0 %v1758
  %v1977 = vpop.f32.mrb[0].mxu0
  %v1978 = vadd.f32 0.0, %v1977
  %v1979 = vpop.f32.mrb[0].mxu0
  %1980 = vmatprep.mubr.f32.mxu0 0.0
  %1981 = vmatmul.mubr.f32.gmra.mrb[0].mxu0 %v1760
  %v1982 = vpop.f32.mrb[0].mxu0
  %v1983 = vadd.f32 0.0, %v1982
  %v1984 = vpop.f32.mrb[0].mxu0
  %1985 = vdwg.mxu0
  %v1986 = vrcp.pop %v1828
  %v1987 = vrcp.pop %v1833
  %v1988 = vrcp.pop %v1838
  %v1989 = vrcp.pop %v1843
  %v1990 = vrcp.pop %v1848
  %v1991 = vrcp.pop %v1853
  %v1992 = vrcp.pop %v1858
  %v1993 = vrcp.pop %v1863
  %v1994 = vrcp.pop %v1868
  %v1995 = vrcp.pop %v1873
  %v1996 = vrcp.pop %v1878
  %v1997 = vrcp.pop %v1883
  %v1998 = vrcp.pop %v1888
  %v1999 = vrcp.pop %v1893
  %v2000 = vrcp.pop %v1898
  %v2001 = vrcp.pop %v1903
  %v2002 = vrcp.pop %v1908
  %v2003 = vrcp.pop %v1913
  %v2004 = vrcp.pop %v1918
  %v2005 = vrcp.pop %v1923
  %v2006 = vrcp.pop %v1928
  %v2007 = vrcp.pop %v1933
  %v2008 = vrcp.pop %v1938
  %v2009 = vrcp.pop %v1943
  %v2010 = vrcp.pop %v1948
  %v2011 = vrcp.pop %v1953
  %v2012 = vrcp.pop %v1958
  %v2013 = vrcp.pop %v1963
  %v2014 = vrcp.pop %v1968
  %v2015 = vrcp.pop %v1973
  %v2016 = vrcp.pop %v1978
  %v2017 = vrcp.pop %v1983
  %v2018 = vmul.f32 %v1828, %v1986
  %v2019 = vmul.f32 %v1833, %v1987
  %v2020 = vmul.f32 %v1838, %v1988
  %v2021 = vmul.f32 %v1843, %v1989
  %v2022 = vmul.f32 %v1848, %v1990
  %v2023 = vmul.f32 %v1853, %v1991
  %v2024 = vmul.f32 %v1858, %v1992
  %v2025 = vmul.f32 %v1863, %v1993
  %v2026 = vmul.f32 %v1868, %v1994
  %v2027 = vmul.f32 %v1873, %v1995
  %v2028 = vmul.f32 %v1878, %v1996
  %v2029 = vmul.f32 %v1883, %v1997
  %v2030 = vmul.f32 %v1888, %v1998
  %v2031 = vmul.f32 %v1893, %v1999
  %v2032 = vmul.f32 %v1898, %v2000
  %v2033 = vmul.f32 %v1903, %v2001
  %v2034 = vmul.f32 %v1908, %v2002
  %v2035 = vmul.f32 %v1913, %v2003
  %v2036 = vmul.f32 %v1918, %v2004
  %v2037 = vmul.f32 %v1923, %v2005
  %v2038 = vmul.f32 %v1928, %v2006
  %v2039 = vmul.f32 %v1933, %v2007
  %v2040 = vmul.f32 %v1938, %v2008
  %v2041 = vmul.f32 %v1943, %v2009
  %v2042 = vmul.f32 %v1948, %v2010
  %v2043 = vmul.f32 %v1953, %v2011
  %v2044 = vmul.f32 %v1958, %v2012
  %v2045 = vmul.f32 %v1963, %v2013
  %v2046 = vmul.f32 %v1968, %v2014
  %v2047 = vmul.f32 %v1973, %v2015
  %v2048 = vmul.f32 %v1978, %v2016
  %v2049 = vmul.f32 %v1983, %v2017
  %v2050 = vsub.f32 2.0, %v2018
  %v2051 = vsub.f32 2.0, %v2019
  %v2052 = vsub.f32 2.0, %v2020
  %v2053 = vsub.f32 2.0, %v2021
  %v2054 = vsub.f32 2.0, %v2022
  %v2055 = vsub.f32 2.0, %v2023
  %v2056 = vsub.f32 2.0, %v2024
  %v2057 = vsub.f32 2.0, %v2025
  %v2058 = vsub.f32 2.0, %v2026
  %v2059 = vsub.f32 2.0, %v2027
  %v2060 = vsub.f32 2.0, %v2028
  %v2061 = vsub.f32 2.0, %v2029
  %v2062 = vsub.f32 2.0, %v2030
  %v2063 = vsub.f32 2.0, %v2031
  %v2064 = vsub.f32 2.0, %v2032
  %v2065 = vsub.f32 2.0, %v2033
  %v2066 = vsub.f32 2.0, %v2034
  %v2067 = vsub.f32 2.0, %v2035
  %v2068 = vsub.f32 2.0, %v2036
  %v2069 = vsub.f32 2.0, %v2037
  %v2070 = vsub.f32 2.0, %v2038
  %v2071 = vsub.f32 2.0, %v2039
  %v2072 = vsub.f32 2.0, %v2040
  %v2073 = vsub.f32 2.0, %v2041
  %v2074 = vsub.f32 2.0, %v2042
  %v2075 = vsub.f32 2.0, %v2043
  %v2076 = vsub.f32 2.0, %v2044
  %v2077 = vsub.f32 2.0, %v2045
  %v2078 = vsub.f32 2.0, %v2046
  %v2079 = vsub.f32 2.0, %v2047
  %v2080 = vsub.f32 2.0, %v2048
  %v2081 = vsub.f32 2.0, %v2049
  %v2082 = vmul.f32 %v1986, %v2050
  %v2083 = vmul.f32 %v1987, %v2051
  %v2084 = vmul.f32 %v1988, %v2052
  %v2085 = vmul.f32 %v1989, %v2053
  %v2086 = vmul.f32 %v1990, %v2054
  %v2087 = vmul.f32 %v1991, %v2055
  %v2088 = vmul.f32 %v1992, %v2056
  %v2089 = vmul.f32 %v1993, %v2057
  %v2090 = vmul.f32 %v1994, %v2058
  %v2091 = vmul.f32 %v1995, %v2059
  %v2092 = vmul.f32 %v1996, %v2060
  %v2093 = vmul.f32 %v1997, %v2061
  %v2094 = vmul.f32 %v1998, %v2062
  %v2095 = vmul.f32 %v1999, %v2063
  %v2096 = vmul.f32 %v2000, %v2064
  %v2097 = vmul.f32 %v2001, %v2065
  %v2098 = vmul.f32 %v2002, %v2066
  %v2099 = vmul.f32 %v2003, %v2067
  %v2100 = vmul.f32 %v2004, %v2068
  %v2101 = vmul.f32 %v2005, %v2069
  %v2102 = vmul.f32 %v2006, %v2070
  %v2103 = vmul.f32 %v2007, %v2071
  %v2104 = vmul.f32 %v2008, %v2072
  %v2105 = vmul.f32 %v2009, %v2073
  %v2106 = vmul.f32 %v2010, %v2074
  %v2107 = vmul.f32 %v2011, %v2075
  %v2108 = vmul.f32 %v2012, %v2076
  %v2109 = vmul.f32 %v2013, %v2077
  %v2110 = vmul.f32 %v2014, %v2078
  %v2111 = vmul.f32 %v2015, %v2079
  %v2112 = vmul.f32 %v2016, %v2080
  %v2113 = vmul.f32 %v2017, %v2081
  %v2114 = vsub.f32 %v1698, 1.0
  %v2115 = vsub.f32 %v1700, 1.0
  %v2116 = vsub.f32 %v1702, 1.0
  %v2117 = vsub.f32 %v1704, 1.0
  %v2118 = vsub.f32 %v1706, 1.0
  %v2119 = vsub.f32 %v1708, 1.0
  %v2120 = vsub.f32 %v1710, 1.0
  %v2121 = vsub.f32 %v1712, 1.0
  %v2122 = vsub.f32 %v1714, 1.0
  %v2123 = vsub.f32 %v1716, 1.0
  %v2124 = vsub.f32 %v1718, 1.0
  %v2125 = vsub.f32 %v1720, 1.0
  %v2126 = vsub.f32 %v1722, 1.0
  %v2127 = vsub.f32 %v1724, 1.0
  %v2128 = vsub.f32 %v1726, 1.0
  %v2129 = vsub.f32 %v1728, 1.0
  %v2130 = vsub.f32 %v1730, 1.0
  %v2131 = vsub.f32 %v1732, 1.0
  %v2132 = vsub.f32 %v1734, 1.0
  %v2133 = vsub.f32 %v1736, 1.0
  %v2134 = vsub.f32 %v1738, 1.0
  %v2135 = vsub.f32 %v1740, 1.0
  %v2136 = vsub.f32 %v1742, 1.0
  %v2137 = vsub.f32 %v1744, 1.0
  %v2138 = vsub.f32 %v1746, 1.0
  %v2139 = vsub.f32 %v1748, 1.0
  %v2140 = vsub.f32 %v1750, 1.0
  %v2141 = vsub.f32 %v1752, 1.0
  %v2142 = vsub.f32 %v1754, 1.0
  %v2143 = vsub.f32 %v1756, 1.0
  %v2144 = vsub.f32 %v1758, 1.0
  %v2145 = vsub.f32 %v1760, 1.0
  %2147 = vset.pattern.permute.xlu0 0
  %2148 = vperm.xlu0 %2147, %v2082
  %v2149 = vpop.permute.xlu0 %2148
  %2152 = vset.pattern.permute.xlu0 0
  %2153 = vperm.xlu0 %2152, %v2083
  %v2154 = vpop.permute.xlu0 %2153
  %2157 = vset.pattern.permute.xlu0 0
  %2158 = vperm.xlu0 %2157, %v2084
  %v2159 = vpop.permute.xlu0 %2158
  %2162 = vset.pattern.permute.xlu0 0
  %2163 = vperm.xlu0 %2162, %v2085
  %v2164 = vpop.permute.xlu0 %2163
  %2167 = vset.pattern.permute.xlu0 0
  %2168 = vperm.xlu0 %2167, %v2086
  %v2169 = vpop.permute.xlu0 %2168
  %2172 = vset.pattern.permute.xlu0 0
  %2173 = vperm.xlu0 %2172, %v2087
  %v2174 = vpop.permute.xlu0 %2173
  %2177 = vset.pattern.permute.xlu0 0
  %2178 = vperm.xlu0 %2177, %v2088
  %v2179 = vpop.permute.xlu0 %2178
  %2182 = vset.pattern.permute.xlu0 0
  %2183 = vperm.xlu0 %2182, %v2089
  %v2184 = vpop.permute.xlu0 %2183
  %2187 = vset.pattern.permute.xlu0 0
  %2188 = vperm.xlu0 %2187, %v2090
  %v2189 = vpop.permute.xlu0 %2188
  %2192 = vset.pattern.permute.xlu0 0
  %2193 = vperm.xlu0 %2192, %v2091
  %v2194 = vpop.permute.xlu0 %2193
  %2197 = vset.pattern.permute.xlu0 0
  %2198 = vperm.xlu0 %2197, %v2092
  %v2199 = vpop.permute.xlu0 %2198
  %2202 = vset.pattern.permute.xlu0 0
  %2203 = vperm.xlu0 %2202, %v2093
  %v2204 = vpop.permute.xlu0 %2203
  %2207 = vset.pattern.permute.xlu0 0
  %2208 = vperm.xlu0 %2207, %v2094
  %v2209 = vpop.permute.xlu0 %2208
  %2212 = vset.pattern.permute.xlu0 0
  %2213 = vperm.xlu0 %2212, %v2095
  %v2214 = vpop.permute.xlu0 %2213
  %2217 = vset.pattern.permute.xlu0 0
  %2218 = vperm.xlu0 %2217, %v2096
  %v2219 = vpop.permute.xlu0 %2218
  %2222 = vset.pattern.permute.xlu0 0
  %2223 = vperm.xlu0 %2222, %v2097
  %v2224 = vpop.permute.xlu0 %2223
  %2227 = vset.pattern.permute.xlu0 0
  %2228 = vperm.xlu0 %2227, %v2098
  %v2229 = vpop.permute.xlu0 %2228
  %2232 = vset.pattern.permute.xlu0 0
  %2233 = vperm.xlu0 %2232, %v2099
  %v2234 = vpop.permute.xlu0 %2233
  %2237 = vset.pattern.permute.xlu0 0
  %2238 = vperm.xlu0 %2237, %v2100
  %v2239 = vpop.permute.xlu0 %2238
  %2242 = vset.pattern.permute.xlu0 0
  %2243 = vperm.xlu0 %2242, %v2101
  %v2244 = vpop.permute.xlu0 %2243
  %2247 = vset.pattern.permute.xlu0 0
  %2248 = vperm.xlu0 %2247, %v2102
  %v2249 = vpop.permute.xlu0 %2248
  %2252 = vset.pattern.permute.xlu0 0
  %2253 = vperm.xlu0 %2252, %v2103
  %v2254 = vpop.permute.xlu0 %2253
  %2257 = vset.pattern.permute.xlu0 0
  %2258 = vperm.xlu0 %2257, %v2104
  %v2259 = vpop.permute.xlu0 %2258
  %2262 = vset.pattern.permute.xlu0 0
  %2263 = vperm.xlu0 %2262, %v2105
  %v2264 = vpop.permute.xlu0 %2263
  %2267 = vset.pattern.permute.xlu0 0
  %2268 = vperm.xlu0 %2267, %v2106
  %v2269 = vpop.permute.xlu0 %2268
  %2272 = vset.pattern.permute.xlu0 0
  %2273 = vperm.xlu0 %2272, %v2107
  %v2274 = vpop.permute.xlu0 %2273
  %2277 = vset.pattern.permute.xlu0 0
  %2278 = vperm.xlu0 %2277, %v2108
  %v2279 = vpop.permute.xlu0 %2278
  %2282 = vset.pattern.permute.xlu0 0
  %2283 = vperm.xlu0 %2282, %v2109
  %v2284 = vpop.permute.xlu0 %2283
  %2287 = vset.pattern.permute.xlu0 0
  %2288 = vperm.xlu0 %2287, %v2110
  %v2289 = vpop.permute.xlu0 %2288
  %2292 = vset.pattern.permute.xlu0 0
  %2293 = vperm.xlu0 %2292, %v2111
  %v2294 = vpop.permute.xlu0 %2293
  %2297 = vset.pattern.permute.xlu0 0
  %2298 = vperm.xlu0 %2297, %v2112
  %v2299 = vpop.permute.xlu0 %2298
  %2302 = vset.pattern.permute.xlu0 0
  %2303 = vperm.xlu0 %2302, %v2113
  %v2304 = vpop.permute.xlu0 %2303
  %v2306 = vmul.f32 %v2114, %v2149
  %v2307 = vmul.f32 %v2115, %v2154
  %v2308 = vmul.f32 %v2116, %v2159
  %v2309 = vmul.f32 %v2117, %v2164
  %v2310 = vmul.f32 %v2118, %v2169
  %v2311 = vmul.f32 %v2119, %v2174
  %v2312 = vmul.f32 %v2120, %v2179
  %v2313 = vmul.f32 %v2121, %v2184
  %v2314 = vmul.f32 %v2122, %v2189
  %v2315 = vmul.f32 %v2123, %v2194
  %v2316 = vmul.f32 %v2124, %v2199
  %v2317 = vmul.f32 %v2125, %v2204
  %v2318 = vmul.f32 %v2126, %v2209
  %v2319 = vmul.f32 %v2127, %v2214
  %v2320 = vmul.f32 %v2128, %v2219
  %v2321 = vmul.f32 %v2129, %v2224
  %v2322 = vmul.f32 %v2130, %v2229
  %v2323 = vmul.f32 %v2131, %v2234
  %v2324 = vmul.f32 %v2132, %v2239
  %v2325 = vmul.f32 %v2133, %v2244
  %v2326 = vmul.f32 %v2134, %v2249
  %v2327 = vmul.f32 %v2135, %v2254
  %v2328 = vmul.f32 %v2136, %v2259
  %v2329 = vmul.f32 %v2137, %v2264
  %v2330 = vmul.f32 %v2138, %v2269
  %v2331 = vmul.f32 %v2139, %v2274
  %v2332 = vmul.f32 %v2140, %v2279
  %v2333 = vmul.f32 %v2141, %v2284
  %v2334 = vmul.f32 %v2142, %v2289
  %v2335 = vmul.f32 %v2143, %v2294
  %v2336 = vmul.f32 %v2144, %v2299
  %v2337 = vmul.f32 %v2145, %v2304
  %v2338 = vmul.f32 %v2306, 1.442695
  %v2339 = vpow.pop %v2338
  %v2340 = vmul.f32 %v2307, 1.442695
  %v2341 = vpow.pop %v2340
  %v2342 = vmul.f32 %v2308, 1.442695
  %v2343 = vpow.pop %v2342
  %v2344 = vmul.f32 %v2309, 1.442695
  %v2345 = vpow.pop %v2344
  %v2346 = vmul.f32 %v2310, 1.442695
  %v2347 = vpow.pop %v2346
  %v2348 = vmul.f32 %v2311, 1.442695
  %v2349 = vpow.pop %v2348
  %v2350 = vmul.f32 %v2312, 1.442695
  %v2351 = vpow.pop %v2350
  %v2352 = vmul.f32 %v2313, 1.442695
  %v2353 = vpow.pop %v2352
  %v2354 = vmul.f32 %v2314, 1.442695
  %v2355 = vpow.pop %v2354
  %v2356 = vmul.f32 %v2315, 1.442695
  %v2357 = vpow.pop %v2356
  %v2358 = vmul.f32 %v2316, 1.442695
  %v2359 = vpow.pop %v2358
  %v2360 = vmul.f32 %v2317, 1.442695
  %v2361 = vpow.pop %v2360
  %v2362 = vmul.f32 %v2318, 1.442695
  %v2363 = vpow.pop %v2362
  %v2364 = vmul.f32 %v2319, 1.442695
  %v2365 = vpow.pop %v2364
  %v2366 = vmul.f32 %v2320, 1.442695
  %v2367 = vpow.pop %v2366
  %v2368 = vmul.f32 %v2321, 1.442695
  %v2369 = vpow.pop %v2368
  %v2370 = vmul.f32 %v2322, 1.442695
  %v2371 = vpow.pop %v2370
  %v2372 = vmul.f32 %v2323, 1.442695
  %v2373 = vpow.pop %v2372
  %v2374 = vmul.f32 %v2324, 1.442695
  %v2375 = vpow.pop %v2374
  %v2376 = vmul.f32 %v2325, 1.442695
  %v2377 = vpow.pop %v2376
  %v2378 = vmul.f32 %v2326, 1.442695
  %v2379 = vpow.pop %v2378
  %v2380 = vmul.f32 %v2327, 1.442695
  %v2381 = vpow.pop %v2380
  %v2382 = vmul.f32 %v2328, 1.442695
  %v2383 = vpow.pop %v2382
  %v2384 = vmul.f32 %v2329, 1.442695
  %v2385 = vpow.pop %v2384
  %v2386 = vmul.f32 %v2330, 1.442695
  %v2387 = vpow.pop %v2386
  %v2388 = vmul.f32 %v2331, 1.442695
  %v2389 = vpow.pop %v2388
  %v2390 = vmul.f32 %v2332, 1.442695
  %v2391 = vpow.pop %v2390
  %v2392 = vmul.f32 %v2333, 1.442695
  %v2393 = vpow.pop %v2392
  %v2394 = vmul.f32 %v2334, 1.442695
  %v2395 = vpow.pop %v2394
  %v2396 = vmul.f32 %v2335, 1.442695
  %v2397 = vpow.pop %v2396
  %v2398 = vmul.f32 %v2336, 1.442695
  %v2399 = vpow.pop %v2398
  %v2400 = vmul.f32 %v2337, 1.442695
  %v2401 = vpow.pop %v2400
  %v2402 = vsel %vm1633, %v2339, 0.0
  %v2403 = vsel %vm1634, %v2341, 0.0
  %v2404 = vsel %vm1635, %v2343, 0.0
  %v2405 = vsel %vm1636, %v2345, 0.0
  %v2406 = vsel %vm1637, %v2347, 0.0
  %v2407 = vsel %vm1638, %v2349, 0.0
  %v2408 = vsel %vm1639, %v2351, 0.0
  %v2409 = vsel %vm1640, %v2353, 0.0
  %v2410 = vsel %vm1641, %v2355, 0.0
  %v2411 = vsel %vm1642, %v2357, 0.0
  %v2412 = vsel %vm1643, %v2359, 0.0
  %v2413 = vsel %vm1644, %v2361, 0.0
  %v2414 = vsel %vm1645, %v2363, 0.0
  %v2415 = vsel %vm1646, %v2365, 0.0
  %v2416 = vsel %vm1647, %v2367, 0.0
  %v2417 = vsel %vm1648, %v2369, 0.0
  %v2418 = vsel %vm1649, %v2371, 0.0
  %v2419 = vsel %vm1650, %v2373, 0.0
  %v2420 = vsel %vm1651, %v2375, 0.0
  %v2421 = vsel %vm1652, %v2377, 0.0
  %v2422 = vsel %vm1653, %v2379, 0.0
  %v2423 = vsel %vm1654, %v2381, 0.0
  %v2424 = vsel %vm1655, %v2383, 0.0
  %v2425 = vsel %vm1656, %v2385, 0.0
  %v2426 = vsel %vm1657, %v2387, 0.0
  %v2427 = vsel %vm1658, %v2389, 0.0
  %v2428 = vsel %vm1659, %v2391, 0.0
  %v2429 = vsel %vm1660, %v2393, 0.0
  %v2430 = vsel %vm1661, %v2395, 0.0
  %v2431 = vsel %vm1662, %v2397, 0.0
  %v2432 = vsel %vm1663, %v2399, 0.0
  %v2433 = vsel %vm1664, %v2401, 0.0
  %2434 = vmatprep.subr.mxu0 0.0
  %2435 = vmatpush1.msra.mxu0 %v20
  %2436 = vmatprep.subr.mxu0 0.0
  %2437 = vmatpush1.msra.mxu0 %v21
  %2438 = vmatprep.subr.mxu0 0.0
  %2439 = vmatpush1.msra.mxu0 %v22
  %2440 = vmatprep.subr.mxu0 0.0
  %2441 = vmatpush1.msra.mxu0 %v23
  %2442 = vmatprep.subr.mxu0 0.0
  %2443 = vmatpush1.msra.mxu0 %v24
  %2444 = vmatprep.subr.mxu0 0.0
  %2445 = vmatpush1.msra.mxu0 %v25
  %2446 = vmatprep.subr.mxu0 0.0
  %2447 = vmatpush1.msra.mxu0 %v26
  %2448 = vmatprep.subr.mxu0 0.0
  %2449 = vmatpush1.msra.mxu0 %v27
  %2450 = vmatprep.subr.mxu0 0.0
  %2451 = vmatpush1.msra.mxu0 %v28
  %2452 = vmatprep.subr.mxu0 0.0
  %2453 = vmatpush1.msra.mxu0 %v29
  %2454 = vmatprep.subr.mxu0 0.0
  %2455 = vmatpush1.msra.mxu0 %v30
  %2456 = vmatprep.subr.mxu0 0.0
  %2457 = vmatpush1.msra.mxu0 %v31
  %2458 = vmatprep.subr.mxu0 0.0
  %2459 = vmatpush1.msra.mxu0 %v32
  %2460 = vmatprep.subr.mxu0 0.0
  %2461 = vmatpush1.msra.mxu0 %v33
  %2462 = vmatprep.subr.mxu0 0.0
  %2463 = vmatpush1.msra.mxu0 %v34
  %2464 = vmatprep.subr.mxu0 0.0
  %2465 = vmatpush1.msra.mxu0 %v35
  %2466 = vmatprep.subr.mxu0 0.0
  %2467 = vmatpush1.msra.mxu0 0.0
  %2468 = vmatprep.subr.mxu0 0.0
  %2469 = vmatpush1.msra.mxu0 0.0
  %2470 = vmatprep.subr.mxu0 0.0
  %2471 = vmatpush1.msra.mxu0 0.0
  %2472 = vmatprep.subr.mxu0 0.0
  %2473 = vmatpush1.msra.mxu0 0.0
  %2474 = vmatprep.subr.mxu0 0.0
  %2475 = vmatpush1.msra.mxu0 0.0
  %2476 = vmatprep.subr.mxu0 0.0
  %2477 = vmatpush1.msra.mxu0 0.0
  %2478 = vmatprep.subr.mxu0 0.0
  %2479 = vmatpush1.msra.mxu0 0.0
  %2480 = vmatprep.subr.mxu0 0.0
  %2481 = vmatpush1.msra.mxu0 0.0
  %2482 = vmatprep.subr.mxu0 0.0
  %2483 = vmatpush1.msra.mxu0 0.0
  %2484 = vmatprep.subr.mxu0 0.0
  %2485 = vmatpush1.msra.mxu0 0.0
  %2486 = vmatprep.subr.mxu0 0.0
  %2487 = vmatpush1.msra.mxu0 0.0
  %2488 = vmatprep.subr.mxu0 0.0
  %2489 = vmatpush1.msra.mxu0 0.0
  %2490 = vmatprep.subr.mxu0 0.0
  %2491 = vmatpush1.msra.mxu0 0.0
  %2492 = vmatprep.subr.mxu0 0.0
  %2493 = vmatpush1.msra.mxu0 0.0
  %2494 = vmatprep.subr.mxu0 0.0
  %2495 = vmatpush1.msra.mxu0 0.0
  %2496 = vmatprep.subr.mxu0 0.0
  %2497 = vmatpush1.msra.mxu0 0.0
  %2498 = vmatprep.mubr.f32.mxu0 0.0
  %2499 = vmatmul.mubr.f32.gmra.mrb[0].mxu0 %v2402
  %v2500 = vpop.f32.mrb[0].mxu0
  %v2501 = vadd.f32 0.0, %v2500
  %v2502 = vpop.f32.mrb[0].mxu0
  %2503 = vmatprep.mubr.f32.mxu0 0.0
  %2504 = vmatmul.mubr.f32.gmra.mrb[0].mxu0 %v2403
  %v2505 = vpop.f32.mrb[0].mxu0
  %v2506 = vadd.f32 0.0, %v2505
  %v2507 = vpop.f32.mrb[0].mxu0
  %2508 = vmatprep.mubr.f32.mxu0 0.0
  %2509 = vmatmul.mubr.f32.gmra.mrb[0].mxu0 %v2404
  %v2510 = vpop.f32.mrb[0].mxu0
  %v2511 = vadd.f32 0.0, %v2510
  %v2512 = vpop.f32.mrb[0].mxu0
  %2513 = vmatprep.mubr.f32.mxu0 0.0
  %2514 = vmatmul.mubr.f32.gmra.mrb[0].mxu0 %v2405
  %v2515 = vpop.f32.mrb[0].mxu0
  %v2516 = vadd.f32 0.0, %v2515
  %v2517 = vpop.f32.mrb[0].mxu0
  %2518 = vmatprep.mubr.f32.mxu0 0.0
  %2519 = vmatmul.mubr.f32.gmra.mrb[0].mxu0 %v2406
  %v2520 = vpop.f32.mrb[0].mxu0
  %v2521 = vadd.f32 0.0, %v2520
  %v2522 = vpop.f32.mrb[0].mxu0
  %2523 = vmatprep.mubr.f32.mxu0 0.0
  %2524 = vmatmul.mubr.f32.gmra.mrb[0].mxu0 %v2407
  %v2525 = vpop.f32.mrb[0].mxu0
  %v2526 = vadd.f32 0.0, %v2525
  %v2527 = vpop.f32.mrb[0].mxu0
  %2528 = vmatprep.mubr.f32.mxu0 0.0
  %2529 = vmatmul.mubr.f32.gmra.mrb[0].mxu0 %v2408
  %v2530 = vpop.f32.mrb[0].mxu0
  %v2531 = vadd.f32 0.0, %v2530
  %v2532 = vpop.f32.mrb[0].mxu0
  %2533 = vmatprep.mubr.f32.mxu0 0.0
  %2534 = vmatmul.mubr.f32.gmra.mrb[0].mxu0 %v2409
  %v2535 = vpop.f32.mrb[0].mxu0
  %v2536 = vadd.f32 0.0, %v2535
  %v2537 = vpop.f32.mrb[0].mxu0
  %2538 = vmatprep.mubr.f32.mxu0 0.0
  %2539 = vmatmul.mubr.f32.gmra.mrb[0].mxu0 %v2410
  %v2540 = vpop.f32.mrb[0].mxu0
  %v2541 = vadd.f32 0.0, %v2540
  %v2542 = vpop.f32.mrb[0].mxu0
  %2543 = vmatprep.mubr.f32.mxu0 0.0
  %2544 = vmatmul.mubr.f32.gmra.mrb[0].mxu0 %v2411
  %v2545 = vpop.f32.mrb[0].mxu0
  %v2546 = vadd.f32 0.0, %v2545
  %v2547 = vpop.f32.mrb[0].mxu0
  %2548 = vmatprep.mubr.f32.mxu0 0.0
  %2549 = vmatmul.mubr.f32.gmra.mrb[0].mxu0 %v2412
  %v2550 = vpop.f32.mrb[0].mxu0
  %v2551 = vadd.f32 0.0, %v2550
  %v2552 = vpop.f32.mrb[0].mxu0
  %2553 = vmatprep.mubr.f32.mxu0 0.0
  %2554 = vmatmul.mubr.f32.gmra.mrb[0].mxu0 %v2413
  %v2555 = vpop.f32.mrb[0].mxu0
  %v2556 = vadd.f32 0.0, %v2555
  %v2557 = vpop.f32.mrb[0].mxu0
  %2558 = vmatprep.mubr.f32.mxu0 0.0
  %2559 = vmatmul.mubr.f32.gmra.mrb[0].mxu0 %v2414
  %v2560 = vpop.f32.mrb[0].mxu0
  %v2561 = vadd.f32 0.0, %v2560
  %v2562 = vpop.f32.mrb[0].mxu0
  %2563 = vmatprep.mubr.f32.mxu0 0.0
  %2564 = vmatmul.mubr.f32.gmra.mrb[0].mxu0 %v2415
  %v2565 = vpop.f32.mrb[0].mxu0
  %v2566 = vadd.f32 0.0, %v2565
  %v2567 = vpop.f32.mrb[0].mxu0
  %2568 = vmatprep.mubr.f32.mxu0 0.0
  %2569 = vmatmul.mubr.f32.gmra.mrb[0].mxu0 %v2416
  %v2570 = vpop.f32.mrb[0].mxu0
  %v2571 = vadd.f32 0.0, %v2570
  %v2572 = vpop.f32.mrb[0].mxu0
  %2573 = vmatprep.mubr.f32.mxu0 0.0
  %2574 = vmatmul.mubr.f32.gmra.mrb[0].mxu0 %v2417
  %v2575 = vpop.f32.mrb[0].mxu0
  %v2576 = vadd.f32 0.0, %v2575
  %v2577 = vpop.f32.mrb[0].mxu0
  %2578 = vmatprep.mubr.f32.mxu0 0.0
  %2579 = vmatmul.mubr.f32.gmra.mrb[0].mxu0 %v2418
  %v2580 = vpop.f32.mrb[0].mxu0
  %v2581 = vadd.f32 0.0, %v2580
  %v2582 = vpop.f32.mrb[0].mxu0
  %2583 = vmatprep.mubr.f32.mxu0 0.0
  %2584 = vmatmul.mubr.f32.gmra.mrb[0].mxu0 %v2419
  %v2585 = vpop.f32.mrb[0].mxu0
  %v2586 = vadd.f32 0.0, %v2585
  %v2587 = vpop.f32.mrb[0].mxu0
  %2588 = vmatprep.mubr.f32.mxu0 0.0
  %2589 = vmatmul.mubr.f32.gmra.mrb[0].mxu0 %v2420
  %v2590 = vpop.f32.mrb[0].mxu0
  %v2591 = vadd.f32 0.0, %v2590
  %v2592 = vpop.f32.mrb[0].mxu0
  %2593 = vmatprep.mubr.f32.mxu0 0.0
  %2594 = vmatmul.mubr.f32.gmra.mrb[0].mxu0 %v2421
  %v2595 = vpop.f32.mrb[0].mxu0
  %v2596 = vadd.f32 0.0, %v2595
  %v2597 = vpop.f32.mrb[0].mxu0
  %2598 = vmatprep.mubr.f32.mxu0 0.0
  %2599 = vmatmul.mubr.f32.gmra.mrb[0].mxu0 %v2422
  %v2600 = vpop.f32.mrb[0].mxu0
  %v2601 = vadd.f32 0.0, %v2600
  %v2602 = vpop.f32.mrb[0].mxu0
  %2603 = vmatprep.mubr.f32.mxu0 0.0
  %2604 = vmatmul.mubr.f32.gmra.mrb[0].mxu0 %v2423
  %v2605 = vpop.f32.mrb[0].mxu0
  %v2606 = vadd.f32 0.0, %v2605
  %v2607 = vpop.f32.mrb[0].mxu0
  %2608 = vmatprep.mubr.f32.mxu0 0.0
  %2609 = vmatmul.mubr.f32.gmra.mrb[0].mxu0 %v2424
  %v2610 = vpop.f32.mrb[0].mxu0
  %v2611 = vadd.f32 0.0, %v2610
  %v2612 = vpop.f32.mrb[0].mxu0
  %2613 = vmatprep.mubr.f32.mxu0 0.0
  %2614 = vmatmul.mubr.f32.gmra.mrb[0].mxu0 %v2425
  %v2615 = vpop.f32.mrb[0].mxu0
  %v2616 = vadd.f32 0.0, %v2615
  %v2617 = vpop.f32.mrb[0].mxu0
  %2618 = vmatprep.mubr.f32.mxu0 0.0
  %2619 = vmatmul.mubr.f32.gmra.mrb[0].mxu0 %v2426
  %v2620 = vpop.f32.mrb[0].mxu0
  %v2621 = vadd.f32 0.0, %v2620
  %v2622 = vpop.f32.mrb[0].mxu0
  %2623 = vmatprep.mubr.f32.mxu0 0.0
  %2624 = vmatmul.mubr.f32.gmra.mrb[0].mxu0 %v2427
  %v2625 = vpop.f32.mrb[0].mxu0
  %v2626 = vadd.f32 0.0, %v2625
  %v2627 = vpop.f32.mrb[0].mxu0
  %2628 = vmatprep.mubr.f32.mxu0 0.0
  %2629 = vmatmul.mubr.f32.gmra.mrb[0].mxu0 %v2428
  %v2630 = vpop.f32.mrb[0].mxu0
  %v2631 = vadd.f32 0.0, %v2630
  %v2632 = vpop.f32.mrb[0].mxu0
  %2633 = vmatprep.mubr.f32.mxu0 0.0
  %2634 = vmatmul.mubr.f32.gmra.mrb[0].mxu0 %v2429
  %v2635 = vpop.f32.mrb[0].mxu0
  %v2636 = vadd.f32 0.0, %v2635
  %v2637 = vpop.f32.mrb[0].mxu0
  %2638 = vmatprep.mubr.f32.mxu0 0.0
  %2639 = vmatmul.mubr.f32.gmra.mrb[0].mxu0 %v2430
  %v2640 = vpop.f32.mrb[0].mxu0
  %v2641 = vadd.f32 0.0, %v2640
  %v2642 = vpop.f32.mrb[0].mxu0
  %2643 = vmatprep.mubr.f32.mxu0 0.0
  %2644 = vmatmul.mubr.f32.gmra.mrb[0].mxu0 %v2431
  %v2645 = vpop.f32.mrb[0].mxu0
  %v2646 = vadd.f32 0.0, %v2645
  %v2647 = vpop.f32.mrb[0].mxu0
  %2648 = vmatprep.mubr.f32.mxu0 0.0
  %2649 = vmatmul.mubr.f32.gmra.mrb[0].mxu0 %v2432
  %v2650 = vpop.f32.mrb[0].mxu0
  %v2651 = vadd.f32 0.0, %v2650
  %v2652 = vpop.f32.mrb[0].mxu0
  %2653 = vmatprep.mubr.f32.mxu0 0.0
  %2654 = vmatmul.mubr.f32.gmra.mrb[0].mxu0 %v2433
  %v2655 = vpop.f32.mrb[0].mxu0
  %v2656 = vadd.f32 0.0, %v2655
  %v2657 = vpop.f32.mrb[0].mxu0
  %2658 = vdwg.mxu0
  %2659 = vmatprep.subr.mxu0 0.0
  %2660 = vmatpush1.msra.mxu0 %v40
  %2661 = vmatprep.subr.mxu0 0.0
  %2662 = vmatpush1.msra.mxu0 %v41
  %2663 = vmatprep.subr.mxu0 0.0
  %2664 = vmatpush1.msra.mxu0 %v42
  %2665 = vmatprep.subr.mxu0 0.0
  %2666 = vmatpush1.msra.mxu0 %v43
  %2667 = vmatprep.subr.mxu0 0.0
  %2668 = vmatpush1.msra.mxu0 %v44
  %2669 = vmatprep.subr.mxu0 0.0
  %2670 = vmatpush1.msra.mxu0 %v45
  %2671 = vmatprep.subr.mxu0 0.0
  %2672 = vmatpush1.msra.mxu0 %v46
  %2673 = vmatprep.subr.mxu0 0.0
  %2674 = vmatpush1.msra.mxu0 %v47
  %2675 = vmatprep.subr.mxu0 0.0
  %2676 = vmatpush1.msra.mxu0 %v48
  %2677 = vmatprep.subr.mxu0 0.0
  %2678 = vmatpush1.msra.mxu0 %v49
  %2679 = vmatprep.subr.mxu0 0.0
  %2680 = vmatpush1.msra.mxu0 %v50
  %2681 = vmatprep.subr.mxu0 0.0
  %2682 = vmatpush1.msra.mxu0 %v51
  %2683 = vmatprep.subr.mxu0 0.0
  %2684 = vmatpush1.msra.mxu0 %v52
  %2685 = vmatprep.subr.mxu0 0.0
  %2686 = vmatpush1.msra.mxu0 %v53
  %2687 = vmatprep.subr.mxu0 0.0
  %2688 = vmatpush1.msra.mxu0 %v54
  %2689 = vmatprep.subr.mxu0 0.0
  %2690 = vmatpush1.msra.mxu0 %v55
  %2691 = vmatprep.subr.mxu0 0.0
  %2692 = vmatpush1.msra.mxu0 0.0
  %2693 = vmatprep.subr.mxu0 0.0
  %2694 = vmatpush1.msra.mxu0 0.0
  %2695 = vmatprep.subr.mxu0 0.0
  %2696 = vmatpush1.msra.mxu0 0.0
  %2697 = vmatprep.subr.mxu0 0.0
  %2698 = vmatpush1.msra.mxu0 0.0
  %2699 = vmatprep.subr.mxu0 0.0
  %2700 = vmatpush1.msra.mxu0 0.0
  %2701 = vmatprep.subr.mxu0 0.0
  %2702 = vmatpush1.msra.mxu0 0.0
  %2703 = vmatprep.subr.mxu0 0.0
  %2704 = vmatpush1.msra.mxu0 0.0
  %2705 = vmatprep.subr.mxu0 0.0
  %2706 = vmatpush1.msra.mxu0 0.0
  %2707 = vmatprep.subr.mxu0 0.0
  %2708 = vmatpush1.msra.mxu0 0.0
  %2709 = vmatprep.subr.mxu0 0.0
  %2710 = vmatpush1.msra.mxu0 0.0
  %2711 = vmatprep.subr.mxu0 0.0
  %2712 = vmatpush1.msra.mxu0 0.0
  %2713 = vmatprep.subr.mxu0 0.0
  %2714 = vmatpush1.msra.mxu0 0.0
  %2715 = vmatprep.subr.mxu0 0.0
  %2716 = vmatpush1.msra.mxu0 0.0
  %2717 = vmatprep.subr.mxu0 0.0
  %2718 = vmatpush1.msra.mxu0 0.0
  %2719 = vmatprep.subr.mxu0 0.0
  %2720 = vmatpush1.msra.mxu0 0.0
  %2721 = vmatprep.subr.mxu0 0.0
  %2722 = vmatpush1.msra.mxu0 0.0
  %2723 = vmatprep.mubr.f32.mxu0 0.0
  %2724 = vmatmul.mubr.f32.gmra.mrb[0].mxu0 %v2402
  %v2725 = vpop.f32.mrb[0].mxu0
  %v2726 = vadd.f32 0.0, %v2725
  %v2727 = vpop.f32.mrb[0].mxu0
  %2728 = vmatprep.mubr.f32.mxu0 0.0
  %2729 = vmatmul.mubr.f32.gmra.mrb[0].mxu0 %v2403
  %v2730 = vpop.f32.mrb[0].mxu0
  %v2731 = vadd.f32 0.0, %v2730
  %v2732 = vpop.f32.mrb[0].mxu0
  %2733 = vmatprep.mubr.f32.mxu0 0.0
  %2734 = vmatmul.mubr.f32.gmra.mrb[0].mxu0 %v2404
  %v2735 = vpop.f32.mrb[0].mxu0
  %v2736 = vadd.f32 0.0, %v2735
  %v2737 = vpop.f32.mrb[0].mxu0
  %2738 = vmatprep.mubr.f32.mxu0 0.0
  %2739 = vmatmul.mubr.f32.gmra.mrb[0].mxu0 %v2405
  %v2740 = vpop.f32.mrb[0].mxu0
  %v2741 = vadd.f32 0.0, %v2740
  %v2742 = vpop.f32.mrb[0].mxu0
  %2743 = vmatprep.mubr.f32.mxu0 0.0
  %2744 = vmatmul.mubr.f32.gmra.mrb[0].mxu0 %v2406
  %v2745 = vpop.f32.mrb[0].mxu0
  %v2746 = vadd.f32 0.0, %v2745
  %v2747 = vpop.f32.mrb[0].mxu0
  %2748 = vmatprep.mubr.f32.mxu0 0.0
  %2749 = vmatmul.mubr.f32.gmra.mrb[0].mxu0 %v2407
  %v2750 = vpop.f32.mrb[0].mxu0
  %v2751 = vadd.f32 0.0, %v2750
  %v2752 = vpop.f32.mrb[0].mxu0
  %2753 = vmatprep.mubr.f32.mxu0 0.0
  %2754 = vmatmul.mubr.f32.gmra.mrb[0].mxu0 %v2408
  %v2755 = vpop.f32.mrb[0].mxu0
  %v2756 = vadd.f32 0.0, %v2755
  %v2757 = vpop.f32.mrb[0].mxu0
  %2758 = vmatprep.mubr.f32.mxu0 0.0
  %2759 = vmatmul.mubr.f32.gmra.mrb[0].mxu0 %v2409
  %v2760 = vpop.f32.mrb[0].mxu0
  %v2761 = vadd.f32 0.0, %v2760
  %v2762 = vpop.f32.mrb[0].mxu0
  %2763 = vmatprep.mubr.f32.mxu0 0.0
  %2764 = vmatmul.mubr.f32.gmra.mrb[0].mxu0 %v2410
  %v2765 = vpop.f32.mrb[0].mxu0
  %v2766 = vadd.f32 0.0, %v2765
  %v2767 = vpop.f32.mrb[0].mxu0
  %2768 = vmatprep.mubr.f32.mxu0 0.0
  %2769 = vmatmul.mubr.f32.gmra.mrb[0].mxu0 %v2411
  %v2770 = vpop.f32.mrb[0].mxu0
  %v2771 = vadd.f32 0.0, %v2770
  %v2772 = vpop.f32.mrb[0].mxu0
  %2773 = vmatprep.mubr.f32.mxu0 0.0
  %2774 = vmatmul.mubr.f32.gmra.mrb[0].mxu0 %v2412
  %v2775 = vpop.f32.mrb[0].mxu0
  %v2776 = vadd.f32 0.0, %v2775
  %v2777 = vpop.f32.mrb[0].mxu0
  %2778 = vmatprep.mubr.f32.mxu0 0.0
  %2779 = vmatmul.mubr.f32.gmra.mrb[0].mxu0 %v2413
  %v2780 = vpop.f32.mrb[0].mxu0
  %v2781 = vadd.f32 0.0, %v2780
  %v2782 = vpop.f32.mrb[0].mxu0
  %2783 = vmatprep.mubr.f32.mxu0 0.0
  %2784 = vmatmul.mubr.f32.gmra.mrb[0].mxu0 %v2414
  %v2785 = vpop.f32.mrb[0].mxu0
  %v2786 = vadd.f32 0.0, %v2785
  %v2787 = vpop.f32.mrb[0].mxu0
  %2788 = vmatprep.mubr.f32.mxu0 0.0
  %2789 = vmatmul.mubr.f32.gmra.mrb[0].mxu0 %v2415
  %v2790 = vpop.f32.mrb[0].mxu0
  %v2791 = vadd.f32 0.0, %v2790
  %v2792 = vpop.f32.mrb[0].mxu0
  %2793 = vmatprep.mubr.f32.mxu0 0.0
  %2794 = vmatmul.mubr.f32.gmra.mrb[0].mxu0 %v2416
  %v2795 = vpop.f32.mrb[0].mxu0
  %v2796 = vadd.f32 0.0, %v2795
  %v2797 = vpop.f32.mrb[0].mxu0
  %2798 = vmatprep.mubr.f32.mxu0 0.0
  %2799 = vmatmul.mubr.f32.gmra.mrb[0].mxu0 %v2417
  %v2800 = vpop.f32.mrb[0].mxu0
  %v2801 = vadd.f32 0.0, %v2800
  %v2802 = vpop.f32.mrb[0].mxu0
  %2803 = vmatprep.mubr.f32.mxu0 0.0
  %2804 = vmatmul.mubr.f32.gmra.mrb[0].mxu0 %v2418
  %v2805 = vpop.f32.mrb[0].mxu0
  %v2806 = vadd.f32 0.0, %v2805
  %v2807 = vpop.f32.mrb[0].mxu0
  %2808 = vmatprep.mubr.f32.mxu0 0.0
  %2809 = vmatmul.mubr.f32.gmra.mrb[0].mxu0 %v2419
  %v2810 = vpop.f32.mrb[0].mxu0
  %v2811 = vadd.f32 0.0, %v2810
  %v2812 = vpop.f32.mrb[0].mxu0
  %2813 = vmatprep.mubr.f32.mxu0 0.0
  %2814 = vmatmul.mubr.f32.gmra.mrb[0].mxu0 %v2420
  %v2815 = vpop.f32.mrb[0].mxu0
  %v2816 = vadd.f32 0.0, %v2815
  %v2817 = vpop.f32.mrb[0].mxu0
  %2818 = vmatprep.mubr.f32.mxu0 0.0
  %2819 = vmatmul.mubr.f32.gmra.mrb[0].mxu0 %v2421
  %v2820 = vpop.f32.mrb[0].mxu0
  %v2821 = vadd.f32 0.0, %v2820
  %v2822 = vpop.f32.mrb[0].mxu0
  %2823 = vmatprep.mubr.f32.mxu0 0.0
  %2824 = vmatmul.mubr.f32.gmra.mrb[0].mxu0 %v2422
  %v2825 = vpop.f32.mrb[0].mxu0
  %v2826 = vadd.f32 0.0, %v2825
  %v2827 = vpop.f32.mrb[0].mxu0
  %2828 = vmatprep.mubr.f32.mxu0 0.0
  %2829 = vmatmul.mubr.f32.gmra.mrb[0].mxu0 %v2423
  %v2830 = vpop.f32.mrb[0].mxu0
  %v2831 = vadd.f32 0.0, %v2830
  %v2832 = vpop.f32.mrb[0].mxu0
  %2833 = vmatprep.mubr.f32.mxu0 0.0
  %2834 = vmatmul.mubr.f32.gmra.mrb[0].mxu0 %v2424
  %v2835 = vpop.f32.mrb[0].mxu0
  %v2836 = vadd.f32 0.0, %v2835
  %v2837 = vpop.f32.mrb[0].mxu0
  %2838 = vmatprep.mubr.f32.mxu0 0.0
  %2839 = vmatmul.mubr.f32.gmra.mrb[0].mxu0 %v2425
  %v2840 = vpop.f32.mrb[0].mxu0
  %v2841 = vadd.f32 0.0, %v2840
  %v2842 = vpop.f32.mrb[0].mxu0
  %2843 = vmatprep.mubr.f32.mxu0 0.0
  %2844 = vmatmul.mubr.f32.gmra.mrb[0].mxu0 %v2426
  %v2845 = vpop.f32.mrb[0].mxu0
  %v2846 = vadd.f32 0.0, %v2845
  %v2847 = vpop.f32.mrb[0].mxu0
  %2848 = vmatprep.mubr.f32.mxu0 0.0
  %2849 = vmatmul.mubr.f32.gmra.mrb[0].mxu0 %v2427
  %v2850 = vpop.f32.mrb[0].mxu0
  %v2851 = vadd.f32 0.0, %v2850
  %v2852 = vpop.f32.mrb[0].mxu0
  %2853 = vmatprep.mubr.f32.mxu0 0.0
  %2854 = vmatmul.mubr.f32.gmra.mrb[0].mxu0 %v2428
  %v2855 = vpop.f32.mrb[0].mxu0
  %v2856 = vadd.f32 0.0, %v2855
  %v2857 = vpop.f32.mrb[0].mxu0
  %2858 = vmatprep.mubr.f32.mxu0 0.0
  %2859 = vmatmul.mubr.f32.gmra.mrb[0].mxu0 %v2429
  %v2860 = vpop.f32.mrb[0].mxu0
  %v2861 = vadd.f32 0.0, %v2860
  %v2862 = vpop.f32.mrb[0].mxu0
  %2863 = vmatprep.mubr.f32.mxu0 0.0
  %2864 = vmatmul.mubr.f32.gmra.mrb[0].mxu0 %v2430
  %v2865 = vpop.f32.mrb[0].mxu0
  %v2866 = vadd.f32 0.0, %v2865
  %v2867 = vpop.f32.mrb[0].mxu0
  %2868 = vmatprep.mubr.f32.mxu0 0.0
  %2869 = vmatmul.mubr.f32.gmra.mrb[0].mxu0 %v2431
  %v2870 = vpop.f32.mrb[0].mxu0
  %v2871 = vadd.f32 0.0, %v2870
  %v2872 = vpop.f32.mrb[0].mxu0
  %2873 = vmatprep.mubr.f32.mxu0 0.0
  %2874 = vmatmul.mubr.f32.gmra.mrb[0].mxu0 %v2432
  %v2875 = vpop.f32.mrb[0].mxu0
  %v2876 = vadd.f32 0.0, %v2875
  %v2877 = vpop.f32.mrb[0].mxu0
  %2878 = vmatprep.mubr.f32.mxu0 0.0
  %2879 = vmatmul.mubr.f32.gmra.mrb[0].mxu0 %v2433
  %v2880 = vpop.f32.mrb[0].mxu0
  %v2881 = vadd.f32 0.0, %v2880
  %v2882 = vpop.f32.mrb[0].mxu0
  %2883 = vdwg.mxu0
  %v2884 = vrcp.pop %v2726
  %v2885 = vrcp.pop %v2731
  %v2886 = vrcp.pop %v2736
  %v2887 = vrcp.pop %v2741
  %v2888 = vrcp.pop %v2746
  %v2889 = vrcp.pop %v2751
  %v2890 = vrcp.pop %v2756
  %v2891 = vrcp.pop %v2761
  %v2892 = vrcp.pop %v2766
  %v2893 = vrcp.pop %v2771
  %v2894 = vrcp.pop %v2776
  %v2895 = vrcp.pop %v2781
  %v2896 = vrcp.pop %v2786
  %v2897 = vrcp.pop %v2791
  %v2898 = vrcp.pop %v2796
  %v2899 = vrcp.pop %v2801
  %v2900 = vrcp.pop %v2806
  %v2901 = vrcp.pop %v2811
  %v2902 = vrcp.pop %v2816
  %v2903 = vrcp.pop %v2821
  %v2904 = vrcp.pop %v2826
  %v2905 = vrcp.pop %v2831
  %v2906 = vrcp.pop %v2836
  %v2907 = vrcp.pop %v2841
  %v2908 = vrcp.pop %v2846
  %v2909 = vrcp.pop %v2851
  %v2910 = vrcp.pop %v2856
  %v2911 = vrcp.pop %v2861
  %v2912 = vrcp.pop %v2866
  %v2913 = vrcp.pop %v2871
  %v2914 = vrcp.pop %v2876
  %v2915 = vrcp.pop %v2881
  %v2916 = vmul.f32 %v2726, %v2884
  %v2917 = vmul.f32 %v2731, %v2885
  %v2918 = vmul.f32 %v2736, %v2886
  %v2919 = vmul.f32 %v2741, %v2887
  %v2920 = vmul.f32 %v2746, %v2888
  %v2921 = vmul.f32 %v2751, %v2889
  %v2922 = vmul.f32 %v2756, %v2890
  %v2923 = vmul.f32 %v2761, %v2891
  %v2924 = vmul.f32 %v2766, %v2892
  %v2925 = vmul.f32 %v2771, %v2893
  %v2926 = vmul.f32 %v2776, %v2894
  %v2927 = vmul.f32 %v2781, %v2895
  %v2928 = vmul.f32 %v2786, %v2896
  %v2929 = vmul.f32 %v2791, %v2897
  %v2930 = vmul.f32 %v2796, %v2898
  %v2931 = vmul.f32 %v2801, %v2899
  %v2932 = vmul.f32 %v2806, %v2900
  %v2933 = vmul.f32 %v2811, %v2901
  %v2934 = vmul.f32 %v2816, %v2902
  %v2935 = vmul.f32 %v2821, %v2903
  %v2936 = vmul.f32 %v2826, %v2904
  %v2937 = vmul.f32 %v2831, %v2905
  %v2938 = vmul.f32 %v2836, %v2906
  %v2939 = vmul.f32 %v2841, %v2907
  %v2940 = vmul.f32 %v2846, %v2908
  %v2941 = vmul.f32 %v2851, %v2909
  %v2942 = vmul.f32 %v2856, %v2910
  %v2943 = vmul.f32 %v2861, %v2911
  %v2944 = vmul.f32 %v2866, %v2912
  %v2945 = vmul.f32 %v2871, %v2913
  %v2946 = vmul.f32 %v2876, %v2914
  %v2947 = vmul.f32 %v2881, %v2915
  %v2948 = vsub.f32 2.0, %v2916
  %v2949 = vsub.f32 2.0, %v2917
  %v2950 = vsub.f32 2.0, %v2918
  %v2951 = vsub.f32 2.0, %v2919
  %v2952 = vsub.f32 2.0, %v2920
  %v2953 = vsub.f32 2.0, %v2921
  %v2954 = vsub.f32 2.0, %v2922
  %v2955 = vsub.f32 2.0, %v2923
  %v2956 = vsub.f32 2.0, %v2924
  %v2957 = vsub.f32 2.0, %v2925
  %v2958 = vsub.f32 2.0, %v2926
  %v2959 = vsub.f32 2.0, %v2927
  %v2960 = vsub.f32 2.0, %v2928
  %v2961 = vsub.f32 2.0, %v2929
  %v2962 = vsub.f32 2.0, %v2930
  %v2963 = vsub.f32 2.0, %v2931
  %v2964 = vsub.f32 2.0, %v2932
  %v2965 = vsub.f32 2.0, %v2933
  %v2966 = vsub.f32 2.0, %v2934
  %v2967 = vsub.f32 2.0, %v2935
  %v2968 = vsub.f32 2.0, %v2936
  %v2969 = vsub.f32 2.0, %v2937
  %v2970 = vsub.f32 2.0, %v2938
  %v2971 = vsub.f32 2.0, %v2939
  %v2972 = vsub.f32 2.0, %v2940
  %v2973 = vsub.f32 2.0, %v2941
  %v2974 = vsub.f32 2.0, %v2942
  %v2975 = vsub.f32 2.0, %v2943
  %v2976 = vsub.f32 2.0, %v2944
  %v2977 = vsub.f32 2.0, %v2945
  %v2978 = vsub.f32 2.0, %v2946
  %v2979 = vsub.f32 2.0, %v2947
  %v2980 = vmul.f32 %v2884, %v2948
  %v2981 = vmul.f32 %v2885, %v2949
  %v2982 = vmul.f32 %v2886, %v2950
  %v2983 = vmul.f32 %v2887, %v2951
  %v2984 = vmul.f32 %v2888, %v2952
  %v2985 = vmul.f32 %v2889, %v2953
  %v2986 = vmul.f32 %v2890, %v2954
  %v2987 = vmul.f32 %v2891, %v2955
  %v2988 = vmul.f32 %v2892, %v2956
  %v2989 = vmul.f32 %v2893, %v2957
  %v2990 = vmul.f32 %v2894, %v2958
  %v2991 = vmul.f32 %v2895, %v2959
  %v2992 = vmul.f32 %v2896, %v2960
  %v2993 = vmul.f32 %v2897, %v2961
  %v2994 = vmul.f32 %v2898, %v2962
  %v2995 = vmul.f32 %v2899, %v2963
  %v2996 = vmul.f32 %v2900, %v2964
  %v2997 = vmul.f32 %v2901, %v2965
  %v2998 = vmul.f32 %v2902, %v2966
  %v2999 = vmul.f32 %v2903, %v2967
  %v3000 = vmul.f32 %v2904, %v2968
  %v3001 = vmul.f32 %v2905, %v2969
  %v3002 = vmul.f32 %v2906, %v2970
  %v3003 = vmul.f32 %v2907, %v2971
  %v3004 = vmul.f32 %v2908, %v2972
  %v3005 = vmul.f32 %v2909, %v2973
  %v3006 = vmul.f32 %v2910, %v2974
  %v3007 = vmul.f32 %v2911, %v2975
  %v3008 = vmul.f32 %v2912, %v2976
  %v3009 = vmul.f32 %v2913, %v2977
  %v3010 = vmul.f32 %v2914, %v2978
  %v3011 = vmul.f32 %v2915, %v2979
  %3013 = vset.pattern.permute.xlu0 0
  %3014 = vperm.xlu0 %3013, %v2980
  %v3015 = vpop.permute.xlu0 %3014
  %3018 = vset.pattern.permute.xlu0 0
  %3019 = vperm.xlu0 %3018, %v2981
  %v3020 = vpop.permute.xlu0 %3019
  %3023 = vset.pattern.permute.xlu0 0
  %3024 = vperm.xlu0 %3023, %v2982
  %v3025 = vpop.permute.xlu0 %3024
  %3028 = vset.pattern.permute.xlu0 0
  %3029 = vperm.xlu0 %3028, %v2983
  %v3030 = vpop.permute.xlu0 %3029
  %3033 = vset.pattern.permute.xlu0 0
  %3034 = vperm.xlu0 %3033, %v2984
  %v3035 = vpop.permute.xlu0 %3034
  %3038 = vset.pattern.permute.xlu0 0
  %3039 = vperm.xlu0 %3038, %v2985
  %v3040 = vpop.permute.xlu0 %3039
  %3043 = vset.pattern.permute.xlu0 0
  %3044 = vperm.xlu0 %3043, %v2986
  %v3045 = vpop.permute.xlu0 %3044
  %3048 = vset.pattern.permute.xlu0 0
  %3049 = vperm.xlu0 %3048, %v2987
  %v3050 = vpop.permute.xlu0 %3049
  %3053 = vset.pattern.permute.xlu0 0
  %3054 = vperm.xlu0 %3053, %v2988
  %v3055 = vpop.permute.xlu0 %3054
  %3058 = vset.pattern.permute.xlu0 0
  %3059 = vperm.xlu0 %3058, %v2989
  %v3060 = vpop.permute.xlu0 %3059
  %3063 = vset.pattern.permute.xlu0 0
  %3064 = vperm.xlu0 %3063, %v2990
  %v3065 = vpop.permute.xlu0 %3064
  %3068 = vset.pattern.permute.xlu0 0
  %3069 = vperm.xlu0 %3068, %v2991
  %v3070 = vpop.permute.xlu0 %3069
  %3073 = vset.pattern.permute.xlu0 0
  %3074 = vperm.xlu0 %3073, %v2992
  %v3075 = vpop.permute.xlu0 %3074
  %3078 = vset.pattern.permute.xlu0 0
  %3079 = vperm.xlu0 %3078, %v2993
  %v3080 = vpop.permute.xlu0 %3079
  %3083 = vset.pattern.permute.xlu0 0
  %3084 = vperm.xlu0 %3083, %v2994
  %v3085 = vpop.permute.xlu0 %3084
  %3088 = vset.pattern.permute.xlu0 0
  %3089 = vperm.xlu0 %3088, %v2995
  %v3090 = vpop.permute.xlu0 %3089
  %3093 = vset.pattern.permute.xlu0 0
  %3094 = vperm.xlu0 %3093, %v2996
  %v3095 = vpop.permute.xlu0 %3094
  %3098 = vset.pattern.permute.xlu0 0
  %3099 = vperm.xlu0 %3098, %v2997
  %v3100 = vpop.permute.xlu0 %3099
  %3103 = vset.pattern.permute.xlu0 0
  %3104 = vperm.xlu0 %3103, %v2998
  %v3105 = vpop.permute.xlu0 %3104
  %3108 = vset.pattern.permute.xlu0 0
  %3109 = vperm.xlu0 %3108, %v2999
  %v3110 = vpop.permute.xlu0 %3109
  %3113 = vset.pattern.permute.xlu0 0
  %3114 = vperm.xlu0 %3113, %v3000
  %v3115 = vpop.permute.xlu0 %3114
  %3118 = vset.pattern.permute.xlu0 0
  %3119 = vperm.xlu0 %3118, %v3001
  %v3120 = vpop.permute.xlu0 %3119
  %3123 = vset.pattern.permute.xlu0 0
  %3124 = vperm.xlu0 %3123, %v3002
  %v3125 = vpop.permute.xlu0 %3124
  %3128 = vset.pattern.permute.xlu0 0
  %3129 = vperm.xlu0 %3128, %v3003
  %v3130 = vpop.permute.xlu0 %3129
  %3133 = vset.pattern.permute.xlu0 0
  %3134 = vperm.xlu0 %3133, %v3004
  %v3135 = vpop.permute.xlu0 %3134
  %3138 = vset.pattern.permute.xlu0 0
  %3139 = vperm.xlu0 %3138, %v3005
  %v3140 = vpop.permute.xlu0 %3139
  %3143 = vset.pattern.permute.xlu0 0
  %3144 = vperm.xlu0 %3143, %v3006
  %v3145 = vpop.permute.xlu0 %3144
  %3148 = vset.pattern.permute.xlu0 0
  %3149 = vperm.xlu0 %3148, %v3007
  %v3150 = vpop.permute.xlu0 %3149
  %3153 = vset.pattern.permute.xlu0 0
  %3154 = vperm.xlu0 %3153, %v3008
  %v3155 = vpop.permute.xlu0 %3154
  %3158 = vset.pattern.permute.xlu0 0
  %3159 = vperm.xlu0 %3158, %v3009
  %v3160 = vpop.permute.xlu0 %3159
  %3163 = vset.pattern.permute.xlu0 0
  %3164 = vperm.xlu0 %3163, %v3010
  %v3165 = vpop.permute.xlu0 %3164
  %3168 = vset.pattern.permute.xlu0 0
  %3169 = vperm.xlu0 %3168, %v3011
  %v3170 = vpop.permute.xlu0 %3169
  %v3172 = vmul.f32 %v2501, %v3015
  %v3173 = vmul.f32 %v2506, %v3020
  %v3174 = vmul.f32 %v2511, %v3025
  %v3175 = vmul.f32 %v2516, %v3030
  %v3176 = vmul.f32 %v2521, %v3035
  %v3177 = vmul.f32 %v2526, %v3040
  %v3178 = vmul.f32 %v2531, %v3045
  %v3179 = vmul.f32 %v2536, %v3050
  %v3180 = vmul.f32 %v2541, %v3055
  %v3181 = vmul.f32 %v2546, %v3060
  %v3182 = vmul.f32 %v2551, %v3065
  %v3183 = vmul.f32 %v2556, %v3070
  %v3184 = vmul.f32 %v2561, %v3075
  %v3185 = vmul.f32 %v2566, %v3080
  %v3186 = vmul.f32 %v2571, %v3085
  %v3187 = vmul.f32 %v2576, %v3090
  %v3188 = vmul.f32 %v2581, %v3095
  %v3189 = vmul.f32 %v2586, %v3100
  %v3190 = vmul.f32 %v2591, %v3105
  %v3191 = vmul.f32 %v2596, %v3110
  %v3192 = vmul.f32 %v2601, %v3115
  %v3193 = vmul.f32 %v2606, %v3120
  %v3194 = vmul.f32 %v2611, %v3125
  %v3195 = vmul.f32 %v2616, %v3130
  %v3196 = vmul.f32 %v2621, %v3135
  %v3197 = vmul.f32 %v2626, %v3140
  %v3198 = vmul.f32 %v2631, %v3145
  %v3199 = vmul.f32 %v2636, %v3150
  %v3200 = vmul.f32 %v2641, %v3155
  %v3201 = vmul.f32 %v2646, %v3160
  %v3202 = vmul.f32 %v2651, %v3165
  %v3203 = vmul.f32 %v2656, %v3170
  %3204 = vst.msk [vmem:[%s5] sm:$0xff] %vm95, %v3172
  %3205 = vst.msk [vmem:[%s5 + $0x8] sm:$0xff] %vm95, %v3173
  %3206 = vst.msk [vmem:[%s5 + $0x10] sm:$0xff] %vm95, %v3174
  %3207 = vst.msk [vmem:[%s5 + $0x18] sm:$0xff] %vm95, %v3175
  %3208 = vst.msk [vmem:[%s5 + $0x20] sm:$0xff] %vm95, %v3176
  %3209 = vst.msk [vmem:[%s5 + $0x28] sm:$0xff] %vm95, %v3177
  %3210 = vst.msk [vmem:[%s5 + $0x30] sm:$0xff] %vm95, %v3178
  %3211 = vst.msk [vmem:[%s5 + $0x38] sm:$0xff] %vm95, %v3179
  %3212 = vst.msk [vmem:[%s5 + $0x40] sm:$0xff] %vm95, %v3180
  %3213 = vst.msk [vmem:[%s5 + $0x48] sm:$0xff] %vm95, %v3181
  %3214 = vst.msk [vmem:[%s5 + $0x50] sm:$0xff] %vm95, %v3182
  %3215 = vst.msk [vmem:[%s5 + $0x58] sm:$0xff] %vm95, %v3183
  %3216 = vst.msk [vmem:[%s5 + $0x60] sm:$0xff] %vm95, %v3184
  %3217 = vst.msk [vmem:[%s5 + $0x68] sm:$0xff] %vm95, %v3185
  %3218 = vst.msk [vmem:[%s5 + $0x70] sm:$0xff] %vm95, %v3186
  %3219 = vst.msk [vmem:[%s5 + $0x78] sm:$0xff] %vm95, %v3187
  %3220 = vst.msk [vmem:[%s5 + $0x80] sm:$0xff] %vm95, %v3188
  %3221 = vst.msk [vmem:[%s5 + $0x88] sm:$0xff] %vm95, %v3189
  %3222 = vst.msk [vmem:[%s5 + $0x90] sm:$0xff] %vm95, %v3190
  %3223 = vst.msk [vmem:[%s5 + $0x98] sm:$0xff] %vm95, %v3191
  %3224 = vst.msk [vmem:[%s5 + $0xa0] sm:$0xff] %vm95, %v3192
  %3225 = vst.msk [vmem:[%s5 + $0xa8] sm:$0xff] %vm95, %v3193
  %3226 = vst.msk [vmem:[%s5 + $0xb0] sm:$0xff] %vm95, %v3194
  %3227 = vst.msk [vmem:[%s5 + $0xb8] sm:$0xff] %vm95, %v3195
  %3228 = vst.msk [vmem:[%s5 + $0xc0] sm:$0xff] %vm95, %v3196
  %3229 = vst.msk [vmem:[%s5 + $0xc8] sm:$0xff] %vm95, %v3197
  %3230 = vst.msk [vmem:[%s5 + $0xd0] sm:$0xff] %vm95, %v3198
  %3231 = vst.msk [vmem:[%s5 + $0xd8] sm:$0xff] %vm95, %v3199
  %3232 = vst.msk [vmem:[%s5 + $0xe0] sm:$0xff] %vm95, %v3200
  %3233 = vst.msk [vmem:[%s5 + $0xe8] sm:$0xff] %vm95, %v3201
  %3234 = vst.msk [vmem:[%s5 + $0xf0] sm:$0xff] %vm95, %v3202
  %3235 = vst.msk [vmem:[%s5 + $0xf8] sm:$0xff] %vm95, %v3203
  // Predicated region
  $region22: #{tpu_custom_call.1} parent=0 // pred_check
    _
  $region23: #{tpu_custom_call.1} parent=0 // pred_check_branch
    %3237 = sbr.rel (0) target = $region25
  $region24: #{tpu_custom_call.1} parent=0 // pred_region
    _
  $region25: #{tpu_custom_call.1} parent=0 // pred_fallthru
    _
  // Predicated region
  $region26: #{tpu_custom_call.1} parent=0 // pred_check
    _
  $region27: #{tpu_custom_call.1} parent=0 // pred_check_branch
    %3239 = sbr.rel (0) target = $region29
  $region28: #{tpu_custom_call.1} parent=0 // pred_region
    _
  $region29: #{tpu_custom_call.1} parent=0 // pred_fallthru
    _

</llo_original>
